<compile_context>
chip_gen: v7x
topology: tpu7x:2x2x1
jax: 0.10.0
libtpu: 0.0.40
codegen_flags: <defaults>
</compile_context>

<pallas_src>
import functools

import jax
import jax.numpy as jnp
from jax.experimental import pallas as pl
from jax.experimental.pallas import tpu as pltpu


def _conv3d_kernel(x_ref, w_ref, b_ref, o_ref, acc_ref, lhs_ref,
                   *, DR, H, W, Cin, C8):
    """One grid step: DR output depth rows of the 3x3x3 conv for one batch elem.

    x_ref:   (1, D+2, H+2, W+2, Cin)  zero-padded input, channels-last (per b)
    w_ref:   (3, 9*Cin, C8)           weights, K ordered (kh, kw, cin) per kd
    b_ref:   (1, C8)                  bias (f32)
    o_ref:   (1, DR, H*W, C8)         conv output rows for this depth block
    acc_ref: (DR*H*W, C8)  f32        VMEM accumulator scratch
    lhs_ref: (DR*H*W, 9*Cin)          VMEM per-kd im2col LHS scratch (reused)
    """
    d0 = pl.multiple_of(pl.program_id(1) * DR, DR)
    MR = DR * H * W

    # Init accumulator with the bias (f32); avoids a separate add at the end.
    acc_ref[...] = jnp.broadcast_to(b_ref[...], (MR, C8))

    for kd in range(3):
        # Depth slab shared by the 9 (kh, kw) taps of this kd.
        slab = x_ref[0, pl.ds(d0 + kd, DR)]                  # (DR, H+2, W+2, Cin)
        for kh in range(3):
            for kw in range(3):
                off = (kh * 3 + kw) * Cin
                patch = slab[:, kh:kh + H, kw:kw + W, :]     # (DR, H, W, Cin)
                lhs_ref[:, off:off + Cin] = patch.reshape(MR, Cin)
        # One K = 9*Cin MXU dot per kd, accumulated in f32.
        acc_ref[...] += jnp.dot(lhs_ref[...], w_ref[kd],
                                preferred_element_type=jnp.float32)

    o_ref[0] = acc_ref[...].reshape(DR, H * W, C8).astype(o_ref.dtype)


def pixel_shuffle_3d(x, r):
    """JAX port of TRELLIS pixel_shuffle_3d (NCDHW). Used by the reference."""
    B, C, H, W, D = x.shape
    C_ = C // (r ** 3)
    x = x.reshape(B, C_, r, r, r, H, W, D)
    x = jnp.transpose(x, (0, 1, 5, 2, 6, 3, 7, 4))
    return x.reshape(B, C_, H * r, W * r, D * r)


def upsample_block_3d(x, weight, bias, *, compute_dtype=None):
    """Forward pass of UpsampleBlock3d.

    x:      (B, Cin, S1, S2, S3)      PyTorch NCDHW-style
    weight: (Cout*8, Cin, 3, 3, 3)    PyTorch Conv3d weight layout (OIDHW)
    bias:   (Cout*8,)
    compute_dtype: dtype fed to the MXU; defaults to bfloat16 (f32 accumulation).
    returns (B, Cout, 2*S1, 2*S2, 2*S3) in x.dtype
    """
    B, Cin, S1, S2, S3 = x.shape
    C8 = weight.shape[0]
    Cout = C8 // 8
    cdt = jnp.bfloat16 if compute_dtype is None else compute_dtype

    # --- glue: channels-last + 1-voxel halo pad (input is 8x smaller than out) ---
    x_cl = jnp.transpose(x, (0, 2, 3, 4, 1)).astype(cdt)       # (B, S1, S2, S3, Cin)
    x_pad = jnp.pad(x_cl, ((0, 0), (1, 1), (1, 1), (1, 1), (0, 0)))

    # Weights split per kd: (kd, (kh, kw, cin), cout); output channels on lanes.
    w_k = jnp.transpose(weight, (2, 3, 4, 1, 0)).reshape(3, 9 * Cin, C8).astype(cdt)
    b_k = bias.reshape(1, C8).astype(jnp.float32)

    # Pick rows-per-step so matmul M = DR*S2*S3 reaches ~256 when possible.
    target = max(1, -(-256 // (S2 * S3)))                      # ceil(256 / (S2*S3))
    DR = 1
    for cand in range(min(target, S1), 0, -1):
        if S1 % cand == 0:
            DR = cand
            break

    HW = S2 * S3
    MR = DR * HW
    kernel = functools.partial(_conv3d_kernel,
                               DR=DR, H=S2, W=S3, Cin=Cin, C8=C8)

    bpe = jnp.dtype(cdt).itemsize
    # Explicit VMEM budget: single-buffered input/weight/bias, double-buffered
    # output block, f32 accumulator, per-kd LHS scratch, + 16 MiB headroom.
    vmem_needed = (
        (S1 + 2) * (S2 + 2) * (S3 + 2) * Cin * bpe   # resident padded input (x1)
        + 27 * Cin * C8 * bpe                        # weight (x1)
        + C8 * 4                                     # bias
        + 2 * DR * HW * C8 * bpe                     # output block (x2)
        + MR * C8 * 4                                # f32 accumulator scratch
        + MR * 9 * Cin * bpe                         # per-kd LHS scratch
    )
    vmem_limit = min(int(vmem_needed) + (16 << 20), 100 << 20)

    conv = pl.pallas_call(
        kernel,
        out_shape=jax.ShapeDtypeStruct((B, S1, HW, C8), cdt),
        grid=(B, S1 // DR),
        in_specs=[
            # Whole padded volume stays VMEM-resident per batch element; it only
            # changes with b, so single-buffer it.
            pl.BlockSpec((1, S1 + 2, S2 + 2, S3 + 2, Cin),
                         lambda b, d: (b, 0, 0, 0, 0),
                         pipeline_mode=pl.Buffered(1)),
            # Grid-invariant weight / bias: single-buffered (DMA'd once).
            pl.BlockSpec((3, 9 * Cin, C8), lambda b, d: (0, 0, 0),
                         pipeline_mode=pl.Buffered(1)),
            pl.BlockSpec((1, C8), lambda b, d: (0, 0),
                         pipeline_mode=pl.Buffered(1)),
        ],
        out_specs=pl.BlockSpec((1, DR, HW, C8), lambda b, d: (b, d, 0, 0)),
        scratch_shapes=[
            pltpu.VMEM((MR, C8), jnp.float32),       # accumulator
            pltpu.VMEM((MR, 9 * Cin), cdt),          # per-kd im2col LHS
        ],
        compiler_params=pltpu.CompilerParams(
            dimension_semantics=("parallel", "parallel"),
            vmem_limit_bytes=vmem_limit),
    )(x_pad, w_k, b_k)

    # --- glue: fused pixel shuffle + NCDHW restore (single transpose pass) ---
    # conv[b, s1, s2*S3+s3, c*8 + i*4 + j*2 + k]  ->  out[b, c, 2s1+i, 2s2+j, 2s3+k]
    y = conv.reshape(B, S1, S2, S3, Cout, 2, 2, 2)             # free reshape
    y = jnp.transpose(y, (0, 4, 1, 5, 2, 6, 3, 7))             # (B, Cout, S1,2, S2,2, S3,2)
    return y.reshape(B, Cout, 2 * S1, 2 * S2, 2 * S3).astype(x.dtype)


def _reference(x, weight, bias):
    """Pure-JAX reference (XLA conv, f32) for correctness check."""
    y = jax.lax.conv_general_dilated(
        x, weight, window_strides=(1, 1, 1),
        padding=((1, 1), (1, 1), (1, 1)),
        dimension_numbers=("NCDHW", "OIDHW", "NCDHW"))
    y = y + bias.reshape(1, -1, 1, 1, 1)
    return pixel_shuffle_3d(y, 2)


if __name__ == "__main__":
    key = jax.random.PRNGKey(0)
    k_x, k_w, k_b = jax.random.split(key, 3)

    B, Cin, Cout = 2, 4, 4
    S1 = S2 = S3 = 8
    C8 = Cout * 8

    x = jax.random.normal(k_x, (B, Cin, S1, S2, S3), dtype=jnp.float32)
    # Deterministic synthetic Conv3d parameters (PyTorch shapes: (C8, Cin, 3, 3, 3), (C8,))
    weight = 0.1 * jax.random.normal(k_w, (C8, Cin, 3, 3, 3), dtype=jnp.float32)
    bias = 0.1 * jax.random.normal(k_b, (C8,), dtype=jnp.float32)

    out = jax.block_until_ready(upsample_block_3d(x, weight, bias))
    ref = jax.block_until_ready(_reference(x, weight, bias))

    assert out.shape == (B, Cout, 2 * S1, 2 * S2, 2 * S3), out.shape
    # bf16 MXU path (f32 accumulation): loosened tolerance vs the f32 reference.
    assert jnp.allclose(out, ref, atol=5e-2, rtol=5e-2), \
        f"max abs err {jnp.max(jnp.abs(out - ref))}"

    print("KERNEL_OK")
</pallas_src>

<mosaic_0001>
module attributes {stable_mosaic.version = 11 : i64} {
  func.func @_conv3d_kernel(%arg0: i32, %arg1: i32, %arg2: memref<1x10x10x10x4xbf16, #tpu.memory_space<vmem>>, %arg3: memref<3x36x32xbf16, #tpu.memory_space<vmem>>, %arg4: memref<1x32xf32, #tpu.memory_space<vmem>>, %arg5: memref<1x4x64x32xbf16, #tpu.memory_space<vmem>>, %arg6: memref<256x32xf32, #tpu.memory_space<vmem>>, %arg7: memref<256x36xbf16, #tpu.memory_space<vmem>>) attributes {dimension_semantics = [#tpu.dimension_semantics<parallel>, #tpu.dimension_semantics<parallel>], iteration_bounds = array<i64: 2, 2>, scalar_prefetch = 0 : i64, scratch_operands = 2 : i64, tpu.core_type = #tpu.core_type<tc>, window_params = [{pipeline_mode = #tpu.pipeline_mode<synchronous>, transform_indices = @transform_0, window_bounds = array<i64: 1, 10, 10, 10, 4>}, {pipeline_mode = #tpu.pipeline_mode<synchronous>, transform_indices = @transform_1, window_bounds = array<i64: 3, 36, 32>}, {pipeline_mode = #tpu.pipeline_mode<synchronous>, transform_indices = @transform_2, window_bounds = array<i64: 1, 32>}, {transform_indices = @transform_3, window_bounds = array<i64: 1, 4, 64, 32>}]} {
    %c4_i32 = arith.constant 4 : i32
    %0 = arith.muli %arg1, %c4_i32 : i32
    %1 = tpu.assume_multiple %0, 4 : i32
    %c0 = arith.constant 0 : index
    %c0_0 = arith.constant 0 : index
    %2 = vector.load %arg4[%c0, %c0_0] : memref<1x32xf32, #tpu.memory_space<vmem>>, vector<1x32xf32>
    %3 = vector.shape_cast %2 : vector<1x32xf32> to vector<1x32xf32>
    %4 = vector.broadcast %3 : vector<1x32xf32> to vector<256x32xf32>
    %c0_1 = arith.constant 0 : index
    %c0_2 = arith.constant 0 : index
    %5 = vector.load %arg6[%c0_1, %c0_2] : memref<256x32xf32, #tpu.memory_space<vmem>>, vector<256x32xf32>
    tpu.vector_store %arg6[%c0_1, %c0_2], %4 {strides = array<i32>} : memref<256x32xf32, #tpu.memory_space<vmem>>, vector<256x32xf32>,
    %c0_i32 = arith.constant 0 : i32
    %6 = arith.addi %1, %c0_i32 : i32
    %c0_3 = arith.constant 0 : index
    %7 = arith.index_cast %6 : i32 to index
    %c0_4 = arith.constant 0 : index
    %c0_5 = arith.constant 0 : index
    %c0_6 = arith.constant 0 : index
    %8 = vector.load %arg2[%c0_3, %7, %c0_4, %c0_5, %c0_6] : memref<1x10x10x10x4xbf16, #tpu.memory_space<vmem>>, vector<1x4x10x10x4xbf16>
    %9 = vector.shape_cast %8 : vector<1x4x10x10x4xbf16> to vector<4x10x10x4xbf16>
    %10 = vector.extract_strided_slice %9 {offsets = [0, 0, 0, 0], sizes = [4, 8, 8, 4], strides = [1, 1, 1, 1]} : vector<4x10x10x4xbf16> to vector<4x8x8x4xbf16>
    %11 = vector.shape_cast %10 : vector<4x8x8x4xbf16> to vector<256x4xbf16>
    %c0_7 = arith.constant 0 : index
    %c0_8 = arith.constant 0 : index
    %12 = vector.load %arg7[%c0_7, %c0_8] : memref<256x36xbf16, #tpu.memory_space<vmem>>, vector<256x4xbf16>
    tpu.vector_store %arg7[%c0_7, %c0_8], %11 {strides = array<i32>} : memref<256x36xbf16, #tpu.memory_space<vmem>>, vector<256x4xbf16>,
    %13 = vector.extract_strided_slice %9 {offsets = [0, 0, 1, 0], sizes = [4, 8, 8, 4], strides = [1, 1, 1, 1]} : vector<4x10x10x4xbf16> to vector<4x8x8x4xbf16>
    %14 = vector.shape_cast %13 : vector<4x8x8x4xbf16> to vector<256x4xbf16>
    %c0_9 = arith.constant 0 : index
    %c4 = arith.constant 4 : index
    %15 = vector.load %arg7[%c0_9, %c4] : memref<256x36xbf16, #tpu.memory_space<vmem>>, vector<256x4xbf16>
    tpu.vector_store %arg7[%c0_9, %c4], %14 {strides = array<i32>} : memref<256x36xbf16, #tpu.memory_space<vmem>>, vector<256x4xbf16>,
    %16 = vector.extract_strided_slice %9 {offsets = [0, 0, 2, 0], sizes = [4, 8, 8, 4], strides = [1, 1, 1, 1]} : vector<4x10x10x4xbf16> to vector<4x8x8x4xbf16>
    %17 = vector.shape_cast %16 : vector<4x8x8x4xbf16> to vector<256x4xbf16>
    %c0_10 = arith.constant 0 : index
    %c8 = arith.constant 8 : index
    %18 = vector.load %arg7[%c0_10, %c8] : memref<256x36xbf16, #tpu.memory_space<vmem>>, vector<256x4xbf16>
    tpu.vector_store %arg7[%c0_10, %c8], %17 {strides = array<i32>} : memref<256x36xbf16, #tpu.memory_space<vmem>>, vector<256x4xbf16>,
    %19 = vector.extract_strided_slice %9 {offsets = [0, 1, 0, 0], sizes = [4, 8, 8, 4], strides = [1, 1, 1, 1]} : vector<4x10x10x4xbf16> to vector<4x8x8x4xbf16>
    %20 = vector.shape_cast %19 : vector<4x8x8x4xbf16> to vector<256x4xbf16>
    %c0_11 = arith.constant 0 : index
    %c12 = arith.constant 12 : index
    %21 = vector.load %arg7[%c0_11, %c12] : memref<256x36xbf16, #tpu.memory_space<vmem>>, vector<256x4xbf16>
    tpu.vector_store %arg7[%c0_11, %c12], %20 {strides = array<i32>} : memref<256x36xbf16, #tpu.memory_space<vmem>>, vector<256x4xbf16>,
    %22 = vector.extract_strided_slice %9 {offsets = [0, 1, 1, 0], sizes = [4, 8, 8, 4], strides = [1, 1, 1, 1]} : vector<4x10x10x4xbf16> to vector<4x8x8x4xbf16>
    %23 = vector.shape_cast %22 : vector<4x8x8x4xbf16> to vector<256x4xbf16>
    %c0_12 = arith.constant 0 : index
    %c16 = arith.constant 16 : index
    %24 = vector.load %arg7[%c0_12, %c16] : memref<256x36xbf16, #tpu.memory_space<vmem>>, vector<256x4xbf16>
    tpu.vector_store %arg7[%c0_12, %c16], %23 {strides = array<i32>} : memref<256x36xbf16, #tpu.memory_space<vmem>>, vector<256x4xbf16>,
    %25 = vector.extract_strided_slice %9 {offsets = [0, 1, 2, 0], sizes = [4, 8, 8, 4], strides = [1, 1, 1, 1]} : vector<4x10x10x4xbf16> to vector<4x8x8x4xbf16>
    %26 = vector.shape_cast %25 : vector<4x8x8x4xbf16> to vector<256x4xbf16>
    %c0_13 = arith.constant 0 : index
    %c20 = arith.constant 20 : index
    %27 = vector.load %arg7[%c0_13, %c20] : memref<256x36xbf16, #tpu.memory_space<vmem>>, vector<256x4xbf16>
    tpu.vector_store %arg7[%c0_13, %c20], %26 {strides = array<i32>} : memref<256x36xbf16, #tpu.memory_space<vmem>>, vector<256x4xbf16>,
    %28 = vector.extract_strided_slice %9 {offsets = [0, 2, 0, 0], sizes = [4, 8, 8, 4], strides = [1, 1, 1, 1]} : vector<4x10x10x4xbf16> to vector<4x8x8x4xbf16>
    %29 = vector.shape_cast %28 : vector<4x8x8x4xbf16> to vector<256x4xbf16>
    %c0_14 = arith.constant 0 : index
    %c24 = arith.constant 24 : index
    %30 = vector.load %arg7[%c0_14, %c24] : memref<256x36xbf16, #tpu.memory_space<vmem>>, vector<256x4xbf16>
    tpu.vector_store %arg7[%c0_14, %c24], %29 {strides = array<i32>} : memref<256x36xbf16, #tpu.memory_space<vmem>>, vector<256x4xbf16>,
    %31 = vector.extract_strided_slice %9 {offsets = [0, 2, 1, 0], sizes = [4, 8, 8, 4], strides = [1, 1, 1, 1]} : vector<4x10x10x4xbf16> to vector<4x8x8x4xbf16>
    %32 = vector.shape_cast %31 : vector<4x8x8x4xbf16> to vector<256x4xbf16>
    %c0_15 = arith.constant 0 : index
    %c28 = arith.constant 28 : index
    %33 = vector.load %arg7[%c0_15, %c28] : memref<256x36xbf16, #tpu.memory_space<vmem>>, vector<256x4xbf16>
    tpu.vector_store %arg7[%c0_15, %c28], %32 {strides = array<i32>} : memref<256x36xbf16, #tpu.memory_space<vmem>>, vector<256x4xbf16>,
    %34 = vector.extract_strided_slice %9 {offsets = [0, 2, 2, 0], sizes = [4, 8, 8, 4], strides = [1, 1, 1, 1]} : vector<4x10x10x4xbf16> to vector<4x8x8x4xbf16>
    %35 = vector.shape_cast %34 : vector<4x8x8x4xbf16> to vector<256x4xbf16>
    %c0_16 = arith.constant 0 : index
    %c32 = arith.constant 32 : index
    %36 = vector.load %arg7[%c0_16, %c32] : memref<256x36xbf16, #tpu.memory_space<vmem>>, vector<256x4xbf16>
    tpu.vector_store %arg7[%c0_16, %c32], %35 {strides = array<i32>} : memref<256x36xbf16, #tpu.memory_space<vmem>>, vector<256x4xbf16>,
    %c0_17 = arith.constant 0 : index
    %c0_18 = arith.constant 0 : index
    %37 = vector.load %arg6[%c0_17, %c0_18] : memref<256x32xf32, #tpu.memory_space<vmem>>, vector<256x32xf32>
    %c0_19 = arith.constant 0 : index
    %c0_20 = arith.constant 0 : index
    %38 = vector.load %arg7[%c0_19, %c0_20] : memref<256x36xbf16, #tpu.memory_space<vmem>>, vector<256x36xbf16>
    %c0_21 = arith.constant 0 : index
    %c0_22 = arith.constant 0 : index
    %c0_23 = arith.constant 0 : index
    %39 = vector.load %arg3[%c0_21, %c0_22, %c0_23] : memref<3x36x32xbf16, #tpu.memory_space<vmem>>, vector<1x36x32xbf16>
    %40 = vector.shape_cast %39 : vector<1x36x32xbf16> to vector<36x32xbf16>
    %cst = arith.constant dense<0.000000e+00> : vector<256x32xf32>
    %41 = tpu.matmul %38, %40, %cst {dimension_numbers = #tpu.dot_dimension_numbers<[1], [0], [0], [1], [0, 0, 1, 1], [], []>} : vector<256x36xbf16>, vector<36x32xbf16>, vector<256x32xf32> -> vector<256x32xf32>
    %42 = arith.addf %37, %41 : vector<256x32xf32>
    %c0_24 = arith.constant 0 : index
    %c0_25 = arith.constant 0 : index
    %43 = vector.load %arg6[%c0_24, %c0_25] : memref<256x32xf32, #tpu.memory_space<vmem>>, vector<256x32xf32>
    tpu.vector_store %arg6[%c0_24, %c0_25], %42 {strides = array<i32>} : memref<256x32xf32, #tpu.memory_space<vmem>>, vector<256x32xf32>,
    %c1_i32 = arith.constant 1 : i32
    %44 = arith.addi %1, %c1_i32 : i32
    %c0_26 = arith.constant 0 : index
    %45 = arith.index_cast %44 : i32 to index
    %c0_27 = arith.constant 0 : index
    %c0_28 = arith.constant 0 : index
    %c0_29 = arith.constant 0 : index
    %46 = vector.load %arg2[%c0_26, %45, %c0_27, %c0_28, %c0_29] : memref<1x10x10x10x4xbf16, #tpu.memory_space<vmem>>, vector<1x4x10x10x4xbf16>
    %47 = vector.shape_cast %46 : vector<1x4x10x10x4xbf16> to vector<4x10x10x4xbf16>
    %48 = vector.extract_strided_slice %47 {offsets = [0, 0, 0, 0], sizes = [4, 8, 8, 4], strides = [1, 1, 1, 1]} : vector<4x10x10x4xbf16> to vector<4x8x8x4xbf16>
    %49 = vector.shape_cast %48 : vector<4x8x8x4xbf16> to vector<256x4xbf16>
    %c0_30 = arith.constant 0 : index
    %c0_31 = arith.constant 0 : index
    %50 = vector.load %arg7[%c0_30, %c0_31] : memref<256x36xbf16, #tpu.memory_space<vmem>>, vector<256x4xbf16>
    tpu.vector_store %arg7[%c0_30, %c0_31], %49 {strides = array<i32>} : memref<256x36xbf16, #tpu.memory_space<vmem>>, vector<256x4xbf16>,
    %51 = vector.extract_strided_slice %47 {offsets = [0, 0, 1, 0], sizes = [4, 8, 8, 4], strides = [1, 1, 1, 1]} : vector<4x10x10x4xbf16> to vector<4x8x8x4xbf16>
    %52 = vector.shape_cast %51 : vector<4x8x8x4xbf16> to vector<256x4xbf16>
    %c0_32 = arith.constant 0 : index
    %c4_33 = arith.constant 4 : index
    %53 = vector.load %arg7[%c0_32, %c4_33] : memref<256x36xbf16, #tpu.memory_space<vmem>>, vector<256x4xbf16>
    tpu.vector_store %arg7[%c0_32, %c4_33], %52 {strides = array<i32>} : memref<256x36xbf16, #tpu.memory_space<vmem>>, vector<256x4xbf16>,
    %54 = vector.extract_strided_slice %47 {offsets = [0, 0, 2, 0], sizes = [4, 8, 8, 4], strides = [1, 1, 1, 1]} : vector<4x10x10x4xbf16> to vector<4x8x8x4xbf16>
    %55 = vector.shape_cast %54 : vector<4x8x8x4xbf16> to vector<256x4xbf16>
    %c0_34 = arith.constant 0 : index
    %c8_35 = arith.constant 8 : index
    %56 = vector.load %arg7[%c0_34, %c8_35] : memref<256x36xbf16, #tpu.memory_space<vmem>>, vector<256x4xbf16>
    tpu.vector_store %arg7[%c0_34, %c8_35], %55 {strides = array<i32>} : memref<256x36xbf16, #tpu.memory_space<vmem>>, vector<256x4xbf16>,
    %57 = vector.extract_strided_slice %47 {offsets = [0, 1, 0, 0], sizes = [4, 8, 8, 4], strides = [1, 1, 1, 1]} : vector<4x10x10x4xbf16> to vector<4x8x8x4xbf16>
    %58 = vector.shape_cast %57 : vector<4x8x8x4xbf16> to vector<256x4xbf16>
    %c0_36 = arith.constant 0 : index
    %c12_37 = arith.constant 12 : index
    %59 = vector.load %arg7[%c0_36, %c12_37] : memref<256x36xbf16, #tpu.memory_space<vmem>>, vector<256x4xbf16>
    tpu.vector_store %arg7[%c0_36, %c12_37], %58 {strides = array<i32>} : memref<256x36xbf16, #tpu.memory_space<vmem>>, vector<256x4xbf16>,
    %60 = vector.extract_strided_slice %47 {offsets = [0, 1, 1, 0], sizes = [4, 8, 8, 4], strides = [1, 1, 1, 1]} : vector<4x10x10x4xbf16> to vector<4x8x8x4xbf16>
    %61 = vector.shape_cast %60 : vector<4x8x8x4xbf16> to vector<256x4xbf16>
    %c0_38 = arith.constant 0 : index
    %c16_39 = arith.constant 16 : index
    %62 = vector.load %arg7[%c0_38, %c16_39] : memref<256x36xbf16, #tpu.memory_space<vmem>>, vector<256x4xbf16>
    tpu.vector_store %arg7[%c0_38, %c16_39], %61 {strides = array<i32>} : memref<256x36xbf16, #tpu.memory_space<vmem>>, vector<256x4xbf16>,
    %63 = vector.extract_strided_slice %47 {offsets = [0, 1, 2, 0], sizes = [4, 8, 8, 4], strides = [1, 1, 1, 1]} : vector<4x10x10x4xbf16> to vector<4x8x8x4xbf16>
    %64 = vector.shape_cast %63 : vector<4x8x8x4xbf16> to vector<256x4xbf16>
    %c0_40 = arith.constant 0 : index
    %c20_41 = arith.constant 20 : index
    %65 = vector.load %arg7[%c0_40, %c20_41] : memref<256x36xbf16, #tpu.memory_space<vmem>>, vector<256x4xbf16>
    tpu.vector_store %arg7[%c0_40, %c20_41], %64 {strides = array<i32>} : memref<256x36xbf16, #tpu.memory_space<vmem>>, vector<256x4xbf16>,
    %66 = vector.extract_strided_slice %47 {offsets = [0, 2, 0, 0], sizes = [4, 8, 8, 4], strides = [1, 1, 1, 1]} : vector<4x10x10x4xbf16> to vector<4x8x8x4xbf16>
    %67 = vector.shape_cast %66 : vector<4x8x8x4xbf16> to vector<256x4xbf16>
    %c0_42 = arith.constant 0 : index
    %c24_43 = arith.constant 24 : index
    %68 = vector.load %arg7[%c0_42, %c24_43] : memref<256x36xbf16, #tpu.memory_space<vmem>>, vector<256x4xbf16>
    tpu.vector_store %arg7[%c0_42, %c24_43], %67 {strides = array<i32>} : memref<256x36xbf16, #tpu.memory_space<vmem>>, vector<256x4xbf16>,
    %69 = vector.extract_strided_slice %47 {offsets = [0, 2, 1, 0], sizes = [4, 8, 8, 4], strides = [1, 1, 1, 1]} : vector<4x10x10x4xbf16> to vector<4x8x8x4xbf16>
    %70 = vector.shape_cast %69 : vector<4x8x8x4xbf16> to vector<256x4xbf16>
    %c0_44 = arith.constant 0 : index
    %c28_45 = arith.constant 28 : index
    %71 = vector.load %arg7[%c0_44, %c28_45] : memref<256x36xbf16, #tpu.memory_space<vmem>>, vector<256x4xbf16>
    tpu.vector_store %arg7[%c0_44, %c28_45], %70 {strides = array<i32>} : memref<256x36xbf16, #tpu.memory_space<vmem>>, vector<256x4xbf16>,
    %72 = vector.extract_strided_slice %47 {offsets = [0, 2, 2, 0], sizes = [4, 8, 8, 4], strides = [1, 1, 1, 1]} : vector<4x10x10x4xbf16> to vector<4x8x8x4xbf16>
    %73 = vector.shape_cast %72 : vector<4x8x8x4xbf16> to vector<256x4xbf16>
    %c0_46 = arith.constant 0 : index
    %c32_47 = arith.constant 32 : index
    %74 = vector.load %arg7[%c0_46, %c32_47] : memref<256x36xbf16, #tpu.memory_space<vmem>>, vector<256x4xbf16>
    tpu.vector_store %arg7[%c0_46, %c32_47], %73 {strides = array<i32>} : memref<256x36xbf16, #tpu.memory_space<vmem>>, vector<256x4xbf16>,
    %c0_48 = arith.constant 0 : index
    %c0_49 = arith.constant 0 : index
    %75 = vector.load %arg6[%c0_48, %c0_49] : memref<256x32xf32, #tpu.memory_space<vmem>>, vector<256x32xf32>
    %c0_50 = arith.constant 0 : index
    %c0_51 = arith.constant 0 : index
    %76 = vector.load %arg7[%c0_50, %c0_51] : memref<256x36xbf16, #tpu.memory_space<vmem>>, vector<256x36xbf16>
    %c1 = arith.constant 1 : index
    %c0_52 = arith.constant 0 : index
    %c0_53 = arith.constant 0 : index
    %77 = vector.load %arg3[%c1, %c0_52, %c0_53] : memref<3x36x32xbf16, #tpu.memory_space<vmem>>, vector<1x36x32xbf16>
    %78 = vector.shape_cast %77 : vector<1x36x32xbf16> to vector<36x32xbf16>
    %cst_54 = arith.constant dense<0.000000e+00> : vector<256x32xf32>
    %79 = tpu.matmul %76, %78, %cst_54 {dimension_numbers = #tpu.dot_dimension_numbers<[1], [0], [0], [1], [0, 0, 1, 1], [], []>} : vector<256x36xbf16>, vector<36x32xbf16>, vector<256x32xf32> -> vector<256x32xf32>
    %80 = arith.addf %75, %79 : vector<256x32xf32>
    %c0_55 = arith.constant 0 : index
    %c0_56 = arith.constant 0 : index
    %81 = vector.load %arg6[%c0_55, %c0_56] : memref<256x32xf32, #tpu.memory_space<vmem>>, vector<256x32xf32>
    tpu.vector_store %arg6[%c0_55, %c0_56], %80 {strides = array<i32>} : memref<256x32xf32, #tpu.memory_space<vmem>>, vector<256x32xf32>,
    %c2_i32 = arith.constant 2 : i32
    %82 = arith.addi %1, %c2_i32 : i32
    %c0_57 = arith.constant 0 : index
    %83 = arith.index_cast %82 : i32 to index
    %c0_58 = arith.constant 0 : index
    %c0_59 = arith.constant 0 : index
    %c0_60 = arith.constant 0 : index
    %84 = vector.load %arg2[%c0_57, %83, %c0_58, %c0_59, %c0_60] : memref<1x10x10x10x4xbf16, #tpu.memory_space<vmem>>, vector<1x4x10x10x4xbf16>
    %85 = vector.shape_cast %84 : vector<1x4x10x10x4xbf16> to vector<4x10x10x4xbf16>
    %86 = vector.extract_strided_slice %85 {offsets = [0, 0, 0, 0], sizes = [4, 8, 8, 4], strides = [1, 1, 1, 1]} : vector<4x10x10x4xbf16> to vector<4x8x8x4xbf16>
    %87 = vector.shape_cast %86 : vector<4x8x8x4xbf16> to vector<256x4xbf16>
    %c0_61 = arith.constant 0 : index
    %c0_62 = arith.constant 0 : index
    %88 = vector.load %arg7[%c0_61, %c0_62] : memref<256x36xbf16, #tpu.memory_space<vmem>>, vector<256x4xbf16>
    tpu.vector_store %arg7[%c0_61, %c0_62], %87 {strides = array<i32>} : memref<256x36xbf16, #tpu.memory_space<vmem>>, vector<256x4xbf16>,
    %89 = vector.extract_strided_slice %85 {offsets = [0, 0, 1, 0], sizes = [4, 8, 8, 4], strides = [1, 1, 1, 1]} : vector<4x10x10x4xbf16> to vector<4x8x8x4xbf16>
    %90 = vector.shape_cast %89 : vector<4x8x8x4xbf16> to vector<256x4xbf16>
    %c0_63 = arith.constant 0 : index
    %c4_64 = arith.constant 4 : index
    %91 = vector.load %arg7[%c0_63, %c4_64] : memref<256x36xbf16, #tpu.memory_space<vmem>>, vector<256x4xbf16>
    tpu.vector_store %arg7[%c0_63, %c4_64], %90 {strides = array<i32>} : memref<256x36xbf16, #tpu.memory_space<vmem>>, vector<256x4xbf16>,
    %92 = vector.extract_strided_slice %85 {offsets = [0, 0, 2, 0], sizes = [4, 8, 8, 4], strides = [1, 1, 1, 1]} : vector<4x10x10x4xbf16> to vector<4x8x8x4xbf16>
    %93 = vector.shape_cast %92 : vector<4x8x8x4xbf16> to vector<256x4xbf16>
    %c0_65 = arith.constant 0 : index
    %c8_66 = arith.constant 8 : index
    %94 = vector.load %arg7[%c0_65, %c8_66] : memref<256x36xbf16, #tpu.memory_space<vmem>>, vector<256x4xbf16>
    tpu.vector_store %arg7[%c0_65, %c8_66], %93 {strides = array<i32>} : memref<256x36xbf16, #tpu.memory_space<vmem>>, vector<256x4xbf16>,
    %95 = vector.extract_strided_slice %85 {offsets = [0, 1, 0, 0], sizes = [4, 8, 8, 4], strides = [1, 1, 1, 1]} : vector<4x10x10x4xbf16> to vector<4x8x8x4xbf16>
    %96 = vector.shape_cast %95 : vector<4x8x8x4xbf16> to vector<256x4xbf16>
    %c0_67 = arith.constant 0 : index
    %c12_68 = arith.constant 12 : index
    %97 = vector.load %arg7[%c0_67, %c12_68] : memref<256x36xbf16, #tpu.memory_space<vmem>>, vector<256x4xbf16>
    tpu.vector_store %arg7[%c0_67, %c12_68], %96 {strides = array<i32>} : memref<256x36xbf16, #tpu.memory_space<vmem>>, vector<256x4xbf16>,
    %98 = vector.extract_strided_slice %85 {offsets = [0, 1, 1, 0], sizes = [4, 8, 8, 4], strides = [1, 1, 1, 1]} : vector<4x10x10x4xbf16> to vector<4x8x8x4xbf16>
    %99 = vector.shape_cast %98 : vector<4x8x8x4xbf16> to vector<256x4xbf16>
    %c0_69 = arith.constant 0 : index
    %c16_70 = arith.constant 16 : index
    %100 = vector.load %arg7[%c0_69, %c16_70] : memref<256x36xbf16, #tpu.memory_space<vmem>>, vector<256x4xbf16>
    tpu.vector_store %arg7[%c0_69, %c16_70], %99 {strides = array<i32>} : memref<256x36xbf16, #tpu.memory_space<vmem>>, vector<256x4xbf16>,
    %101 = vector.extract_strided_slice %85 {offsets = [0, 1, 2, 0], sizes = [4, 8, 8, 4], strides = [1, 1, 1, 1]} : vector<4x10x10x4xbf16> to vector<4x8x8x4xbf16>
    %102 = vector.shape_cast %101 : vector<4x8x8x4xbf16> to vector<256x4xbf16>
    %c0_71 = arith.constant 0 : index
    %c20_72 = arith.constant 20 : index
    %103 = vector.load %arg7[%c0_71, %c20_72] : memref<256x36xbf16, #tpu.memory_space<vmem>>, vector<256x4xbf16>
    tpu.vector_store %arg7[%c0_71, %c20_72], %102 {strides = array<i32>} : memref<256x36xbf16, #tpu.memory_space<vmem>>, vector<256x4xbf16>,
    %104 = vector.extract_strided_slice %85 {offsets = [0, 2, 0, 0], sizes = [4, 8, 8, 4], strides = [1, 1, 1, 1]} : vector<4x10x10x4xbf16> to vector<4x8x8x4xbf16>
    %105 = vector.shape_cast %104 : vector<4x8x8x4xbf16> to vector<256x4xbf16>
    %c0_73 = arith.constant 0 : index
    %c24_74 = arith.constant 24 : index
    %106 = vector.load %arg7[%c0_73, %c24_74] : memref<256x36xbf16, #tpu.memory_space<vmem>>, vector<256x4xbf16>
    tpu.vector_store %arg7[%c0_73, %c24_74], %105 {strides = array<i32>} : memref<256x36xbf16, #tpu.memory_space<vmem>>, vector<256x4xbf16>,
    %107 = vector.extract_strided_slice %85 {offsets = [0, 2, 1, 0], sizes = [4, 8, 8, 4], strides = [1, 1, 1, 1]} : vector<4x10x10x4xbf16> to vector<4x8x8x4xbf16>
    %108 = vector.shape_cast %107 : vector<4x8x8x4xbf16> to vector<256x4xbf16>
    %c0_75 = arith.constant 0 : index
    %c28_76 = arith.constant 28 : index
    %109 = vector.load %arg7[%c0_75, %c28_76] : memref<256x36xbf16, #tpu.memory_space<vmem>>, vector<256x4xbf16>
    tpu.vector_store %arg7[%c0_75, %c28_76], %108 {strides = array<i32>} : memref<256x36xbf16, #tpu.memory_space<vmem>>, vector<256x4xbf16>,
    %110 = vector.extract_strided_slice %85 {offsets = [0, 2, 2, 0], sizes = [4, 8, 8, 4], strides = [1, 1, 1, 1]} : vector<4x10x10x4xbf16> to vector<4x8x8x4xbf16>
    %111 = vector.shape_cast %110 : vector<4x8x8x4xbf16> to vector<256x4xbf16>
    %c0_77 = arith.constant 0 : index
    %c32_78 = arith.constant 32 : index
    %112 = vector.load %arg7[%c0_77, %c32_78] : memref<256x36xbf16, #tpu.memory_space<vmem>>, vector<256x4xbf16>
    tpu.vector_store %arg7[%c0_77, %c32_78], %111 {strides = array<i32>} : memref<256x36xbf16, #tpu.memory_space<vmem>>, vector<256x4xbf16>,
    %c0_79 = arith.constant 0 : index
    %c0_80 = arith.constant 0 : index
    %113 = vector.load %arg6[%c0_79, %c0_80] : memref<256x32xf32, #tpu.memory_space<vmem>>, vector<256x32xf32>
    %c0_81 = arith.constant 0 : index
    %c0_82 = arith.constant 0 : index
    %114 = vector.load %arg7[%c0_81, %c0_82] : memref<256x36xbf16, #tpu.memory_space<vmem>>, vector<256x36xbf16>
    %c2 = arith.constant 2 : index
    %c0_83 = arith.constant 0 : index
    %c0_84 = arith.constant 0 : index
    %115 = vector.load %arg3[%c2, %c0_83, %c0_84] : memref<3x36x32xbf16, #tpu.memory_space<vmem>>, vector<1x36x32xbf16>
    %116 = vector.shape_cast %115 : vector<1x36x32xbf16> to vector<36x32xbf16>
    %cst_85 = arith.constant dense<0.000000e+00> : vector<256x32xf32>
    %117 = tpu.matmul %114, %116, %cst_85 {dimension_numbers = #tpu.dot_dimension_numbers<[1], [0], [0], [1], [0, 0, 1, 1], [], []>} : vector<256x36xbf16>, vector<36x32xbf16>, vector<256x32xf32> -> vector<256x32xf32>
    %118 = arith.addf %113, %117 : vector<256x32xf32>
    %c0_86 = arith.constant 0 : index
    %c0_87 = arith.constant 0 : index
    %119 = vector.load %arg6[%c0_86, %c0_87] : memref<256x32xf32, #tpu.memory_space<vmem>>, vector<256x32xf32>
    tpu.vector_store %arg6[%c0_86, %c0_87], %118 {strides = array<i32>} : memref<256x32xf32, #tpu.memory_space<vmem>>, vector<256x32xf32>,
    %c0_88 = arith.constant 0 : index
    %c0_89 = arith.constant 0 : index
    %120 = vector.load %arg6[%c0_88, %c0_89] : memref<256x32xf32, #tpu.memory_space<vmem>>, vector<256x32xf32>
    %121 = vector.shape_cast %120 : vector<256x32xf32> to vector<4x64x32xf32>
    %122 = arith.truncf %121 : vector<4x64x32xf32> to vector<4x64x32xbf16>
    %c0_90 = arith.constant 0 : index
    %c0_91 = arith.constant 0 : index
    %c0_92 = arith.constant 0 : index
    %c0_93 = arith.constant 0 : index
    %123 = vector.load %arg5[%c0_90, %c0_91, %c0_92, %c0_93] : memref<1x4x64x32xbf16, #tpu.memory_space<vmem>>, vector<1x4x64x32xbf16>
    %124 = vector.shape_cast %123 : vector<1x4x64x32xbf16> to vector<4x64x32xbf16>
    %125 = vector.shape_cast %122 : vector<4x64x32xbf16> to vector<1x4x64x32xbf16>
    tpu.vector_store %arg5[%c0_90, %c0_91, %c0_92, %c0_93], %125 {strides = array<i32>} : memref<1x4x64x32xbf16, #tpu.memory_space<vmem>>, vector<1x4x64x32xbf16>,
    return
  }
  func.func @transform_0(%arg0: i32, %arg1: i32) -> (i32, i32, i32, i32, i32) {
    %c0_i32 = arith.constant 0 : i32
    %c0_i32_0 = arith.constant 0 : i32
    %c0_i32_1 = arith.constant 0 : i32
    %c0_i32_2 = arith.constant 0 : i32
    %c0_i32_3 = arith.constant 0 : i32
    return %arg0, %c0_i32, %c0_i32_0, %c0_i32_1, %c0_i32_2 : i32, i32, i32, i32, i32
  }
  func.func @transform_1(%arg0: i32, %arg1: i32) -> (i32, i32, i32) {
    %c0_i32 = arith.constant 0 : i32
    %c0_i32_0 = arith.constant 0 : i32
    %c0_i32_1 = arith.constant 0 : i32
    %c0_i32_2 = arith.constant 0 : i32
    return %c0_i32, %c0_i32_0, %c0_i32_1 : i32, i32, i32
  }
  func.func @transform_2(%arg0: i32, %arg1: i32) -> (i32, i32) {
    %c0_i32 = arith.constant 0 : i32
    %c0_i32_0 = arith.constant 0 : i32
    %c0_i32_1 = arith.constant 0 : i32
    return %c0_i32, %c0_i32_0 : i32, i32
  }
  func.func @transform_3(%arg0: i32, %arg1: i32) -> (i32, i32, i32, i32) {
    %c0_i32 = arith.constant 0 : i32
    %c0_i32_0 = arith.constant 0 : i32
    %c0_i32_1 = arith.constant 0 : i32
    return %arg0, %arg1, %c0_i32, %c0_i32_0 : i32, i32, i32, i32
  }
}

</mosaic_0001>

<llo_original>
// kernel: tpu_custom_call.1
$region0: #{tpu_custom_call.1}
  #allocation0 [shape = 'u32[]', space=smem, size = 0x4, offset = 0x4, fixed_abs, tag = 'smem constant byte address 0x4 - core index']
  #allocation1 [shape = 'u32[144,128]{1,0:T(1,128)}', space=vmem, size = 0x12000, scoped, tag = 'internal scratch']
  #allocation2 [shape = 'f32[256,32]{1,0:T(8,128)}', space=vmem, size = 0x20000, scoped, tag = 'scratch operand']
  #allocation3 [shape = 'bf16[256,36]{1,0:T(16,128)(2,1)}', space=vmem, size = 0x10000, scoped, tag = 'scratch operand']
  %s0 = inlined_call_operand.vmem [shape: bf16[2,10,10,10,4], index: 0, kind: input, shape index: {}]
  %s1 = inlined_call_operand.vmem [shape: bf16[3,36,32], index: 1, kind: input, shape index: {}]
  %s2 = inlined_call_operand.vmem [shape: f32[1,32], index: 2, kind: input, shape index: {}]
  %s3 = inlined_call_operand.vmem [shape: bf16[2,8,64,32], index: 3, kind: output, shape index: {}]
  %s4 = sld [smem:[#allocation0]]
  $region45: #{tpu_custom_call.1} parent=0
    _
  %s6 = ssub.s32 1, %s4
  %s7 = scalar_select 0, %s6, %s4
  loop: start=0, step=1, limit=6
  $region2: #{tpu_custom_call.1} parent=0 // loop_pre_header
    _
  $region3: #{tpu_custom_call.1} parent=0 // loop_header
    %s9 = sphi 0, %s13
    %p10 = scmp.ge.s32.totalorder %s9, 6
    %s16 = sphi 0, %s28
    %s17 = sphi 0, %s24
    %s18 = sphi 0, %s16
    %s19 = sphi 0, %s17
    %s20 = sphi 0, %s18
    %s21 = sphi 0, %s19
    %s31 = sphi 0, %s33
    %s34 = sphi 0, %s31
    %s35 = sphi 0, %s34
    %s51 = sphi 0, %s35
    %s55 = sphi 0, %s55
    %s57 = sphi 0, %s55
    %s58 = sphi 0, %s57
    %s72 = sphi 0, %s58
    %s76 = sphi 0, %s76
    %s78 = sphi 0, %s76
    %s79 = sphi 0, %s78
    %s93 = sphi 0, %s79
    %s101 = sphi 0, %s103
    %s104 = sphi 0, %s101
    %s105 = sphi 0, %s104
    %s121 = sphi 0, %s105
  $region4: #{tpu_custom_call.1} parent=0 // loop_header_branch
    %12 = sbr.rel (%p10) target = $region8
  $region5: #{tpu_custom_call.1} parent=0 // loop_body
    %s14 = ssub.s32 %s9, 1
    %s15 = ssub.s32 %s9, 2
    %s22 = sadd.s32 1, %s17
    %p23 = scmp.ge.s32.totalorder %s22, 2
    %s24 = scalar_select %p23, 0, %s22
    %s25 = sadd.s32 1, %s16
    %s26 = scalar_select %p23, %s25, %s16
    %p27 = scmp.ge.s32.totalorder %s26, 2
    %s28 = scalar_select %p27, 0, %s26
    %s29 = ssub.s32 %s16, %s28
    %p30 = scmp.eq.s32.totalorder %s29, 0
    %s32 = sadd.s32 %s31, 1
    %s33 = scalar_select %p30, %s31, %s32
    %p36 = pneg %p30
    %p37 = scmp.eq.s32.totalorder %s9, 3
    %p38 = por %p36, %p37
    %p39 = scmp.ne.s32.totalorder %s31, %s34
    %p40 = scmp.eq.s32.totalorder %s9, 0
    %p41 = por %p39, %p40
    %p42 = scmp.ne.s32.totalorder %s31, %s34
    %p43 = scmp.eq.s32.totalorder %s14, 3
    %p44 = por %p42, %p43
    %p45 = scmp.ne.s32.totalorder %s34, %s35
    %p46 = scmp.eq.s32.totalorder %s14, 0
    %p47 = por %p45, %p46
    %p48 = scmp.ne.s32.totalorder %s34, %s35
    %p49 = scmp.eq.s32.totalorder %s15, 3
    %p50 = por %p48, %p49
    %p52 = scmp.ne.s32.totalorder %s35, %s51
    %p53 = scmp.eq.s32.totalorder %s15, 0
    %p54 = por %p52, %p53
    %s56 = sadd.s32 %s55, 1
    %p59 = scmp.eq.s32.totalorder %s9, 3
    %p60 = scmp.ne.s32.totalorder %s55, %s57
    %p61 = scmp.eq.s32.totalorder %s9, 0
    %p62 = por %p60, %p61
    %p63 = scmp.ne.s32.totalorder %s55, %s57
    %p64 = scmp.eq.s32.totalorder %s14, 3
    %p65 = por %p63, %p64
    %p66 = scmp.ne.s32.totalorder %s57, %s58
    %p67 = scmp.eq.s32.totalorder %s14, 0
    %p68 = por %p66, %p67
    %p69 = scmp.ne.s32.totalorder %s57, %s58
    %p70 = scmp.eq.s32.totalorder %s15, 3
    %p71 = por %p69, %p70
    %p73 = scmp.ne.s32.totalorder %s58, %s72
    %p74 = scmp.eq.s32.totalorder %s15, 0
    %p75 = por %p73, %p74
    %s77 = sadd.s32 %s76, 1
    %p80 = scmp.eq.s32.totalorder %s9, 3
    %p81 = scmp.ne.s32.totalorder %s76, %s78
    %p82 = scmp.eq.s32.totalorder %s9, 0
    %p83 = por %p81, %p82
    %p84 = scmp.ne.s32.totalorder %s76, %s78
    %p85 = scmp.eq.s32.totalorder %s14, 3
    %p86 = por %p84, %p85
    %p87 = scmp.ne.s32.totalorder %s78, %s79
    %p88 = scmp.eq.s32.totalorder %s14, 0
    %p89 = por %p87, %p88
    %p90 = scmp.ne.s32.totalorder %s78, %s79
    %p91 = scmp.eq.s32.totalorder %s15, 3
    %p92 = por %p90, %p91
    %p94 = scmp.ne.s32.totalorder %s79, %s93
    %p95 = scmp.eq.s32.totalorder %s15, 0
    %p96 = por %p94, %p95
    %s97 = ssub.s32 %s16, %s28
    %s98 = ssub.s32 %s17, %s24
    %s99 = sor.u32 %s97, %s98
    %p100 = scmp.eq.s32.totalorder %s99, 0
    %s102 = sadd.s32 %s101, 1
    %s103 = scalar_select %p100, %s101, %s102
    %p106 = pneg %p100
    %p107 = scmp.eq.s32.totalorder %s9, 3
    %p108 = por %p106, %p107
    %p109 = scmp.ne.s32.totalorder %s101, %s104
    %p110 = scmp.eq.s32.totalorder %s9, 0
    %p111 = por %p109, %p110
    %p112 = scmp.ne.s32.totalorder %s101, %s104
    %p113 = scmp.eq.s32.totalorder %s14, 3
    %p114 = por %p112, %p113
    %p115 = scmp.ne.s32.totalorder %s104, %s105
    %p116 = scmp.eq.s32.totalorder %s14, 0
    %p117 = por %p115, %p116
    %p118 = scmp.ne.s32.totalorder %s104, %s105
    %p119 = scmp.eq.s32.totalorder %s15, 3
    %p120 = por %p118, %p119
    %p122 = scmp.ne.s32.totalorder %s105, %s121
    %p123 = scmp.eq.s32.totalorder %s15, 0
    %p124 = por %p122, %p123
    %p125 = scmp.le.s32.totalorder 1, %s9
    %p126 = scmp.lt.s32.totalorder %s9, 5
    %p127 = pnand %p125, %p126
    %p128 = pneg %p127
    // Predicated region
    $region9: #{tpu_custom_call.1} parent=5 // pred_check
      _
    $region10: #{tpu_custom_call.1} parent=5 // pred_check_branch
      %130 = sbr.rel (%p127) target = $region12
    $region11: #{tpu_custom_call.1} parent=5 // pred_region
      %s131 = ssub.s32 %s9, 1
      // Predicated region
      $region13: #{tpu_custom_call.1} parent=11 // pred_check
        %p132 = pneg %p47
      $region14: #{tpu_custom_call.1} parent=11 // pred_check_branch
        %134 = sbr.rel (%p132) target = $region16
      $region15: #{tpu_custom_call.1} parent=11 // pred_region
        %p135 = scmp.lt.s32.totalorder %s18, 1
        %s136 = scalar_select %p135, %s18, 1
        %s137 = smul.addr %s136, 200
        %s138 = smul.addr %s137, 4
        %s139 = scalar_lea.vmem %s0, %s138
      $region16: #{tpu_custom_call.1} parent=11 // pred_fallthru
        _
      // Predicated region
      $region17: #{tpu_custom_call.1} parent=11 // pred_check
        %p140 = pneg %p68
      $region18: #{tpu_custom_call.1} parent=11 // pred_check_branch
        %142 = sbr.rel (%p140) target = $region20
      $region19: #{tpu_custom_call.1} parent=11 // pred_region
        _
      $region20: #{tpu_custom_call.1} parent=11 // pred_fallthru
        _
      // Predicated region
      $region21: #{tpu_custom_call.1} parent=11 // pred_check
        %p143 = pneg %p89
      $region22: #{tpu_custom_call.1} parent=11 // pred_check_branch
        %145 = sbr.rel (%p143) target = $region24
      $region23: #{tpu_custom_call.1} parent=11 // pred_region
        _
      $region24: #{tpu_custom_call.1} parent=11 // pred_fallthru
        _
    $region12: #{tpu_custom_call.1} parent=5 // pred_fallthru
      _
    %p146 = scmp.lt.s32.totalorder %s9, 4
    // Predicated region
    $region25: #{tpu_custom_call.1} parent=5 // pred_check
      %p147 = pneg %p146
    $region26: #{tpu_custom_call.1} parent=5 // pred_check_branch
      %149 = sbr.rel (%p147) target = $region28
    $region27: #{tpu_custom_call.1} parent=5 // pred_region
      _
    $region28: #{tpu_custom_call.1} parent=5 // pred_fallthru
      _
    %p150 = scmp.le.s32.totalorder 1, %s9
    %p151 = scmp.lt.s32.totalorder %s9, 5
    %p152 = pnand %p150, %p151
    %p153 = pneg %p152
    // Predicated region
    $region29: #{tpu_custom_call.1} parent=5 // pred_check
      _
    $region30: #{tpu_custom_call.1} parent=5 // pred_check_branch
      %155 = sbr.rel (%p152) target = $region32
    $region31: #{tpu_custom_call.1} parent=5 // pred_region
      %s156 = ssub.s32 %s9, 1
      %p157 = scmp.lt.s32.totalorder %s18, 1
      %s158 = scalar_select %p157, %s18, 1
      %s159 = smul.addr %s158, 200
      %s160 = smul.addr %s159, 4
      %s161 = scalar_lea.vmem %s0, %s160
      %p162 = pneg %p47
      %p163 = pneg %p44
      %p164 = pneg %p68
      %p165 = pneg %p65
      %p166 = pneg %p89
      %p167 = pneg %p86
      %p168 = pneg %p117
      %p169 = pneg %p114
      %s170 = smul.u32 4, %s19
      %p171 = scmp.lt.s32.totalorder %s18, 1
      %s172 = scalar_select %p171, %s18, 1
      %p173 = scmp.lt.s32.totalorder %s170, 7
      %s174 = scalar_select %p173, %s170, 7
      %s175 = smul.addr %s174, 8
      %s176 = smul.addr %s172, 64
      %s177 = sadd.s32 %s175, %s176
      %s178 = smul.addr %s177, 4
      %s179 = scalar_lea.vmem %s3, %s178
      %p180 = scmp.lt.s32.totalorder %s18, 1
      %s181 = scalar_select %p180, %s18, 1
      %s182 = smul.addr %s181, 200
      %s183 = smul.addr %s182, 4
      %s184 = scalar_lea.vmem %s0, %s183
      %s185 = smul.u32 4, %s19
      %p186 = scmp.lt.s32.totalorder %s18, 1
      %s187 = scalar_select %p186, %s18, 1
      %p188 = scmp.lt.s32.totalorder %s185, 7
      %s189 = scalar_select %p188, %s185, 7
      %s190 = smul.addr %s189, 8
      %s191 = smul.addr %s187, 64
      %s192 = sadd.s32 %s190, %s191
      %s193 = smul.addr %s192, 4
      %s194 = scalar_lea.vmem %s3, %s193
      %s195 = smul.u32 4, %s19
      %s197 = smul.u32 %s19, 4
      %v198 = vld [vmem:[%s2] sm:$0x1]
      %v200 = vlaneseq
      %v201 = vshrl.u32 %v200, 7
      %v202 = vsub.s32 0, %v201
      %v203 = vrot.slane %v198, %v202
      %vm205 = vcmask 261120
      %206 = vst.msk [vmem:[#allocation2] sm:$0xff] %vm205, %v203
      %207 = vst.msk [vmem:[#allocation2 + $0x8] sm:$0xff] %vm205, %v203
      %208 = vst.msk [vmem:[#allocation2 + $0x10] sm:$0xff] %vm205, %v203
      %209 = vst.msk [vmem:[#allocation2 + $0x18] sm:$0xff] %vm205, %v203
      %210 = vst.msk [vmem:[#allocation2 + $0x20] sm:$0xff] %vm205, %v203
      %211 = vst.msk [vmem:[#allocation2 + $0x28] sm:$0xff] %vm205, %v203
      %212 = vst.msk [vmem:[#allocation2 + $0x30] sm:$0xff] %vm205, %v203
      %213 = vst.msk [vmem:[#allocation2 + $0x38] sm:$0xff] %vm205, %v203
      %214 = vst.msk [vmem:[#allocation2 + $0x40] sm:$0xff] %vm205, %v203
      %215 = vst.msk [vmem:[#allocation2 + $0x48] sm:$0xff] %vm205, %v203
      %216 = vst.msk [vmem:[#allocation2 + $0x50] sm:$0xff] %vm205, %v203
      %217 = vst.msk [vmem:[#allocation2 + $0x58] sm:$0xff] %vm205, %v203
      %218 = vst.msk [vmem:[#allocation2 + $0x60] sm:$0xff] %vm205, %v203
      %219 = vst.msk [vmem:[#allocation2 + $0x68] sm:$0xff] %vm205, %v203
      %220 = vst.msk [vmem:[#allocation2 + $0x70] sm:$0xff] %vm205, %v203
      %221 = vst.msk [vmem:[#allocation2 + $0x78] sm:$0xff] %vm205, %v203
      %222 = vst.msk [vmem:[#allocation2 + $0x80] sm:$0xff] %vm205, %v203
      %223 = vst.msk [vmem:[#allocation2 + $0x88] sm:$0xff] %vm205, %v203
      %224 = vst.msk [vmem:[#allocation2 + $0x90] sm:$0xff] %vm205, %v203
      %225 = vst.msk [vmem:[#allocation2 + $0x98] sm:$0xff] %vm205, %v203
      %226 = vst.msk [vmem:[#allocation2 + $0xa0] sm:$0xff] %vm205, %v203
      %227 = vst.msk [vmem:[#allocation2 + $0xa8] sm:$0xff] %vm205, %v203
      %228 = vst.msk [vmem:[#allocation2 + $0xb0] sm:$0xff] %vm205, %v203
      %229 = vst.msk [vmem:[#allocation2 + $0xb8] sm:$0xff] %vm205, %v203
      %230 = vst.msk [vmem:[#allocation2 + $0xc0] sm:$0xff] %vm205, %v203
      %231 = vst.msk [vmem:[#allocation2 + $0xc8] sm:$0xff] %vm205, %v203
      %232 = vst.msk [vmem:[#allocation2 + $0xd0] sm:$0xff] %vm205, %v203
      %233 = vst.msk [vmem:[#allocation2 + $0xd8] sm:$0xff] %vm205, %v203
      %234 = vst.msk [vmem:[#allocation2 + $0xe0] sm:$0xff] %vm205, %v203
      %235 = vst.msk [vmem:[#allocation2 + $0xe8] sm:$0xff] %vm205, %v203
      %236 = vst.msk [vmem:[#allocation2 + $0xf0] sm:$0xff] %vm205, %v203
      %237 = vst.msk [vmem:[#allocation2 + $0xf8] sm:$0xff] %vm205, %v203
      %s238 = smul.u32 %s197, 20
      %s239 = smul.addr %s238, 4
      %s240 = scalar_lea.vmem %s184, %s239
      %v241 = vld [vmem:[%s240] sm:$0xf]
      %v242 = vld [vmem:[%s240 + $0x4] sm:$0x1]
      %v243 = vld [vmem:[%s240 + $0x8] sm:$0xf]
      %v244 = vld [vmem:[%s240 + $0xc] sm:$0x1]
      %v245 = vld [vmem:[%s240 + $0x10] sm:$0xf]
      %v246 = vld [vmem:[%s240 + $0x14] sm:$0x1]
      %v247 = vld [vmem:[%s240 + $0x18] sm:$0xf]
      %v248 = vld [vmem:[%s240 + $0x1c] sm:$0x1]
      %v249 = vld [vmem:[%s240 + $0x20] sm:$0xf]
      %v250 = vld [vmem:[%s240 + $0x24] sm:$0x1]
      %v251 = vld [vmem:[%s240 + $0x28] sm:$0xf]
      %v252 = vld [vmem:[%s240 + $0x2c] sm:$0x1]
      %v253 = vld [vmem:[%s240 + $0x30] sm:$0xf]
      %v254 = vld [vmem:[%s240 + $0x34] sm:$0x1]
      %v255 = vld [vmem:[%s240 + $0x38] sm:$0xf]
      %v256 = vld [vmem:[%s240 + $0x3c] sm:$0x1]
      %v257 = vld [vmem:[%s240 + $0x40] sm:$0xf]
      %v258 = vld [vmem:[%s240 + $0x44] sm:$0x1]
      %v259 = vld [vmem:[%s240 + $0x48] sm:$0xf]
      %v260 = vld [vmem:[%s240 + $0x4c] sm:$0x1]
      %v261 = vld [vmem:[%s240 + $0x50] sm:$0xf]
      %v262 = vld [vmem:[%s240 + $0x54] sm:$0x1]
      %v263 = vld [vmem:[%s240 + $0x58] sm:$0xf]
      %v264 = vld [vmem:[%s240 + $0x5c] sm:$0x1]
      %v265 = vld [vmem:[%s240 + $0x60] sm:$0xf]
      %v266 = vld [vmem:[%s240 + $0x64] sm:$0x1]
      %v267 = vld [vmem:[%s240 + $0x68] sm:$0xf]
      %v268 = vld [vmem:[%s240 + $0x6c] sm:$0x1]
      %v269 = vld [vmem:[%s240 + $0x70] sm:$0xf]
      %v270 = vld [vmem:[%s240 + $0x74] sm:$0x1]
      %v271 = vld [vmem:[%s240 + $0x78] sm:$0xf]
      %v272 = vld [vmem:[%s240 + $0x7c] sm:$0x1]
      %v273 = vld [vmem:[%s240 + $0x80] sm:$0xf]
      %v274 = vld [vmem:[%s240 + $0x84] sm:$0x1]
      %v275 = vld [vmem:[%s240 + $0x88] sm:$0xf]
      %v276 = vld [vmem:[%s240 + $0x8c] sm:$0x1]
      %v277 = vld [vmem:[%s240 + $0x90] sm:$0xf]
      %v278 = vld [vmem:[%s240 + $0x94] sm:$0x1]
      %v279 = vld [vmem:[%s240 + $0x98] sm:$0xf]
      %v280 = vld [vmem:[%s240 + $0x9c] sm:$0x1]
      %v281 = vld [vmem:[%s240 + $0xa0] sm:$0xf]
      %v282 = vld [vmem:[%s240 + $0xa4] sm:$0x1]
      %v283 = vld [vmem:[%s240 + $0xa8] sm:$0xf]
      %v284 = vld [vmem:[%s240 + $0xac] sm:$0x1]
      %v285 = vld [vmem:[%s240 + $0xb0] sm:$0xf]
      %v286 = vld [vmem:[%s240 + $0xb4] sm:$0x1]
      %v287 = vld [vmem:[%s240 + $0xb8] sm:$0xf]
      %v288 = vld [vmem:[%s240 + $0xbc] sm:$0x1]
      %v289 = vld [vmem:[%s240 + $0xc0] sm:$0xf]
      %v290 = vld [vmem:[%s240 + $0xc4] sm:$0x1]
      %v291 = vld [vmem:[%s240 + $0xc8] sm:$0xf]
      %v292 = vld [vmem:[%s240 + $0xcc] sm:$0x1]
      %v293 = vld [vmem:[%s240 + $0xd0] sm:$0xf]
      %v294 = vld [vmem:[%s240 + $0xd4] sm:$0x1]
      %v295 = vld [vmem:[%s240 + $0xd8] sm:$0xf]
      %v296 = vld [vmem:[%s240 + $0xdc] sm:$0x1]
      %v297 = vld [vmem:[%s240 + $0xe0] sm:$0xf]
      %v298 = vld [vmem:[%s240 + $0xe4] sm:$0x1]
      %v299 = vld [vmem:[%s240 + $0xe8] sm:$0xf]
      %v300 = vld [vmem:[%s240 + $0xec] sm:$0x1]
      %v301 = vld [vmem:[%s240 + $0xf0] sm:$0xf]
      %v302 = vld [vmem:[%s240 + $0xf4] sm:$0x1]
      %v303 = vld [vmem:[%s240 + $0xf8] sm:$0xf]
      %v304 = vld [vmem:[%s240 + $0xfc] sm:$0x1]
      %v305 = vld [vmem:[%s240 + $0x100] sm:$0xf]
      %v306 = vld [vmem:[%s240 + $0x104] sm:$0x1]
      %v307 = vld [vmem:[%s240 + $0x108] sm:$0xf]
      %v308 = vld [vmem:[%s240 + $0x10c] sm:$0x1]
      %v309 = vld [vmem:[%s240 + $0x110] sm:$0xf]
      %v310 = vld [vmem:[%s240 + $0x114] sm:$0x1]
      %v311 = vld [vmem:[%s240 + $0x118] sm:$0xf]
      %v312 = vld [vmem:[%s240 + $0x11c] sm:$0x1]
      %v313 = vld [vmem:[%s240 + $0x120] sm:$0xf]
      %v314 = vld [vmem:[%s240 + $0x124] sm:$0x1]
      %v315 = vld [vmem:[%s240 + $0x128] sm:$0xf]
      %v316 = vld [vmem:[%s240 + $0x12c] sm:$0x1]
      %v317 = vld [vmem:[%s240 + $0x130] sm:$0xf]
      %v318 = vld [vmem:[%s240 + $0x134] sm:$0x1]
      %v319 = vld [vmem:[%s240 + $0x138] sm:$0xf]
      %v320 = vld [vmem:[%s240 + $0x13c] sm:$0x1]
      %v353 = vunpack.c.l.b16 %v241
      %v354 = vunpack.c.l.b16 %v243
      %v355 = vunpack.c.l.b16 %v245
      %v356 = vunpack.c.l.b16 %v247
      %v357 = vunpack.c.l.b16 %v249
      %v358 = vunpack.c.l.b16 %v251
      %v359 = vunpack.c.l.b16 %v253
      %v360 = vunpack.c.l.b16 %v255
      %v361 = vunpack.c.l.b16 %v261
      %v362 = vunpack.c.l.b16 %v263
      %v363 = vunpack.c.l.b16 %v265
      %v364 = vunpack.c.l.b16 %v267
      %v365 = vunpack.c.l.b16 %v269
      %v366 = vunpack.c.l.b16 %v271
      %v367 = vunpack.c.l.b16 %v273
      %v368 = vunpack.c.l.b16 %v275
      %v369 = vunpack.c.l.b16 %v281
      %v370 = vunpack.c.l.b16 %v283
      %v371 = vunpack.c.l.b16 %v285
      %v372 = vunpack.c.l.b16 %v287
      %v373 = vunpack.c.l.b16 %v289
      %v374 = vunpack.c.l.b16 %v291
      %v375 = vunpack.c.l.b16 %v293
      %v376 = vunpack.c.l.b16 %v295
      %v377 = vunpack.c.l.b16 %v301
      %v378 = vunpack.c.l.b16 %v303
      %v379 = vunpack.c.l.b16 %v305
      %v380 = vunpack.c.l.b16 %v307
      %v381 = vunpack.c.l.b16 %v309
      %v382 = vunpack.c.l.b16 %v311
      %v383 = vunpack.c.l.b16 %v313
      %v384 = vunpack.c.l.b16 %v315
      %v385 = vpack.c.b16 %v354, %v353
      %v386 = vpack.c.b16 %v356, %v355
      %v387 = vpack.c.b16 %v358, %v357
      %v388 = vpack.c.b16 %v360, %v359
      %v389 = vpack.c.b16 %v362, %v361
      %v390 = vpack.c.b16 %v364, %v363
      %v391 = vpack.c.b16 %v366, %v365
      %v392 = vpack.c.b16 %v368, %v367
      %v393 = vpack.c.b16 %v370, %v369
      %v394 = vpack.c.b16 %v372, %v371
      %v395 = vpack.c.b16 %v374, %v373
      %v396 = vpack.c.b16 %v376, %v375
      %v397 = vpack.c.b16 %v378, %v377
      %v398 = vpack.c.b16 %v380, %v379
      %v399 = vpack.c.b16 %v382, %v381
      %v400 = vpack.c.b16 %v384, %v383
      %vm417 = vcmask 31744
      %418 = vst.msk [vmem:[#allocation3] sm:$0xff] %vm417, %v385
      %419 = vst.msk [vmem:[#allocation3 + $0x8] sm:$0xff] %vm417, %v386
      %420 = vst.msk [vmem:[#allocation3 + $0x10] sm:$0xff] %vm417, %v387
      %421 = vst.msk [vmem:[#allocation3 + $0x18] sm:$0xff] %vm417, %v388
      %422 = vst.msk [vmem:[#allocation3 + $0x20] sm:$0xff] %vm417, %v389
      %423 = vst.msk [vmem:[#allocation3 + $0x28] sm:$0xff] %vm417, %v390
      %424 = vst.msk [vmem:[#allocation3 + $0x30] sm:$0xff] %vm417, %v391
      %425 = vst.msk [vmem:[#allocation3 + $0x38] sm:$0xff] %vm417, %v392
      %426 = vst.msk [vmem:[#allocation3 + $0x40] sm:$0xff] %vm417, %v393
      %427 = vst.msk [vmem:[#allocation3 + $0x48] sm:$0xff] %vm417, %v394
      %428 = vst.msk [vmem:[#allocation3 + $0x50] sm:$0xff] %vm417, %v395
      %429 = vst.msk [vmem:[#allocation3 + $0x58] sm:$0xff] %vm417, %v396
      %430 = vst.msk [vmem:[#allocation3 + $0x60] sm:$0xff] %vm417, %v397
      %431 = vst.msk [vmem:[#allocation3 + $0x68] sm:$0xff] %vm417, %v398
      %432 = vst.msk [vmem:[#allocation3 + $0x70] sm:$0xff] %vm417, %v399
      %433 = vst.msk [vmem:[#allocation3 + $0x78] sm:$0xff] %vm417, %v400
      %vm434 = vsmask.f32 3328
      %vm435 = vsmask.f32 7440
      %vm436 = vmor %vm434, %vm435
      %v438 = vshrl.u32 %v241, 16
      %v440 = vrot.slane %v438, 4
      %v441 = vshll.u32 %v241, 16
      %v443 = vrot.slane %v441, 5
      %v444 = vor.u32 %v440, %v443
      %v445 = vrot.slane %v444, 4
      %v447 = vshll.u32 %v242, 16
      %v449 = vrot.slane %v447, 5
      %v450 = vsel %vm436, %v445, %v449
      %v452 = vshrl.u32 %v243, 16
      %v454 = vrot.slane %v452, 4
      %v455 = vshll.u32 %v243, 16
      %v457 = vrot.slane %v455, 5
      %v458 = vor.u32 %v454, %v457
      %v459 = vrot.slane %v458, 4
      %v461 = vshll.u32 %v244, 16
      %v463 = vrot.slane %v461, 5
      %v464 = vsel %vm436, %v459, %v463
      %v466 = vshrl.u32 %v245, 16
      %v468 = vrot.slane %v466, 4
      %v469 = vshll.u32 %v245, 16
      %v471 = vrot.slane %v469, 5
      %v472 = vor.u32 %v468, %v471
      %v473 = vrot.slane %v472, 4
      %v475 = vshll.u32 %v246, 16
      %v477 = vrot.slane %v475, 5
      %v478 = vsel %vm436, %v473, %v477
      %v480 = vshrl.u32 %v247, 16
      %v482 = vrot.slane %v480, 4
      %v483 = vshll.u32 %v247, 16
      %v485 = vrot.slane %v483, 5
      %v486 = vor.u32 %v482, %v485
      %v487 = vrot.slane %v486, 4
      %v489 = vshll.u32 %v248, 16
      %v491 = vrot.slane %v489, 5
      %v492 = vsel %vm436, %v487, %v491
      %v494 = vshrl.u32 %v249, 16
      %v496 = vrot.slane %v494, 4
      %v497 = vshll.u32 %v249, 16
      %v499 = vrot.slane %v497, 5
      %v500 = vor.u32 %v496, %v499
      %v501 = vrot.slane %v500, 4
      %v503 = vshll.u32 %v250, 16
      %v505 = vrot.slane %v503, 5
      %v506 = vsel %vm436, %v501, %v505
      %v508 = vshrl.u32 %v251, 16
      %v510 = vrot.slane %v508, 4
      %v511 = vshll.u32 %v251, 16
      %v513 = vrot.slane %v511, 5
      %v514 = vor.u32 %v510, %v513
      %v515 = vrot.slane %v514, 4
      %v517 = vshll.u32 %v252, 16
      %v519 = vrot.slane %v517, 5
      %v520 = vsel %vm436, %v515, %v519
      %v522 = vshrl.u32 %v253, 16
      %v524 = vrot.slane %v522, 4
      %v525 = vshll.u32 %v253, 16
      %v527 = vrot.slane %v525, 5
      %v528 = vor.u32 %v524, %v527
      %v529 = vrot.slane %v528, 4
      %v531 = vshll.u32 %v254, 16
      %v533 = vrot.slane %v531, 5
      %v534 = vsel %vm436, %v529, %v533
      %v536 = vshrl.u32 %v255, 16
      %v538 = vrot.slane %v536, 4
      %v539 = vshll.u32 %v255, 16
      %v541 = vrot.slane %v539, 5
      %v542 = vor.u32 %v538, %v541
      %v543 = vrot.slane %v542, 4
      %v545 = vshll.u32 %v256, 16
      %v547 = vrot.slane %v545, 5
      %v548 = vsel %vm436, %v543, %v547
      %v550 = vshrl.u32 %v261, 16
      %v552 = vrot.slane %v550, 4
      %v553 = vshll.u32 %v261, 16
      %v555 = vrot.slane %v553, 5
      %v556 = vor.u32 %v552, %v555
      %v557 = vrot.slane %v556, 4
      %v559 = vshll.u32 %v262, 16
      %v561 = vrot.slane %v559, 5
      %v562 = vsel %vm436, %v557, %v561
      %v564 = vshrl.u32 %v263, 16
      %v566 = vrot.slane %v564, 4
      %v567 = vshll.u32 %v263, 16
      %v569 = vrot.slane %v567, 5
      %v570 = vor.u32 %v566, %v569
      %v571 = vrot.slane %v570, 4
      %v573 = vshll.u32 %v264, 16
      %v575 = vrot.slane %v573, 5
      %v576 = vsel %vm436, %v571, %v575
      %v578 = vshrl.u32 %v265, 16
      %v580 = vrot.slane %v578, 4
      %v581 = vshll.u32 %v265, 16
      %v583 = vrot.slane %v581, 5
      %v584 = vor.u32 %v580, %v583
      %v585 = vrot.slane %v584, 4
      %v587 = vshll.u32 %v266, 16
      %v589 = vrot.slane %v587, 5
      %v590 = vsel %vm436, %v585, %v589
      %v592 = vshrl.u32 %v267, 16
      %v594 = vrot.slane %v592, 4
      %v595 = vshll.u32 %v267, 16
      %v597 = vrot.slane %v595, 5
      %v598 = vor.u32 %v594, %v597
      %v599 = vrot.slane %v598, 4
      %v601 = vshll.u32 %v268, 16
      %v603 = vrot.slane %v601, 5
      %v604 = vsel %vm436, %v599, %v603
      %v606 = vshrl.u32 %v269, 16
      %v608 = vrot.slane %v606, 4
      %v609 = vshll.u32 %v269, 16
      %v611 = vrot.slane %v609, 5
      %v612 = vor.u32 %v608, %v611
      %v613 = vrot.slane %v612, 4
      %v615 = vshll.u32 %v270, 16
      %v617 = vrot.slane %v615, 5
      %v618 = vsel %vm436, %v613, %v617
      %v620 = vshrl.u32 %v271, 16
      %v622 = vrot.slane %v620, 4
      %v623 = vshll.u32 %v271, 16
      %v625 = vrot.slane %v623, 5
      %v626 = vor.u32 %v622, %v625
      %v627 = vrot.slane %v626, 4
      %v629 = vshll.u32 %v272, 16
      %v631 = vrot.slane %v629, 5
      %v632 = vsel %vm436, %v627, %v631
      %v634 = vshrl.u32 %v273, 16
      %v636 = vrot.slane %v634, 4
      %v637 = vshll.u32 %v273, 16
      %v639 = vrot.slane %v637, 5
      %v640 = vor.u32 %v636, %v639
      %v641 = vrot.slane %v640, 4
      %v643 = vshll.u32 %v274, 16
      %v645 = vrot.slane %v643, 5
      %v646 = vsel %vm436, %v641, %v645
      %v648 = vshrl.u32 %v275, 16
      %v650 = vrot.slane %v648, 4
      %v651 = vshll.u32 %v275, 16
      %v653 = vrot.slane %v651, 5
      %v654 = vor.u32 %v650, %v653
      %v655 = vrot.slane %v654, 4
      %v657 = vshll.u32 %v276, 16
      %v659 = vrot.slane %v657, 5
      %v660 = vsel %vm436, %v655, %v659
      %v662 = vshrl.u32 %v281, 16
      %v664 = vrot.slane %v662, 4
      %v665 = vshll.u32 %v281, 16
      %v667 = vrot.slane %v665, 5
      %v668 = vor.u32 %v664, %v667
      %v669 = vrot.slane %v668, 4
      %v671 = vshll.u32 %v282, 16
      %v673 = vrot.slane %v671, 5
      %v674 = vsel %vm436, %v669, %v673
      %v676 = vshrl.u32 %v283, 16
      %v678 = vrot.slane %v676, 4
      %v679 = vshll.u32 %v283, 16
      %v681 = vrot.slane %v679, 5
      %v682 = vor.u32 %v678, %v681
      %v683 = vrot.slane %v682, 4
      %v685 = vshll.u32 %v284, 16
      %v687 = vrot.slane %v685, 5
      %v688 = vsel %vm436, %v683, %v687
      %v690 = vshrl.u32 %v285, 16
      %v692 = vrot.slane %v690, 4
      %v693 = vshll.u32 %v285, 16
      %v695 = vrot.slane %v693, 5
      %v696 = vor.u32 %v692, %v695
      %v697 = vrot.slane %v696, 4
      %v699 = vshll.u32 %v286, 16
      %v701 = vrot.slane %v699, 5
      %v702 = vsel %vm436, %v697, %v701
      %v704 = vshrl.u32 %v287, 16
      %v706 = vrot.slane %v704, 4
      %v707 = vshll.u32 %v287, 16
      %v709 = vrot.slane %v707, 5
      %v710 = vor.u32 %v706, %v709
      %v711 = vrot.slane %v710, 4
      %v713 = vshll.u32 %v288, 16
      %v715 = vrot.slane %v713, 5
      %v716 = vsel %vm436, %v711, %v715
      %v718 = vshrl.u32 %v289, 16
      %v720 = vrot.slane %v718, 4
      %v721 = vshll.u32 %v289, 16
      %v723 = vrot.slane %v721, 5
      %v724 = vor.u32 %v720, %v723
      %v725 = vrot.slane %v724, 4
      %v727 = vshll.u32 %v290, 16
      %v729 = vrot.slane %v727, 5
      %v730 = vsel %vm436, %v725, %v729
      %v732 = vshrl.u32 %v291, 16
      %v734 = vrot.slane %v732, 4
      %v735 = vshll.u32 %v291, 16
      %v737 = vrot.slane %v735, 5
      %v738 = vor.u32 %v734, %v737
      %v739 = vrot.slane %v738, 4
      %v741 = vshll.u32 %v292, 16
      %v743 = vrot.slane %v741, 5
      %v744 = vsel %vm436, %v739, %v743
      %v746 = vshrl.u32 %v293, 16
      %v748 = vrot.slane %v746, 4
      %v749 = vshll.u32 %v293, 16
      %v751 = vrot.slane %v749, 5
      %v752 = vor.u32 %v748, %v751
      %v753 = vrot.slane %v752, 4
      %v755 = vshll.u32 %v294, 16
      %v757 = vrot.slane %v755, 5
      %v758 = vsel %vm436, %v753, %v757
      %v760 = vshrl.u32 %v295, 16
      %v762 = vrot.slane %v760, 4
      %v763 = vshll.u32 %v295, 16
      %v765 = vrot.slane %v763, 5
      %v766 = vor.u32 %v762, %v765
      %v767 = vrot.slane %v766, 4
      %v769 = vshll.u32 %v296, 16
      %v771 = vrot.slane %v769, 5
      %v772 = vsel %vm436, %v767, %v771
      %v774 = vshrl.u32 %v301, 16
      %v776 = vrot.slane %v774, 4
      %v777 = vshll.u32 %v301, 16
      %v779 = vrot.slane %v777, 5
      %v780 = vor.u32 %v776, %v779
      %v781 = vrot.slane %v780, 4
      %v783 = vshll.u32 %v302, 16
      %v785 = vrot.slane %v783, 5
      %v786 = vsel %vm436, %v781, %v785
      %v788 = vshrl.u32 %v303, 16
      %v790 = vrot.slane %v788, 4
      %v791 = vshll.u32 %v303, 16
      %v793 = vrot.slane %v791, 5
      %v794 = vor.u32 %v790, %v793
      %v795 = vrot.slane %v794, 4
      %v797 = vshll.u32 %v304, 16
      %v799 = vrot.slane %v797, 5
      %v800 = vsel %vm436, %v795, %v799
      %v802 = vshrl.u32 %v305, 16
      %v804 = vrot.slane %v802, 4
      %v805 = vshll.u32 %v305, 16
      %v807 = vrot.slane %v805, 5
      %v808 = vor.u32 %v804, %v807
      %v809 = vrot.slane %v808, 4
      %v811 = vshll.u32 %v306, 16
      %v813 = vrot.slane %v811, 5
      %v814 = vsel %vm436, %v809, %v813
      %v816 = vshrl.u32 %v307, 16
      %v818 = vrot.slane %v816, 4
      %v819 = vshll.u32 %v307, 16
      %v821 = vrot.slane %v819, 5
      %v822 = vor.u32 %v818, %v821
      %v823 = vrot.slane %v822, 4
      %v825 = vshll.u32 %v308, 16
      %v827 = vrot.slane %v825, 5
      %v828 = vsel %vm436, %v823, %v827
      %v830 = vshrl.u32 %v309, 16
      %v832 = vrot.slane %v830, 4
      %v833 = vshll.u32 %v309, 16
      %v835 = vrot.slane %v833, 5
      %v836 = vor.u32 %v832, %v835
      %v837 = vrot.slane %v836, 4
      %v839 = vshll.u32 %v310, 16
      %v841 = vrot.slane %v839, 5
      %v842 = vsel %vm436, %v837, %v841
      %v844 = vshrl.u32 %v311, 16
      %v846 = vrot.slane %v844, 4
      %v847 = vshll.u32 %v311, 16
      %v849 = vrot.slane %v847, 5
      %v850 = vor.u32 %v846, %v849
      %v851 = vrot.slane %v850, 4
      %v853 = vshll.u32 %v312, 16
      %v855 = vrot.slane %v853, 5
      %v856 = vsel %vm436, %v851, %v855
      %v858 = vshrl.u32 %v313, 16
      %v860 = vrot.slane %v858, 4
      %v861 = vshll.u32 %v313, 16
      %v863 = vrot.slane %v861, 5
      %v864 = vor.u32 %v860, %v863
      %v865 = vrot.slane %v864, 4
      %v867 = vshll.u32 %v314, 16
      %v869 = vrot.slane %v867, 5
      %v870 = vsel %vm436, %v865, %v869
      %v872 = vshrl.u32 %v315, 16
      %v874 = vrot.slane %v872, 4
      %v875 = vshll.u32 %v315, 16
      %v877 = vrot.slane %v875, 5
      %v878 = vor.u32 %v874, %v877
      %v879 = vrot.slane %v878, 4
      %v881 = vshll.u32 %v316, 16
      %v883 = vrot.slane %v881, 5
      %v884 = vsel %vm436, %v879, %v883
      %v885 = vunpack.c.l.b16 %v450
      %v886 = vunpack.c.l.b16 %v464
      %v887 = vunpack.c.l.b16 %v478
      %v888 = vunpack.c.l.b16 %v492
      %v889 = vunpack.c.l.b16 %v506
      %v890 = vunpack.c.l.b16 %v520
      %v891 = vunpack.c.l.b16 %v534
      %v892 = vunpack.c.l.b16 %v548
      %v893 = vunpack.c.l.b16 %v562
      %v894 = vunpack.c.l.b16 %v576
      %v895 = vunpack.c.l.b16 %v590
      %v896 = vunpack.c.l.b16 %v604
      %v897 = vunpack.c.l.b16 %v618
      %v898 = vunpack.c.l.b16 %v632
      %v899 = vunpack.c.l.b16 %v646
      %v900 = vunpack.c.l.b16 %v660
      %v901 = vunpack.c.l.b16 %v674
      %v902 = vunpack.c.l.b16 %v688
      %v903 = vunpack.c.l.b16 %v702
      %v904 = vunpack.c.l.b16 %v716
      %v905 = vunpack.c.l.b16 %v730
      %v906 = vunpack.c.l.b16 %v744
      %v907 = vunpack.c.l.b16 %v758
      %v908 = vunpack.c.l.b16 %v772
      %v909 = vunpack.c.l.b16 %v786
      %v910 = vunpack.c.l.b16 %v800
      %v911 = vunpack.c.l.b16 %v814
      %v912 = vunpack.c.l.b16 %v828
      %v913 = vunpack.c.l.b16 %v842
      %v914 = vunpack.c.l.b16 %v856
      %v915 = vunpack.c.l.b16 %v870
      %v916 = vunpack.c.l.b16 %v884
      %v917 = vpack.c.b16 %v886, %v885
      %v918 = vpack.c.b16 %v888, %v887
      %v919 = vpack.c.b16 %v890, %v889
      %v920 = vpack.c.b16 %v892, %v891
      %v921 = vpack.c.b16 %v894, %v893
      %v922 = vpack.c.b16 %v896, %v895
      %v923 = vpack.c.b16 %v898, %v897
      %v924 = vpack.c.b16 %v900, %v899
      %v925 = vpack.c.b16 %v902, %v901
      %v926 = vpack.c.b16 %v904, %v903
      %v927 = vpack.c.b16 %v906, %v905
      %v928 = vpack.c.b16 %v908, %v907
      %v929 = vpack.c.b16 %v910, %v909
      %v930 = vpack.c.b16 %v912, %v911
      %v931 = vpack.c.b16 %v914, %v913
      %v932 = vpack.c.b16 %v916, %v915
      %933 = vrot.lane.b32.xlu0 %v917, 4
      %v934 = vpop.permute.xlu0 %933
      %935 = vrot.lane.b32.xlu0 %v918, 4
      %v936 = vpop.permute.xlu0 %935
      %937 = vrot.lane.b32.xlu0 %v919, 4
      %v938 = vpop.permute.xlu0 %937
      %939 = vrot.lane.b32.xlu0 %v920, 4
      %v940 = vpop.permute.xlu0 %939
      %941 = vrot.lane.b32.xlu0 %v921, 4
      %v942 = vpop.permute.xlu0 %941
      %943 = vrot.lane.b32.xlu0 %v922, 4
      %v944 = vpop.permute.xlu0 %943
      %945 = vrot.lane.b32.xlu0 %v923, 4
      %v946 = vpop.permute.xlu0 %945
      %947 = vrot.lane.b32.xlu0 %v924, 4
      %v948 = vpop.permute.xlu0 %947
      %949 = vrot.lane.b32.xlu0 %v925, 4
      %v950 = vpop.permute.xlu0 %949
      %951 = vrot.lane.b32.xlu0 %v926, 4
      %v952 = vpop.permute.xlu0 %951
      %953 = vrot.lane.b32.xlu0 %v927, 4
      %v954 = vpop.permute.xlu0 %953
      %955 = vrot.lane.b32.xlu0 %v928, 4
      %v956 = vpop.permute.xlu0 %955
      %957 = vrot.lane.b32.xlu0 %v929, 4
      %v958 = vpop.permute.xlu0 %957
      %959 = vrot.lane.b32.xlu0 %v930, 4
      %v960 = vpop.permute.xlu0 %959
      %961 = vrot.lane.b32.xlu0 %v931, 4
      %v962 = vpop.permute.xlu0 %961
      %963 = vrot.lane.b32.xlu0 %v932, 4
      %v964 = vpop.permute.xlu0 %963
      %vm981 = vcmask 64544
      %982 = vst.msk [vmem:[#allocation3] sm:$0xff] %vm981, %v934
      %983 = vst.msk [vmem:[#allocation3 + $0x8] sm:$0xff] %vm981, %v936
      %984 = vst.msk [vmem:[#allocation3 + $0x10] sm:$0xff] %vm981, %v938
      %985 = vst.msk [vmem:[#allocation3 + $0x18] sm:$0xff] %vm981, %v940
      %986 = vst.msk [vmem:[#allocation3 + $0x20] sm:$0xff] %vm981, %v942
      %987 = vst.msk [vmem:[#allocation3 + $0x28] sm:$0xff] %vm981, %v944
      %988 = vst.msk [vmem:[#allocation3 + $0x30] sm:$0xff] %vm981, %v946
      %989 = vst.msk [vmem:[#allocation3 + $0x38] sm:$0xff] %vm981, %v948
      %990 = vst.msk [vmem:[#allocation3 + $0x40] sm:$0xff] %vm981, %v950
      %991 = vst.msk [vmem:[#allocation3 + $0x48] sm:$0xff] %vm981, %v952
      %992 = vst.msk [vmem:[#allocation3 + $0x50] sm:$0xff] %vm981, %v954
      %993 = vst.msk [vmem:[#allocation3 + $0x58] sm:$0xff] %vm981, %v956
      %994 = vst.msk [vmem:[#allocation3 + $0x60] sm:$0xff] %vm981, %v958
      %995 = vst.msk [vmem:[#allocation3 + $0x68] sm:$0xff] %vm981, %v960
      %996 = vst.msk [vmem:[#allocation3 + $0x70] sm:$0xff] %vm981, %v962
      %997 = vst.msk [vmem:[#allocation3 + $0x78] sm:$0xff] %vm981, %v964
      %vm1030 = vcmask 1042432
      %vm1031 = vcmask 1046532
      %vm1032 = vmor %vm1030, %vm1031
      %v1033 = vrot.slane %v241, 5
      %v1034 = vrot.slane %v1033, 4
      %v1035 = vrot.slane %v242, 5
      %v1036 = vsel %vm1032, %v1034, %v1035
      %v1037 = vrot.slane %v243, 5
      %v1038 = vrot.slane %v1037, 4
      %v1039 = vrot.slane %v244, 5
      %v1040 = vsel %vm1032, %v1038, %v1039
      %v1041 = vrot.slane %v245, 5
      %v1042 = vrot.slane %v1041, 4
      %v1043 = vrot.slane %v246, 5
      %v1044 = vsel %vm1032, %v1042, %v1043
      %v1045 = vrot.slane %v247, 5
      %v1046 = vrot.slane %v1045, 4
      %v1047 = vrot.slane %v248, 5
      %v1048 = vsel %vm1032, %v1046, %v1047
      %v1049 = vrot.slane %v249, 5
      %v1050 = vrot.slane %v1049, 4
      %v1051 = vrot.slane %v250, 5
      %v1052 = vsel %vm1032, %v1050, %v1051
      %v1053 = vrot.slane %v251, 5
      %v1054 = vrot.slane %v1053, 4
      %v1055 = vrot.slane %v252, 5
      %v1056 = vsel %vm1032, %v1054, %v1055
      %v1057 = vrot.slane %v253, 5
      %v1058 = vrot.slane %v1057, 4
      %v1059 = vrot.slane %v254, 5
      %v1060 = vsel %vm1032, %v1058, %v1059
      %v1061 = vrot.slane %v255, 5
      %v1062 = vrot.slane %v1061, 4
      %v1063 = vrot.slane %v256, 5
      %v1064 = vsel %vm1032, %v1062, %v1063
      %v1065 = vrot.slane %v261, 5
      %v1066 = vrot.slane %v1065, 4
      %v1067 = vrot.slane %v262, 5
      %v1068 = vsel %vm1032, %v1066, %v1067
      %v1069 = vrot.slane %v263, 5
      %v1070 = vrot.slane %v1069, 4
      %v1071 = vrot.slane %v264, 5
      %v1072 = vsel %vm1032, %v1070, %v1071
      %v1073 = vrot.slane %v265, 5
      %v1074 = vrot.slane %v1073, 4
      %v1075 = vrot.slane %v266, 5
      %v1076 = vsel %vm1032, %v1074, %v1075
      %v1077 = vrot.slane %v267, 5
      %v1078 = vrot.slane %v1077, 4
      %v1079 = vrot.slane %v268, 5
      %v1080 = vsel %vm1032, %v1078, %v1079
      %v1081 = vrot.slane %v269, 5
      %v1082 = vrot.slane %v1081, 4
      %v1083 = vrot.slane %v270, 5
      %v1084 = vsel %vm1032, %v1082, %v1083
      %v1085 = vrot.slane %v271, 5
      %v1086 = vrot.slane %v1085, 4
      %v1087 = vrot.slane %v272, 5
      %v1088 = vsel %vm1032, %v1086, %v1087
      %v1089 = vrot.slane %v273, 5
      %v1090 = vrot.slane %v1089, 4
      %v1091 = vrot.slane %v274, 5
      %v1092 = vsel %vm1032, %v1090, %v1091
      %v1093 = vrot.slane %v275, 5
      %v1094 = vrot.slane %v1093, 4
      %v1095 = vrot.slane %v276, 5
      %v1096 = vsel %vm1032, %v1094, %v1095
      %v1097 = vrot.slane %v281, 5
      %v1098 = vrot.slane %v1097, 4
      %v1099 = vrot.slane %v282, 5
      %v1100 = vsel %vm1032, %v1098, %v1099
      %v1101 = vrot.slane %v283, 5
      %v1102 = vrot.slane %v1101, 4
      %v1103 = vrot.slane %v284, 5
      %v1104 = vsel %vm1032, %v1102, %v1103
      %v1105 = vrot.slane %v285, 5
      %v1106 = vrot.slane %v1105, 4
      %v1107 = vrot.slane %v286, 5
      %v1108 = vsel %vm1032, %v1106, %v1107
      %v1109 = vrot.slane %v287, 5
      %v1110 = vrot.slane %v1109, 4
      %v1111 = vrot.slane %v288, 5
      %v1112 = vsel %vm1032, %v1110, %v1111
      %v1113 = vrot.slane %v289, 5
      %v1114 = vrot.slane %v1113, 4
      %v1115 = vrot.slane %v290, 5
      %v1116 = vsel %vm1032, %v1114, %v1115
      %v1117 = vrot.slane %v291, 5
      %v1118 = vrot.slane %v1117, 4
      %v1119 = vrot.slane %v292, 5
      %v1120 = vsel %vm1032, %v1118, %v1119
      %v1121 = vrot.slane %v293, 5
      %v1122 = vrot.slane %v1121, 4
      %v1123 = vrot.slane %v294, 5
      %v1124 = vsel %vm1032, %v1122, %v1123
      %v1125 = vrot.slane %v295, 5
      %v1126 = vrot.slane %v1125, 4
      %v1127 = vrot.slane %v296, 5
      %v1128 = vsel %vm1032, %v1126, %v1127
      %v1129 = vrot.slane %v301, 5
      %v1130 = vrot.slane %v1129, 4
      %v1131 = vrot.slane %v302, 5
      %v1132 = vsel %vm1032, %v1130, %v1131
      %v1133 = vrot.slane %v303, 5
      %v1134 = vrot.slane %v1133, 4
      %v1135 = vrot.slane %v304, 5
      %v1136 = vsel %vm1032, %v1134, %v1135
      %v1137 = vrot.slane %v305, 5
      %v1138 = vrot.slane %v1137, 4
      %v1139 = vrot.slane %v306, 5
      %v1140 = vsel %vm1032, %v1138, %v1139
      %v1141 = vrot.slane %v307, 5
      %v1142 = vrot.slane %v1141, 4
      %v1143 = vrot.slane %v308, 5
      %v1144 = vsel %vm1032, %v1142, %v1143
      %v1145 = vrot.slane %v309, 5
      %v1146 = vrot.slane %v1145, 4
      %v1147 = vrot.slane %v310, 5
      %v1148 = vsel %vm1032, %v1146, %v1147
      %v1149 = vrot.slane %v311, 5
      %v1150 = vrot.slane %v1149, 4
      %v1151 = vrot.slane %v312, 5
      %v1152 = vsel %vm1032, %v1150, %v1151
      %v1153 = vrot.slane %v313, 5
      %v1154 = vrot.slane %v1153, 4
      %v1155 = vrot.slane %v314, 5
      %v1156 = vsel %vm1032, %v1154, %v1155
      %v1157 = vrot.slane %v315, 5
      %v1158 = vrot.slane %v1157, 4
      %v1159 = vrot.slane %v316, 5
      %v1160 = vsel %vm1032, %v1158, %v1159
      %v1161 = vunpack.c.l.b16 %v1036
      %v1162 = vunpack.c.l.b16 %v1040
      %v1163 = vunpack.c.l.b16 %v1044
      %v1164 = vunpack.c.l.b16 %v1048
      %v1165 = vunpack.c.l.b16 %v1052
      %v1166 = vunpack.c.l.b16 %v1056
      %v1167 = vunpack.c.l.b16 %v1060
      %v1168 = vunpack.c.l.b16 %v1064
      %v1169 = vunpack.c.l.b16 %v1068
      %v1170 = vunpack.c.l.b16 %v1072
      %v1171 = vunpack.c.l.b16 %v1076
      %v1172 = vunpack.c.l.b16 %v1080
      %v1173 = vunpack.c.l.b16 %v1084
      %v1174 = vunpack.c.l.b16 %v1088
      %v1175 = vunpack.c.l.b16 %v1092
      %v1176 = vunpack.c.l.b16 %v1096
      %v1177 = vunpack.c.l.b16 %v1100
      %v1178 = vunpack.c.l.b16 %v1104
      %v1179 = vunpack.c.l.b16 %v1108
      %v1180 = vunpack.c.l.b16 %v1112
      %v1181 = vunpack.c.l.b16 %v1116
      %v1182 = vunpack.c.l.b16 %v1120
      %v1183 = vunpack.c.l.b16 %v1124
      %v1184 = vunpack.c.l.b16 %v1128
      %v1185 = vunpack.c.l.b16 %v1132
      %v1186 = vunpack.c.l.b16 %v1136
      %v1187 = vunpack.c.l.b16 %v1140
      %v1188 = vunpack.c.l.b16 %v1144
      %v1189 = vunpack.c.l.b16 %v1148
      %v1190 = vunpack.c.l.b16 %v1152
      %v1191 = vunpack.c.l.b16 %v1156
      %v1192 = vunpack.c.l.b16 %v1160
      %v1193 = vpack.c.b16 %v1162, %v1161
      %v1194 = vpack.c.b16 %v1164, %v1163
      %v1195 = vpack.c.b16 %v1166, %v1165
      %v1196 = vpack.c.b16 %v1168, %v1167
      %v1197 = vpack.c.b16 %v1170, %v1169
      %v1198 = vpack.c.b16 %v1172, %v1171
      %v1199 = vpack.c.b16 %v1174, %v1173
      %v1200 = vpack.c.b16 %v1176, %v1175
      %v1201 = vpack.c.b16 %v1178, %v1177
      %v1202 = vpack.c.b16 %v1180, %v1179
      %v1203 = vpack.c.b16 %v1182, %v1181
      %v1204 = vpack.c.b16 %v1184, %v1183
      %v1205 = vpack.c.b16 %v1186, %v1185
      %v1206 = vpack.c.b16 %v1188, %v1187
      %v1207 = vpack.c.b16 %v1190, %v1189
      %v1208 = vpack.c.b16 %v1192, %v1191
      %1209 = vrot.lane.b32.xlu0 %v1193, 8
      %v1210 = vpop.permute.xlu0 %1209
      %1211 = vrot.lane.b32.xlu0 %v1194, 8
      %v1212 = vpop.permute.xlu0 %1211
      %1213 = vrot.lane.b32.xlu0 %v1195, 8
      %v1214 = vpop.permute.xlu0 %1213
      %1215 = vrot.lane.b32.xlu0 %v1196, 8
      %v1216 = vpop.permute.xlu0 %1215
      %1217 = vrot.lane.b32.xlu0 %v1197, 8
      %v1218 = vpop.permute.xlu0 %1217
      %1219 = vrot.lane.b32.xlu0 %v1198, 8
      %v1220 = vpop.permute.xlu0 %1219
      %1221 = vrot.lane.b32.xlu0 %v1199, 8
      %v1222 = vpop.permute.xlu0 %1221
      %1223 = vrot.lane.b32.xlu0 %v1200, 8
      %v1224 = vpop.permute.xlu0 %1223
      %1225 = vrot.lane.b32.xlu0 %v1201, 8
      %v1226 = vpop.permute.xlu0 %1225
      %1227 = vrot.lane.b32.xlu0 %v1202, 8
      %v1228 = vpop.permute.xlu0 %1227
      %1229 = vrot.lane.b32.xlu0 %v1203, 8
      %v1230 = vpop.permute.xlu0 %1229
      %1231 = vrot.lane.b32.xlu0 %v1204, 8
      %v1232 = vpop.permute.xlu0 %1231
      %1233 = vrot.lane.b32.xlu0 %v1205, 8
      %v1234 = vpop.permute.xlu0 %1233
      %1235 = vrot.lane.b32.xlu0 %v1206, 8
      %v1236 = vpop.permute.xlu0 %1235
      %1237 = vrot.lane.b32.xlu0 %v1207, 8
      %v1238 = vpop.permute.xlu0 %1237
      %1239 = vrot.lane.b32.xlu0 %v1208, 8
      %v1240 = vpop.permute.xlu0 %1239
      %vm1257 = vcmask 97344
      %1258 = vst.msk [vmem:[#allocation3] sm:$0xff] %vm1257, %v1210
      %1259 = vst.msk [vmem:[#allocation3 + $0x8] sm:$0xff] %vm1257, %v1212
      %1260 = vst.msk [vmem:[#allocation3 + $0x10] sm:$0xff] %vm1257, %v1214
      %1261 = vst.msk [vmem:[#allocation3 + $0x18] sm:$0xff] %vm1257, %v1216
      %1262 = vst.msk [vmem:[#allocation3 + $0x20] sm:$0xff] %vm1257, %v1218
      %1263 = vst.msk [vmem:[#allocation3 + $0x28] sm:$0xff] %vm1257, %v1220
      %1264 = vst.msk [vmem:[#allocation3 + $0x30] sm:$0xff] %vm1257, %v1222
      %1265 = vst.msk [vmem:[#allocation3 + $0x38] sm:$0xff] %vm1257, %v1224
      %1266 = vst.msk [vmem:[#allocation3 + $0x40] sm:$0xff] %vm1257, %v1226
      %1267 = vst.msk [vmem:[#allocation3 + $0x48] sm:$0xff] %vm1257, %v1228
      %1268 = vst.msk [vmem:[#allocation3 + $0x50] sm:$0xff] %vm1257, %v1230
      %1269 = vst.msk [vmem:[#allocation3 + $0x58] sm:$0xff] %vm1257, %v1232
      %1270 = vst.msk [vmem:[#allocation3 + $0x60] sm:$0xff] %vm1257, %v1234
      %1271 = vst.msk [vmem:[#allocation3 + $0x68] sm:$0xff] %vm1257, %v1236
      %1272 = vst.msk [vmem:[#allocation3 + $0x70] sm:$0xff] %vm1257, %v1238
      %1273 = vst.msk [vmem:[#allocation3 + $0x78] sm:$0xff] %vm1257, %v1240
      %v1278 = vunpack.c.l.b16 %v257
      %v1279 = vunpack.c.l.b16 %v277
      %v1280 = vunpack.c.l.b16 %v297
      %v1281 = vunpack.c.l.b16 %v317
      %v1282 = vpack.c.b16 %v355, %v354
      %v1283 = vpack.c.b16 %v357, %v356
      %v1284 = vpack.c.b16 %v359, %v358
      %v1285 = vpack.c.b16 %v1278, %v360
      %v1286 = vpack.c.b16 %v363, %v362
      %v1287 = vpack.c.b16 %v365, %v364
      %v1288 = vpack.c.b16 %v367, %v366
      %v1289 = vpack.c.b16 %v1279, %v368
      %v1290 = vpack.c.b16 %v371, %v370
      %v1291 = vpack.c.b16 %v373, %v372
      %v1292 = vpack.c.b16 %v375, %v374
      %v1293 = vpack.c.b16 %v1280, %v376
      %v1294 = vpack.c.b16 %v379, %v378
      %v1295 = vpack.c.b16 %v381, %v380
      %v1296 = vpack.c.b16 %v383, %v382
      %v1297 = vpack.c.b16 %v1281, %v384
      %1298 = vrot.lane.b32.xlu0 %v1282, 12
      %v1299 = vpop.permute.xlu0 %1298
      %1300 = vrot.lane.b32.xlu0 %v1283, 12
      %v1301 = vpop.permute.xlu0 %1300
      %1302 = vrot.lane.b32.xlu0 %v1284, 12
      %v1303 = vpop.permute.xlu0 %1302
      %1304 = vrot.lane.b32.xlu0 %v1285, 12
      %v1305 = vpop.permute.xlu0 %1304
      %1306 = vrot.lane.b32.xlu0 %v1286, 12
      %v1307 = vpop.permute.xlu0 %1306
      %1308 = vrot.lane.b32.xlu0 %v1287, 12
      %v1309 = vpop.permute.xlu0 %1308
      %1310 = vrot.lane.b32.xlu0 %v1288, 12
      %v1311 = vpop.permute.xlu0 %1310
      %1312 = vrot.lane.b32.xlu0 %v1289, 12
      %v1313 = vpop.permute.xlu0 %1312
      %1314 = vrot.lane.b32.xlu0 %v1290, 12
      %v1315 = vpop.permute.xlu0 %1314
      %1316 = vrot.lane.b32.xlu0 %v1291, 12
      %v1317 = vpop.permute.xlu0 %1316
      %1318 = vrot.lane.b32.xlu0 %v1292, 12
      %v1319 = vpop.permute.xlu0 %1318
      %1320 = vrot.lane.b32.xlu0 %v1293, 12
      %v1321 = vpop.permute.xlu0 %1320
      %1322 = vrot.lane.b32.xlu0 %v1294, 12
      %v1323 = vpop.permute.xlu0 %1322
      %1324 = vrot.lane.b32.xlu0 %v1295, 12
      %v1325 = vpop.permute.xlu0 %1324
      %1326 = vrot.lane.b32.xlu0 %v1296, 12
      %v1327 = vpop.permute.xlu0 %1326
      %1328 = vrot.lane.b32.xlu0 %v1297, 12
      %v1329 = vpop.permute.xlu0 %1328
      %vm1346 = vcmask 130144
      %1347 = vst.msk [vmem:[#allocation3] sm:$0xff] %vm1346, %v1299
      %1348 = vst.msk [vmem:[#allocation3 + $0x8] sm:$0xff] %vm1346, %v1301
      %1349 = vst.msk [vmem:[#allocation3 + $0x10] sm:$0xff] %vm1346, %v1303
      %1350 = vst.msk [vmem:[#allocation3 + $0x18] sm:$0xff] %vm1346, %v1305
      %1351 = vst.msk [vmem:[#allocation3 + $0x20] sm:$0xff] %vm1346, %v1307
      %1352 = vst.msk [vmem:[#allocation3 + $0x28] sm:$0xff] %vm1346, %v1309
      %1353 = vst.msk [vmem:[#allocation3 + $0x30] sm:$0xff] %vm1346, %v1311
      %1354 = vst.msk [vmem:[#allocation3 + $0x38] sm:$0xff] %vm1346, %v1313
      %1355 = vst.msk [vmem:[#allocation3 + $0x40] sm:$0xff] %vm1346, %v1315
      %1356 = vst.msk [vmem:[#allocation3 + $0x48] sm:$0xff] %vm1346, %v1317
      %1357 = vst.msk [vmem:[#allocation3 + $0x50] sm:$0xff] %vm1346, %v1319
      %1358 = vst.msk [vmem:[#allocation3 + $0x58] sm:$0xff] %vm1346, %v1321
      %1359 = vst.msk [vmem:[#allocation3 + $0x60] sm:$0xff] %vm1346, %v1323
      %1360 = vst.msk [vmem:[#allocation3 + $0x68] sm:$0xff] %vm1346, %v1325
      %1361 = vst.msk [vmem:[#allocation3 + $0x70] sm:$0xff] %vm1346, %v1327
      %1362 = vst.msk [vmem:[#allocation3 + $0x78] sm:$0xff] %vm1346, %v1329
      %v1364 = vshrl.u32 %v257, 16
      %v1366 = vrot.slane %v1364, 4
      %v1367 = vshll.u32 %v257, 16
      %v1369 = vrot.slane %v1367, 5
      %v1370 = vor.u32 %v1366, %v1369
      %v1371 = vrot.slane %v1370, 4
      %v1373 = vshll.u32 %v258, 16
      %v1375 = vrot.slane %v1373, 5
      %v1376 = vsel %vm436, %v1371, %v1375
      %v1378 = vshrl.u32 %v277, 16
      %v1380 = vrot.slane %v1378, 4
      %v1381 = vshll.u32 %v277, 16
      %v1383 = vrot.slane %v1381, 5
      %v1384 = vor.u32 %v1380, %v1383
      %v1385 = vrot.slane %v1384, 4
      %v1387 = vshll.u32 %v278, 16
      %v1389 = vrot.slane %v1387, 5
      %v1390 = vsel %vm436, %v1385, %v1389
      %v1392 = vshrl.u32 %v297, 16
      %v1394 = vrot.slane %v1392, 4
      %v1395 = vshll.u32 %v297, 16
      %v1397 = vrot.slane %v1395, 5
      %v1398 = vor.u32 %v1394, %v1397
      %v1399 = vrot.slane %v1398, 4
      %v1401 = vshll.u32 %v298, 16
      %v1403 = vrot.slane %v1401, 5
      %v1404 = vsel %vm436, %v1399, %v1403
      %v1406 = vshrl.u32 %v317, 16
      %v1408 = vrot.slane %v1406, 4
      %v1409 = vshll.u32 %v317, 16
      %v1411 = vrot.slane %v1409, 5
      %v1412 = vor.u32 %v1408, %v1411
      %v1413 = vrot.slane %v1412, 4
      %v1415 = vshll.u32 %v318, 16
      %v1417 = vrot.slane %v1415, 5
      %v1418 = vsel %vm436, %v1413, %v1417
      %v1419 = vunpack.c.l.b16 %v1376
      %v1420 = vunpack.c.l.b16 %v1390
      %v1421 = vunpack.c.l.b16 %v1404
      %v1422 = vunpack.c.l.b16 %v1418
      %v1423 = vpack.c.b16 %v887, %v886
      %v1424 = vpack.c.b16 %v889, %v888
      %v1425 = vpack.c.b16 %v891, %v890
      %v1426 = vpack.c.b16 %v1419, %v892
      %v1427 = vpack.c.b16 %v895, %v894
      %v1428 = vpack.c.b16 %v897, %v896
      %v1429 = vpack.c.b16 %v899, %v898
      %v1430 = vpack.c.b16 %v1420, %v900
      %v1431 = vpack.c.b16 %v903, %v902
      %v1432 = vpack.c.b16 %v905, %v904
      %v1433 = vpack.c.b16 %v907, %v906
      %v1434 = vpack.c.b16 %v1421, %v908
      %v1435 = vpack.c.b16 %v911, %v910
      %v1436 = vpack.c.b16 %v913, %v912
      %v1437 = vpack.c.b16 %v915, %v914
      %v1438 = vpack.c.b16 %v1422, %v916
      %1439 = vrot.lane.b32.xlu0 %v1423, 16
      %v1440 = vpop.permute.xlu0 %1439
      %1441 = vrot.lane.b32.xlu0 %v1424, 16
      %v1442 = vpop.permute.xlu0 %1441
      %1443 = vrot.lane.b32.xlu0 %v1425, 16
      %v1444 = vpop.permute.xlu0 %1443
      %1445 = vrot.lane.b32.xlu0 %v1426, 16
      %v1446 = vpop.permute.xlu0 %1445
      %1447 = vrot.lane.b32.xlu0 %v1427, 16
      %v1448 = vpop.permute.xlu0 %1447
      %1449 = vrot.lane.b32.xlu0 %v1428, 16
      %v1450 = vpop.permute.xlu0 %1449
      %1451 = vrot.lane.b32.xlu0 %v1429, 16
      %v1452 = vpop.permute.xlu0 %1451
      %1453 = vrot.lane.b32.xlu0 %v1430, 16
      %v1454 = vpop.permute.xlu0 %1453
      %1455 = vrot.lane.b32.xlu0 %v1431, 16
      %v1456 = vpop.permute.xlu0 %1455
      %1457 = vrot.lane.b32.xlu0 %v1432, 16
      %v1458 = vpop.permute.xlu0 %1457
      %1459 = vrot.lane.b32.xlu0 %v1433, 16
      %v1460 = vpop.permute.xlu0 %1459
      %1461 = vrot.lane.b32.xlu0 %v1434, 16
      %v1462 = vpop.permute.xlu0 %1461
      %1463 = vrot.lane.b32.xlu0 %v1435, 16
      %v1464 = vpop.permute.xlu0 %1463
      %1465 = vrot.lane.b32.xlu0 %v1436, 16
      %v1466 = vpop.permute.xlu0 %1465
      %1467 = vrot.lane.b32.xlu0 %v1437, 16
      %v1468 = vpop.permute.xlu0 %1467
      %1469 = vrot.lane.b32.xlu0 %v1438, 16
      %v1470 = vpop.permute.xlu0 %1469
      %vm1487 = vcmask 162944
      %1488 = vst.msk [vmem:[#allocation3] sm:$0xff] %vm1487, %v1440
      %1489 = vst.msk [vmem:[#allocation3 + $0x8] sm:$0xff] %vm1487, %v1442
      %1490 = vst.msk [vmem:[#allocation3 + $0x10] sm:$0xff] %vm1487, %v1444
      %1491 = vst.msk [vmem:[#allocation3 + $0x18] sm:$0xff] %vm1487, %v1446
      %1492 = vst.msk [vmem:[#allocation3 + $0x20] sm:$0xff] %vm1487, %v1448
      %1493 = vst.msk [vmem:[#allocation3 + $0x28] sm:$0xff] %vm1487, %v1450
      %1494 = vst.msk [vmem:[#allocation3 + $0x30] sm:$0xff] %vm1487, %v1452
      %1495 = vst.msk [vmem:[#allocation3 + $0x38] sm:$0xff] %vm1487, %v1454
      %1496 = vst.msk [vmem:[#allocation3 + $0x40] sm:$0xff] %vm1487, %v1456
      %1497 = vst.msk [vmem:[#allocation3 + $0x48] sm:$0xff] %vm1487, %v1458
      %1498 = vst.msk [vmem:[#allocation3 + $0x50] sm:$0xff] %vm1487, %v1460
      %1499 = vst.msk [vmem:[#allocation3 + $0x58] sm:$0xff] %vm1487, %v1462
      %1500 = vst.msk [vmem:[#allocation3 + $0x60] sm:$0xff] %vm1487, %v1464
      %1501 = vst.msk [vmem:[#allocation3 + $0x68] sm:$0xff] %vm1487, %v1466
      %1502 = vst.msk [vmem:[#allocation3 + $0x70] sm:$0xff] %vm1487, %v1468
      %1503 = vst.msk [vmem:[#allocation3 + $0x78] sm:$0xff] %vm1487, %v1470
      %v1508 = vrot.slane %v257, 5
      %v1509 = vrot.slane %v1508, 4
      %v1510 = vrot.slane %v258, 5
      %v1511 = vsel %vm1032, %v1509, %v1510
      %v1512 = vrot.slane %v277, 5
      %v1513 = vrot.slane %v1512, 4
      %v1514 = vrot.slane %v278, 5
      %v1515 = vsel %vm1032, %v1513, %v1514
      %v1516 = vrot.slane %v297, 5
      %v1517 = vrot.slane %v1516, 4
      %v1518 = vrot.slane %v298, 5
      %v1519 = vsel %vm1032, %v1517, %v1518
      %v1520 = vrot.slane %v317, 5
      %v1521 = vrot.slane %v1520, 4
      %v1522 = vrot.slane %v318, 5
      %v1523 = vsel %vm1032, %v1521, %v1522
      %v1524 = vunpack.c.l.b16 %v1511
      %v1525 = vunpack.c.l.b16 %v1515
      %v1526 = vunpack.c.l.b16 %v1519
      %v1527 = vunpack.c.l.b16 %v1523
      %v1528 = vpack.c.b16 %v1163, %v1162
      %v1529 = vpack.c.b16 %v1165, %v1164
      %v1530 = vpack.c.b16 %v1167, %v1166
      %v1531 = vpack.c.b16 %v1524, %v1168
      %v1532 = vpack.c.b16 %v1171, %v1170
      %v1533 = vpack.c.b16 %v1173, %v1172
      %v1534 = vpack.c.b16 %v1175, %v1174
      %v1535 = vpack.c.b16 %v1525, %v1176
      %v1536 = vpack.c.b16 %v1179, %v1178
      %v1537 = vpack.c.b16 %v1181, %v1180
      %v1538 = vpack.c.b16 %v1183, %v1182
      %v1539 = vpack.c.b16 %v1526, %v1184
      %v1540 = vpack.c.b16 %v1187, %v1186
      %v1541 = vpack.c.b16 %v1189, %v1188
      %v1542 = vpack.c.b16 %v1191, %v1190
      %v1543 = vpack.c.b16 %v1527, %v1192
      %1544 = vrot.lane.b32.xlu0 %v1528, 20
      %v1545 = vpop.permute.xlu0 %1544
      %1546 = vrot.lane.b32.xlu0 %v1529, 20
      %v1547 = vpop.permute.xlu0 %1546
      %1548 = vrot.lane.b32.xlu0 %v1530, 20
      %v1549 = vpop.permute.xlu0 %1548
      %1550 = vrot.lane.b32.xlu0 %v1531, 20
      %v1551 = vpop.permute.xlu0 %1550
      %1552 = vrot.lane.b32.xlu0 %v1532, 20
      %v1553 = vpop.permute.xlu0 %1552
      %1554 = vrot.lane.b32.xlu0 %v1533, 20
      %v1555 = vpop.permute.xlu0 %1554
      %1556 = vrot.lane.b32.xlu0 %v1534, 20
      %v1557 = vpop.permute.xlu0 %1556
      %1558 = vrot.lane.b32.xlu0 %v1535, 20
      %v1559 = vpop.permute.xlu0 %1558
      %1560 = vrot.lane.b32.xlu0 %v1536, 20
      %v1561 = vpop.permute.xlu0 %1560
      %1562 = vrot.lane.b32.xlu0 %v1537, 20
      %v1563 = vpop.permute.xlu0 %1562
      %1564 = vrot.lane.b32.xlu0 %v1538, 20
      %v1565 = vpop.permute.xlu0 %1564
      %1566 = vrot.lane.b32.xlu0 %v1539, 20
      %v1567 = vpop.permute.xlu0 %1566
      %1568 = vrot.lane.b32.xlu0 %v1540, 20
      %v1569 = vpop.permute.xlu0 %1568
      %1570 = vrot.lane.b32.xlu0 %v1541, 20
      %v1571 = vpop.permute.xlu0 %1570
      %1572 = vrot.lane.b32.xlu0 %v1542, 20
      %v1573 = vpop.permute.xlu0 %1572
      %1574 = vrot.lane.b32.xlu0 %v1543, 20
      %v1575 = vpop.permute.xlu0 %1574
      %vm1592 = vcmask 195744
      %1593 = vst.msk [vmem:[#allocation3] sm:$0xff] %vm1592, %v1545
      %1594 = vst.msk [vmem:[#allocation3 + $0x8] sm:$0xff] %vm1592, %v1547
      %1595 = vst.msk [vmem:[#allocation3 + $0x10] sm:$0xff] %vm1592, %v1549
      %1596 = vst.msk [vmem:[#allocation3 + $0x18] sm:$0xff] %vm1592, %v1551
      %1597 = vst.msk [vmem:[#allocation3 + $0x20] sm:$0xff] %vm1592, %v1553
      %1598 = vst.msk [vmem:[#allocation3 + $0x28] sm:$0xff] %vm1592, %v1555
      %1599 = vst.msk [vmem:[#allocation3 + $0x30] sm:$0xff] %vm1592, %v1557
      %1600 = vst.msk [vmem:[#allocation3 + $0x38] sm:$0xff] %vm1592, %v1559
      %1601 = vst.msk [vmem:[#allocation3 + $0x40] sm:$0xff] %vm1592, %v1561
      %1602 = vst.msk [vmem:[#allocation3 + $0x48] sm:$0xff] %vm1592, %v1563
      %1603 = vst.msk [vmem:[#allocation3 + $0x50] sm:$0xff] %vm1592, %v1565
      %1604 = vst.msk [vmem:[#allocation3 + $0x58] sm:$0xff] %vm1592, %v1567
      %1605 = vst.msk [vmem:[#allocation3 + $0x60] sm:$0xff] %vm1592, %v1569
      %1606 = vst.msk [vmem:[#allocation3 + $0x68] sm:$0xff] %vm1592, %v1571
      %1607 = vst.msk [vmem:[#allocation3 + $0x70] sm:$0xff] %vm1592, %v1573
      %1608 = vst.msk [vmem:[#allocation3 + $0x78] sm:$0xff] %vm1592, %v1575
      %v1613 = vunpack.c.l.b16 %v259
      %v1614 = vunpack.c.l.b16 %v279
      %v1615 = vunpack.c.l.b16 %v299
      %v1616 = vunpack.c.l.b16 %v319
      %v1617 = vpack.c.b16 %v1613, %v1278
      %v1618 = vpack.c.b16 %v1614, %v1279
      %v1619 = vpack.c.b16 %v1615, %v1280
      %v1620 = vpack.c.b16 %v1616, %v1281
      %1621 = vrot.lane.b32.xlu0 %v386, 24
      %v1622 = vpop.permute.xlu0 %1621
      %1623 = vrot.lane.b32.xlu0 %v387, 24
      %v1624 = vpop.permute.xlu0 %1623
      %1625 = vrot.lane.b32.xlu0 %v388, 24
      %v1626 = vpop.permute.xlu0 %1625
      %1627 = vrot.lane.b32.xlu0 %v1617, 24
      %v1628 = vpop.permute.xlu0 %1627
      %1629 = vrot.lane.b32.xlu0 %v390, 24
      %v1630 = vpop.permute.xlu0 %1629
      %1631 = vrot.lane.b32.xlu0 %v391, 24
      %v1632 = vpop.permute.xlu0 %1631
      %1633 = vrot.lane.b32.xlu0 %v392, 24
      %v1634 = vpop.permute.xlu0 %1633
      %1635 = vrot.lane.b32.xlu0 %v1618, 24
      %v1636 = vpop.permute.xlu0 %1635
      %1637 = vrot.lane.b32.xlu0 %v394, 24
      %v1638 = vpop.permute.xlu0 %1637
      %1639 = vrot.lane.b32.xlu0 %v395, 24
      %v1640 = vpop.permute.xlu0 %1639
      %1641 = vrot.lane.b32.xlu0 %v396, 24
      %v1642 = vpop.permute.xlu0 %1641
      %1643 = vrot.lane.b32.xlu0 %v1619, 24
      %v1644 = vpop.permute.xlu0 %1643
      %1645 = vrot.lane.b32.xlu0 %v398, 24
      %v1646 = vpop.permute.xlu0 %1645
      %1647 = vrot.lane.b32.xlu0 %v399, 24
      %v1648 = vpop.permute.xlu0 %1647
      %1649 = vrot.lane.b32.xlu0 %v400, 24
      %v1650 = vpop.permute.xlu0 %1649
      %1651 = vrot.lane.b32.xlu0 %v1620, 24
      %v1652 = vpop.permute.xlu0 %1651
      %vm1669 = vcmask 228544
      %1670 = vst.msk [vmem:[#allocation3] sm:$0xff] %vm1669, %v1622
      %1671 = vst.msk [vmem:[#allocation3 + $0x8] sm:$0xff] %vm1669, %v1624
      %1672 = vst.msk [vmem:[#allocation3 + $0x10] sm:$0xff] %vm1669, %v1626
      %1673 = vst.msk [vmem:[#allocation3 + $0x18] sm:$0xff] %vm1669, %v1628
      %1674 = vst.msk [vmem:[#allocation3 + $0x20] sm:$0xff] %vm1669, %v1630
      %1675 = vst.msk [vmem:[#allocation3 + $0x28] sm:$0xff] %vm1669, %v1632
      %1676 = vst.msk [vmem:[#allocation3 + $0x30] sm:$0xff] %vm1669, %v1634
      %1677 = vst.msk [vmem:[#allocation3 + $0x38] sm:$0xff] %vm1669, %v1636
      %1678 = vst.msk [vmem:[#allocation3 + $0x40] sm:$0xff] %vm1669, %v1638
      %1679 = vst.msk [vmem:[#allocation3 + $0x48] sm:$0xff] %vm1669, %v1640
      %1680 = vst.msk [vmem:[#allocation3 + $0x50] sm:$0xff] %vm1669, %v1642
      %1681 = vst.msk [vmem:[#allocation3 + $0x58] sm:$0xff] %vm1669, %v1644
      %1682 = vst.msk [vmem:[#allocation3 + $0x60] sm:$0xff] %vm1669, %v1646
      %1683 = vst.msk [vmem:[#allocation3 + $0x68] sm:$0xff] %vm1669, %v1648
      %1684 = vst.msk [vmem:[#allocation3 + $0x70] sm:$0xff] %vm1669, %v1650
      %1685 = vst.msk [vmem:[#allocation3 + $0x78] sm:$0xff] %vm1669, %v1652
      %v1687 = vshrl.u32 %v259, 16
      %v1689 = vrot.slane %v1687, 4
      %v1690 = vshll.u32 %v259, 16
      %v1692 = vrot.slane %v1690, 5
      %v1693 = vor.u32 %v1689, %v1692
      %v1694 = vrot.slane %v1693, 4
      %v1696 = vshll.u32 %v260, 16
      %v1698 = vrot.slane %v1696, 5
      %v1699 = vsel %vm436, %v1694, %v1698
      %v1701 = vshrl.u32 %v279, 16
      %v1703 = vrot.slane %v1701, 4
      %v1704 = vshll.u32 %v279, 16
      %v1706 = vrot.slane %v1704, 5
      %v1707 = vor.u32 %v1703, %v1706
      %v1708 = vrot.slane %v1707, 4
      %v1710 = vshll.u32 %v280, 16
      %v1712 = vrot.slane %v1710, 5
      %v1713 = vsel %vm436, %v1708, %v1712
      %v1715 = vshrl.u32 %v299, 16
      %v1717 = vrot.slane %v1715, 4
      %v1718 = vshll.u32 %v299, 16
      %v1720 = vrot.slane %v1718, 5
      %v1721 = vor.u32 %v1717, %v1720
      %v1722 = vrot.slane %v1721, 4
      %v1724 = vshll.u32 %v300, 16
      %v1726 = vrot.slane %v1724, 5
      %v1727 = vsel %vm436, %v1722, %v1726
      %v1729 = vshrl.u32 %v319, 16
      %v1731 = vrot.slane %v1729, 4
      %v1732 = vshll.u32 %v319, 16
      %v1734 = vrot.slane %v1732, 5
      %v1735 = vor.u32 %v1731, %v1734
      %v1736 = vrot.slane %v1735, 4
      %v1738 = vshll.u32 %v320, 16
      %v1740 = vrot.slane %v1738, 5
      %v1741 = vsel %vm436, %v1736, %v1740
      %v1742 = vunpack.c.l.b16 %v1699
      %v1743 = vunpack.c.l.b16 %v1713
      %v1744 = vunpack.c.l.b16 %v1727
      %v1745 = vunpack.c.l.b16 %v1741
      %v1746 = vpack.c.b16 %v1742, %v1419
      %v1747 = vpack.c.b16 %v1743, %v1420
      %v1748 = vpack.c.b16 %v1744, %v1421
      %v1749 = vpack.c.b16 %v1745, %v1422
      %1750 = vrot.lane.b32.xlu0 %v918, 28
      %v1751 = vpop.permute.xlu0 %1750
      %1752 = vrot.lane.b32.xlu0 %v919, 28
      %v1753 = vpop.permute.xlu0 %1752
      %1754 = vrot.lane.b32.xlu0 %v920, 28
      %v1755 = vpop.permute.xlu0 %1754
      %1756 = vrot.lane.b32.xlu0 %v1746, 28
      %v1757 = vpop.permute.xlu0 %1756
      %1758 = vrot.lane.b32.xlu0 %v922, 28
      %v1759 = vpop.permute.xlu0 %1758
      %1760 = vrot.lane.b32.xlu0 %v923, 28
      %v1761 = vpop.permute.xlu0 %1760
      %1762 = vrot.lane.b32.xlu0 %v924, 28
      %v1763 = vpop.permute.xlu0 %1762
      %1764 = vrot.lane.b32.xlu0 %v1747, 28
      %v1765 = vpop.permute.xlu0 %1764
      %1766 = vrot.lane.b32.xlu0 %v926, 28
      %v1767 = vpop.permute.xlu0 %1766
      %1768 = vrot.lane.b32.xlu0 %v927, 28
      %v1769 = vpop.permute.xlu0 %1768
      %1770 = vrot.lane.b32.xlu0 %v928, 28
      %v1771 = vpop.permute.xlu0 %1770
      %1772 = vrot.lane.b32.xlu0 %v1748, 28
      %v1773 = vpop.permute.xlu0 %1772
      %1774 = vrot.lane.b32.xlu0 %v930, 28
      %v1775 = vpop.permute.xlu0 %1774
      %1776 = vrot.lane.b32.xlu0 %v931, 28
      %v1777 = vpop.permute.xlu0 %1776
      %1778 = vrot.lane.b32.xlu0 %v932, 28
      %v1779 = vpop.permute.xlu0 %1778
      %1780 = vrot.lane.b32.xlu0 %v1749, 28
      %v1781 = vpop.permute.xlu0 %1780
      %vm1798 = vcmask 261344
      %1799 = vst.msk [vmem:[#allocation3] sm:$0xff] %vm1798, %v1751
      %1800 = vst.msk [vmem:[#allocation3 + $0x8] sm:$0xff] %vm1798, %v1753
      %1801 = vst.msk [vmem:[#allocation3 + $0x10] sm:$0xff] %vm1798, %v1755
      %1802 = vst.msk [vmem:[#allocation3 + $0x18] sm:$0xff] %vm1798, %v1757
      %1803 = vst.msk [vmem:[#allocation3 + $0x20] sm:$0xff] %vm1798, %v1759
      %1804 = vst.msk [vmem:[#allocation3 + $0x28] sm:$0xff] %vm1798, %v1761
      %1805 = vst.msk [vmem:[#allocation3 + $0x30] sm:$0xff] %vm1798, %v1763
      %1806 = vst.msk [vmem:[#allocation3 + $0x38] sm:$0xff] %vm1798, %v1765
      %1807 = vst.msk [vmem:[#allocation3 + $0x40] sm:$0xff] %vm1798, %v1767
      %1808 = vst.msk [vmem:[#allocation3 + $0x48] sm:$0xff] %vm1798, %v1769
      %1809 = vst.msk [vmem:[#allocation3 + $0x50] sm:$0xff] %vm1798, %v1771
      %1810 = vst.msk [vmem:[#allocation3 + $0x58] sm:$0xff] %vm1798, %v1773
      %1811 = vst.msk [vmem:[#allocation3 + $0x60] sm:$0xff] %vm1798, %v1775
      %1812 = vst.msk [vmem:[#allocation3 + $0x68] sm:$0xff] %vm1798, %v1777
      %1813 = vst.msk [vmem:[#allocation3 + $0x70] sm:$0xff] %vm1798, %v1779
      %1814 = vst.msk [vmem:[#allocation3 + $0x78] sm:$0xff] %vm1798, %v1781
      %v1819 = vrot.slane %v259, 5
      %v1820 = vrot.slane %v1819, 4
      %v1821 = vrot.slane %v260, 5
      %v1822 = vsel %vm1032, %v1820, %v1821
      %v1823 = vrot.slane %v279, 5
      %v1824 = vrot.slane %v1823, 4
      %v1825 = vrot.slane %v280, 5
      %v1826 = vsel %vm1032, %v1824, %v1825
      %v1827 = vrot.slane %v299, 5
      %v1828 = vrot.slane %v1827, 4
      %v1829 = vrot.slane %v300, 5
      %v1830 = vsel %vm1032, %v1828, %v1829
      %v1831 = vrot.slane %v319, 5
      %v1832 = vrot.slane %v1831, 4
      %v1833 = vrot.slane %v320, 5
      %v1834 = vsel %vm1032, %v1832, %v1833
      %v1835 = vunpack.c.l.b16 %v1822
      %v1836 = vunpack.c.l.b16 %v1826
      %v1837 = vunpack.c.l.b16 %v1830
      %v1838 = vunpack.c.l.b16 %v1834
      %v1839 = vpack.c.b16 %v1835, %v1524
      %v1840 = vpack.c.b16 %v1836, %v1525
      %v1841 = vpack.c.b16 %v1837, %v1526
      %v1842 = vpack.c.b16 %v1838, %v1527
      %1843 = vrot.lane.b32.xlu0 %v1194, 32
      %v1844 = vpop.permute.xlu0 %1843
      %1845 = vrot.lane.b32.xlu0 %v1195, 32
      %v1846 = vpop.permute.xlu0 %1845
      %1847 = vrot.lane.b32.xlu0 %v1196, 32
      %v1848 = vpop.permute.xlu0 %1847
      %1849 = vrot.lane.b32.xlu0 %v1839, 32
      %v1850 = vpop.permute.xlu0 %1849
      %1851 = vrot.lane.b32.xlu0 %v1198, 32
      %v1852 = vpop.permute.xlu0 %1851
      %1853 = vrot.lane.b32.xlu0 %v1199, 32
      %v1854 = vpop.permute.xlu0 %1853
      %1855 = vrot.lane.b32.xlu0 %v1200, 32
      %v1856 = vpop.permute.xlu0 %1855
      %1857 = vrot.lane.b32.xlu0 %v1840, 32
      %v1858 = vpop.permute.xlu0 %1857
      %1859 = vrot.lane.b32.xlu0 %v1202, 32
      %v1860 = vpop.permute.xlu0 %1859
      %1861 = vrot.lane.b32.xlu0 %v1203, 32
      %v1862 = vpop.permute.xlu0 %1861
      %1863 = vrot.lane.b32.xlu0 %v1204, 32
      %v1864 = vpop.permute.xlu0 %1863
      %1865 = vrot.lane.b32.xlu0 %v1841, 32
      %v1866 = vpop.permute.xlu0 %1865
      %1867 = vrot.lane.b32.xlu0 %v1206, 32
      %v1868 = vpop.permute.xlu0 %1867
      %1869 = vrot.lane.b32.xlu0 %v1207, 32
      %v1870 = vpop.permute.xlu0 %1869
      %1871 = vrot.lane.b32.xlu0 %v1208, 32
      %v1872 = vpop.permute.xlu0 %1871
      %1873 = vrot.lane.b32.xlu0 %v1842, 32
      %v1874 = vpop.permute.xlu0 %1873
      %vm1891 = vcmask 294144
      %1892 = vst.msk [vmem:[#allocation3] sm:$0xff] %vm1891, %v1844
      %1893 = vst.msk [vmem:[#allocation3 + $0x8] sm:$0xff] %vm1891, %v1846
      %1894 = vst.msk [vmem:[#allocation3 + $0x10] sm:$0xff] %vm1891, %v1848
      %1895 = vst.msk [vmem:[#allocation3 + $0x18] sm:$0xff] %vm1891, %v1850
      %1896 = vst.msk [vmem:[#allocation3 + $0x20] sm:$0xff] %vm1891, %v1852
      %1897 = vst.msk [vmem:[#allocation3 + $0x28] sm:$0xff] %vm1891, %v1854
      %1898 = vst.msk [vmem:[#allocation3 + $0x30] sm:$0xff] %vm1891, %v1856
      %1899 = vst.msk [vmem:[#allocation3 + $0x38] sm:$0xff] %vm1891, %v1858
      %1900 = vst.msk [vmem:[#allocation3 + $0x40] sm:$0xff] %vm1891, %v1860
      %1901 = vst.msk [vmem:[#allocation3 + $0x48] sm:$0xff] %vm1891, %v1862
      %1902 = vst.msk [vmem:[#allocation3 + $0x50] sm:$0xff] %vm1891, %v1864
      %1903 = vst.msk [vmem:[#allocation3 + $0x58] sm:$0xff] %vm1891, %v1866
      %1904 = vst.msk [vmem:[#allocation3 + $0x60] sm:$0xff] %vm1891, %v1868
      %1905 = vst.msk [vmem:[#allocation3 + $0x68] sm:$0xff] %vm1891, %v1870
      %1906 = vst.msk [vmem:[#allocation3 + $0x70] sm:$0xff] %vm1891, %v1872
      %1907 = vst.msk [vmem:[#allocation3 + $0x78] sm:$0xff] %vm1891, %v1874
      %v1908 = vld [vmem:[#allocation2] sm:$0xff]
      %v1909 = vld [vmem:[#allocation2 + $0x8] sm:$0xff]
      %v1910 = vld [vmem:[#allocation2 + $0x10] sm:$0xff]
      %v1911 = vld [vmem:[#allocation2 + $0x18] sm:$0xff]
      %v1912 = vld [vmem:[#allocation2 + $0x20] sm:$0xff]
      %v1913 = vld [vmem:[#allocation2 + $0x28] sm:$0xff]
      %v1914 = vld [vmem:[#allocation2 + $0x30] sm:$0xff]
      %v1915 = vld [vmem:[#allocation2 + $0x38] sm:$0xff]
      %v1916 = vld [vmem:[#allocation2 + $0x40] sm:$0xff]
      %v1917 = vld [vmem:[#allocation2 + $0x48] sm:$0xff]
      %v1918 = vld [vmem:[#allocation2 + $0x50] sm:$0xff]
      %v1919 = vld [vmem:[#allocation2 + $0x58] sm:$0xff]
      %v1920 = vld [vmem:[#allocation2 + $0x60] sm:$0xff]
      %v1921 = vld [vmem:[#allocation2 + $0x68] sm:$0xff]
      %v1922 = vld [vmem:[#allocation2 + $0x70] sm:$0xff]
      %v1923 = vld [vmem:[#allocation2 + $0x78] sm:$0xff]
      %v1924 = vld [vmem:[#allocation2 + $0x80] sm:$0xff]
      %v1925 = vld [vmem:[#allocation2 + $0x88] sm:$0xff]
      %v1926 = vld [vmem:[#allocation2 + $0x90] sm:$0xff]
      %v1927 = vld [vmem:[#allocation2 + $0x98] sm:$0xff]
      %v1928 = vld [vmem:[#allocation2 + $0xa0] sm:$0xff]
      %v1929 = vld [vmem:[#allocation2 + $0xa8] sm:$0xff]
      %v1930 = vld [vmem:[#allocation2 + $0xb0] sm:$0xff]
      %v1931 = vld [vmem:[#allocation2 + $0xb8] sm:$0xff]
      %v1932 = vld [vmem:[#allocation2 + $0xc0] sm:$0xff]
      %v1933 = vld [vmem:[#allocation2 + $0xc8] sm:$0xff]
      %v1934 = vld [vmem:[#allocation2 + $0xd0] sm:$0xff]
      %v1935 = vld [vmem:[#allocation2 + $0xd8] sm:$0xff]
      %v1936 = vld [vmem:[#allocation2 + $0xe0] sm:$0xff]
      %v1937 = vld [vmem:[#allocation2 + $0xe8] sm:$0xff]
      %v1938 = vld [vmem:[#allocation2 + $0xf0] sm:$0xff]
      %v1939 = vld [vmem:[#allocation2 + $0xf8] sm:$0xff]
      %v1940 = vld [vmem:[#allocation3] sm:$0xff]
      %v1941 = vld [vmem:[#allocation3 + $0x8] sm:$0xff]
      %v1942 = vld [vmem:[#allocation3 + $0x10] sm:$0xff]
      %v1943 = vld [vmem:[#allocation3 + $0x18] sm:$0xff]
      %v1944 = vld [vmem:[#allocation3 + $0x20] sm:$0xff]
      %v1945 = vld [vmem:[#allocation3 + $0x28] sm:$0xff]
      %v1946 = vld [vmem:[#allocation3 + $0x30] sm:$0xff]
      %v1947 = vld [vmem:[#allocation3 + $0x38] sm:$0xff]
      %v1948 = vld [vmem:[#allocation3 + $0x40] sm:$0xff]
      %v1949 = vld [vmem:[#allocation3 + $0x48] sm:$0xff]
      %v1950 = vld [vmem:[#allocation3 + $0x50] sm:$0xff]
      %v1951 = vld [vmem:[#allocation3 + $0x58] sm:$0xff]
      %v1952 = vld [vmem:[#allocation3 + $0x60] sm:$0xff]
      %v1953 = vld [vmem:[#allocation3 + $0x68] sm:$0xff]
      %v1954 = vld [vmem:[#allocation3 + $0x70] sm:$0xff]
      %v1955 = vld [vmem:[#allocation3 + $0x78] sm:$0xff]
      %v1956 = vld [vmem:[%s1] sm:$0xf]
      %v1957 = vld [vmem:[%s1 + $0x4] sm:$0xf]
      %v1958 = vld [vmem:[%s1 + $0x8] sm:$0xf]
      %v1959 = vld [vmem:[%s1 + $0xc] sm:$0xf]
      %v1960 = vld [vmem:[%s1 + $0x10] sm:$0x3]
      %v1966 = vunpack.c.l.b16 %v1956
      %v1967 = vunpack.c.l.b16 %v1957
      %v1968 = vunpack.c.l.b16 %v1958
      %v1969 = vunpack.c.l.b16 %v1959
      %v1970 = vunpack.c.l.b16 %v1960
      %v1971 = vpack.c.b16 %v1967, %v1966
      %v1972 = vpack.c.b16 %v1969, %v1968
      %v1973 = vpack.c.b16 %v1970, %v1970
      %vm1976 = vcmask 293888
      %v1978 = vsel %vm1976, %v1940, 0
      %v1981 = vsel %vm1976, %v1941, 0
      %v1984 = vsel %vm1976, %v1942, 0
      %v1987 = vsel %vm1976, %v1943, 0
      %v1990 = vsel %vm1976, %v1944, 0
      %v1993 = vsel %vm1976, %v1945, 0
      %v1996 = vsel %vm1976, %v1946, 0
      %v1999 = vsel %vm1976, %v1947, 0
      %v2002 = vsel %vm1976, %v1948, 0
      %v2005 = vsel %vm1976, %v1949, 0
      %v2008 = vsel %vm1976, %v1950, 0
      %v2011 = vsel %vm1976, %v1951, 0
      %v2014 = vsel %vm1976, %v1952, 0
      %v2017 = vsel %vm1976, %v1953, 0
      %v2020 = vsel %vm1976, %v1954, 0
      %v2023 = vsel %vm1976, %v1955, 0
      %vm2025 = vcmask 1041408
      %v2027 = vsel %vm2025, %v1973, 0
      %2029 = vmatprep.subr.bf16.mxu0 0
      %2030 = vmatpush1.bf16.msra.mxu0 %v1971
      %2031 = vmatprep.subr.bf16.mxu0 0
      %2032 = vmatpush1.bf16.msra.mxu0 %v1972
      %2033 = vmatprep.subr.bf16.mxu0 0
      %2034 = vmatpush1.bf16.msra.mxu0 %v2027
      %2035 = vmatprep.subr.bf16.mxu0 0
      %2036 = vmatpush1.bf16.msra.mxu0 0
      %2037 = vmatprep.subr.bf16.mxu0 0
      %2038 = vmatpush1.bf16.msra.mxu0 0
      %2039 = vmatprep.subr.bf16.mxu0 0
      %2040 = vmatpush1.bf16.msra.mxu0 0
      %2041 = vmatprep.subr.bf16.mxu0 0
      %2042 = vmatpush1.bf16.msra.mxu0 0
      %2043 = vmatprep.subr.bf16.mxu0 0
      %2044 = vmatpush1.bf16.msra.mxu0 0
      %2045 = vmatprep.subr.bf16.mxu0 0
      %2046 = vmatpush1.bf16.msra.mxu0 0
      %2047 = vmatprep.subr.bf16.mxu0 0
      %2048 = vmatpush1.bf16.msra.mxu0 0
      %2049 = vmatprep.subr.bf16.mxu0 0
      %2050 = vmatpush1.bf16.msra.mxu0 0
      %2051 = vmatprep.subr.bf16.mxu0 0
      %2052 = vmatpush1.bf16.msra.mxu0 0
      %2053 = vmatprep.subr.bf16.mxu0 0
      %2054 = vmatpush1.bf16.msra.mxu0 0
      %2055 = vmatprep.subr.bf16.mxu0 0
      %2056 = vmatpush1.bf16.msra.mxu0 0
      %2057 = vmatprep.subr.bf16.mxu0 0
      %2058 = vmatpush1.bf16.msra.mxu0 0
      %2059 = vmatprep.subr.bf16.mxu0 0
      %2060 = vmatpush1.bf16.msra.mxu0 0
      %2061 = vmatprep.mubr.bf16.mxu0 0
      %2062 = vmatmul.mubr.bf16.gmra.mrb[0].mxu0 %v1978
      %v2063 = vpop.f32.mrb[0].mxu0
      %v2064 = vadd.f32 0.0, %v2063
      %v2065 = vpop.f32.mrb[0].mxu0
      %v2066 = vpop.f32.mrb[0].mxu0
      %v2067 = vadd.f32 0.0, %v2066
      %v2068 = vpop.f32.mrb[0].mxu0
      %2069 = vmatprep.mubr.bf16.mxu0 0
      %2070 = vmatmul.mubr.bf16.gmra.mrb[0].mxu0 %v1981
      %v2071 = vpop.f32.mrb[0].mxu0
      %v2072 = vadd.f32 0.0, %v2071
      %v2073 = vpop.f32.mrb[0].mxu0
      %v2074 = vpop.f32.mrb[0].mxu0
      %v2075 = vadd.f32 0.0, %v2074
      %v2076 = vpop.f32.mrb[0].mxu0
      %2077 = vmatprep.mubr.bf16.mxu0 0
      %2078 = vmatmul.mubr.bf16.gmra.mrb[0].mxu0 %v1984
      %v2079 = vpop.f32.mrb[0].mxu0
      %v2080 = vadd.f32 0.0, %v2079
      %v2081 = vpop.f32.mrb[0].mxu0
      %v2082 = vpop.f32.mrb[0].mxu0
      %v2083 = vadd.f32 0.0, %v2082
      %v2084 = vpop.f32.mrb[0].mxu0
      %2085 = vmatprep.mubr.bf16.mxu0 0
      %2086 = vmatmul.mubr.bf16.gmra.mrb[0].mxu0 %v1987
      %v2087 = vpop.f32.mrb[0].mxu0
      %v2088 = vadd.f32 0.0, %v2087
      %v2089 = vpop.f32.mrb[0].mxu0
      %v2090 = vpop.f32.mrb[0].mxu0
      %v2091 = vadd.f32 0.0, %v2090
      %v2092 = vpop.f32.mrb[0].mxu0
      %2093 = vmatprep.mubr.bf16.mxu0 0
      %2094 = vmatmul.mubr.bf16.gmra.mrb[0].mxu0 %v1990
      %v2095 = vpop.f32.mrb[0].mxu0
      %v2096 = vadd.f32 0.0, %v2095
      %v2097 = vpop.f32.mrb[0].mxu0
      %v2098 = vpop.f32.mrb[0].mxu0
      %v2099 = vadd.f32 0.0, %v2098
      %v2100 = vpop.f32.mrb[0].mxu0
      %2101 = vmatprep.mubr.bf16.mxu0 0
      %2102 = vmatmul.mubr.bf16.gmra.mrb[0].mxu0 %v1993
      %v2103 = vpop.f32.mrb[0].mxu0
      %v2104 = vadd.f32 0.0, %v2103
      %v2105 = vpop.f32.mrb[0].mxu0
      %v2106 = vpop.f32.mrb[0].mxu0
      %v2107 = vadd.f32 0.0, %v2106
      %v2108 = vpop.f32.mrb[0].mxu0
      %2109 = vmatprep.mubr.bf16.mxu0 0
      %2110 = vmatmul.mubr.bf16.gmra.mrb[0].mxu0 %v1996
      %v2111 = vpop.f32.mrb[0].mxu0
      %v2112 = vadd.f32 0.0, %v2111
      %v2113 = vpop.f32.mrb[0].mxu0
      %v2114 = vpop.f32.mrb[0].mxu0
      %v2115 = vadd.f32 0.0, %v2114
      %v2116 = vpop.f32.mrb[0].mxu0
      %2117 = vmatprep.mubr.bf16.mxu0 0
      %2118 = vmatmul.mubr.bf16.gmra.mrb[0].mxu0 %v1999
      %v2119 = vpop.f32.mrb[0].mxu0
      %v2120 = vadd.f32 0.0, %v2119
      %v2121 = vpop.f32.mrb[0].mxu0
      %v2122 = vpop.f32.mrb[0].mxu0
      %v2123 = vadd.f32 0.0, %v2122
      %v2124 = vpop.f32.mrb[0].mxu0
      %2125 = vmatprep.mubr.bf16.mxu0 0
      %2126 = vmatmul.mubr.bf16.gmra.mrb[0].mxu0 %v2002
      %v2127 = vpop.f32.mrb[0].mxu0
      %v2128 = vadd.f32 0.0, %v2127
      %v2129 = vpop.f32.mrb[0].mxu0
      %v2130 = vpop.f32.mrb[0].mxu0
      %v2131 = vadd.f32 0.0, %v2130
      %v2132 = vpop.f32.mrb[0].mxu0
      %2133 = vmatprep.mubr.bf16.mxu0 0
      %2134 = vmatmul.mubr.bf16.gmra.mrb[0].mxu0 %v2005
      %v2135 = vpop.f32.mrb[0].mxu0
      %v2136 = vadd.f32 0.0, %v2135
      %v2137 = vpop.f32.mrb[0].mxu0
      %v2138 = vpop.f32.mrb[0].mxu0
      %v2139 = vadd.f32 0.0, %v2138
      %v2140 = vpop.f32.mrb[0].mxu0
      %2141 = vmatprep.mubr.bf16.mxu0 0
      %2142 = vmatmul.mubr.bf16.gmra.mrb[0].mxu0 %v2008
      %v2143 = vpop.f32.mrb[0].mxu0
      %v2144 = vadd.f32 0.0, %v2143
      %v2145 = vpop.f32.mrb[0].mxu0
      %v2146 = vpop.f32.mrb[0].mxu0
      %v2147 = vadd.f32 0.0, %v2146
      %v2148 = vpop.f32.mrb[0].mxu0
      %2149 = vmatprep.mubr.bf16.mxu0 0
      %2150 = vmatmul.mubr.bf16.gmra.mrb[0].mxu0 %v2011
      %v2151 = vpop.f32.mrb[0].mxu0
      %v2152 = vadd.f32 0.0, %v2151
      %v2153 = vpop.f32.mrb[0].mxu0
      %v2154 = vpop.f32.mrb[0].mxu0
      %v2155 = vadd.f32 0.0, %v2154
      %v2156 = vpop.f32.mrb[0].mxu0
      %2157 = vmatprep.mubr.bf16.mxu0 0
      %2158 = vmatmul.mubr.bf16.gmra.mrb[0].mxu0 %v2014
      %v2159 = vpop.f32.mrb[0].mxu0
      %v2160 = vadd.f32 0.0, %v2159
      %v2161 = vpop.f32.mrb[0].mxu0
      %v2162 = vpop.f32.mrb[0].mxu0
      %v2163 = vadd.f32 0.0, %v2162
      %v2164 = vpop.f32.mrb[0].mxu0
      %2165 = vmatprep.mubr.bf16.mxu0 0
      %2166 = vmatmul.mubr.bf16.gmra.mrb[0].mxu0 %v2017
      %v2167 = vpop.f32.mrb[0].mxu0
      %v2168 = vadd.f32 0.0, %v2167
      %v2169 = vpop.f32.mrb[0].mxu0
      %v2170 = vpop.f32.mrb[0].mxu0
      %v2171 = vadd.f32 0.0, %v2170
      %v2172 = vpop.f32.mrb[0].mxu0
      %2173 = vmatprep.mubr.bf16.mxu0 0
      %2174 = vmatmul.mubr.bf16.gmra.mrb[0].mxu0 %v2020
      %v2175 = vpop.f32.mrb[0].mxu0
      %v2176 = vadd.f32 0.0, %v2175
      %v2177 = vpop.f32.mrb[0].mxu0
      %v2178 = vpop.f32.mrb[0].mxu0
      %v2179 = vadd.f32 0.0, %v2178
      %v2180 = vpop.f32.mrb[0].mxu0
      %2181 = vmatprep.mubr.bf16.mxu0 0
      %2182 = vmatmul.mubr.bf16.gmra.mrb[0].mxu0 %v2023
      %v2183 = vpop.f32.mrb[0].mxu0
      %v2184 = vadd.f32 0.0, %v2183
      %v2185 = vpop.f32.mrb[0].mxu0
      %v2186 = vpop.f32.mrb[0].mxu0
      %v2187 = vadd.f32 0.0, %v2186
      %v2188 = vpop.f32.mrb[0].mxu0
      %2189 = vdwg.mxu0
      %v2190 = vadd.f32 %v1908, %v2064
      %v2191 = vadd.f32 %v1909, %v2067
      %v2192 = vadd.f32 %v1910, %v2072
      %v2193 = vadd.f32 %v1911, %v2075
      %v2194 = vadd.f32 %v1912, %v2080
      %v2195 = vadd.f32 %v1913, %v2083
      %v2196 = vadd.f32 %v1914, %v2088
      %v2197 = vadd.f32 %v1915, %v2091
      %v2198 = vadd.f32 %v1916, %v2096
      %v2199 = vadd.f32 %v1917, %v2099
      %v2200 = vadd.f32 %v1918, %v2104
      %v2201 = vadd.f32 %v1919, %v2107
      %v2202 = vadd.f32 %v1920, %v2112
      %v2203 = vadd.f32 %v1921, %v2115
      %v2204 = vadd.f32 %v1922, %v2120
      %v2205 = vadd.f32 %v1923, %v2123
      %v2206 = vadd.f32 %v1924, %v2128
      %v2207 = vadd.f32 %v1925, %v2131
      %v2208 = vadd.f32 %v1926, %v2136
      %v2209 = vadd.f32 %v1927, %v2139
      %v2210 = vadd.f32 %v1928, %v2144
      %v2211 = vadd.f32 %v1929, %v2147
      %v2212 = vadd.f32 %v1930, %v2152
      %v2213 = vadd.f32 %v1931, %v2155
      %v2214 = vadd.f32 %v1932, %v2160
      %v2215 = vadd.f32 %v1933, %v2163
      %v2216 = vadd.f32 %v1934, %v2168
      %v2217 = vadd.f32 %v1935, %v2171
      %v2218 = vadd.f32 %v1936, %v2176
      %v2219 = vadd.f32 %v1937, %v2179
      %v2220 = vadd.f32 %v1938, %v2184
      %v2221 = vadd.f32 %v1939, %v2187
      %2222 = vst.msk [vmem:[#allocation2] sm:$0xff] %vm205, %v2190
      %2223 = vst.msk [vmem:[#allocation2 + $0x8] sm:$0xff] %vm205, %v2191
      %2224 = vst.msk [vmem:[#allocation2 + $0x10] sm:$0xff] %vm205, %v2192
      %2225 = vst.msk [vmem:[#allocation2 + $0x18] sm:$0xff] %vm205, %v2193
      %2226 = vst.msk [vmem:[#allocation2 + $0x20] sm:$0xff] %vm205, %v2194
      %2227 = vst.msk [vmem:[#allocation2 + $0x28] sm:$0xff] %vm205, %v2195
      %2228 = vst.msk [vmem:[#allocation2 + $0x30] sm:$0xff] %vm205, %v2196
      %2229 = vst.msk [vmem:[#allocation2 + $0x38] sm:$0xff] %vm205, %v2197
      %2230 = vst.msk [vmem:[#allocation2 + $0x40] sm:$0xff] %vm205, %v2198
      %2231 = vst.msk [vmem:[#allocation2 + $0x48] sm:$0xff] %vm205, %v2199
      %2232 = vst.msk [vmem:[#allocation2 + $0x50] sm:$0xff] %vm205, %v2200
      %2233 = vst.msk [vmem:[#allocation2 + $0x58] sm:$0xff] %vm205, %v2201
      %2234 = vst.msk [vmem:[#allocation2 + $0x60] sm:$0xff] %vm205, %v2202
      %2235 = vst.msk [vmem:[#allocation2 + $0x68] sm:$0xff] %vm205, %v2203
      %2236 = vst.msk [vmem:[#allocation2 + $0x70] sm:$0xff] %vm205, %v2204
      %2237 = vst.msk [vmem:[#allocation2 + $0x78] sm:$0xff] %vm205, %v2205
      %2238 = vst.msk [vmem:[#allocation2 + $0x80] sm:$0xff] %vm205, %v2206
      %2239 = vst.msk [vmem:[#allocation2 + $0x88] sm:$0xff] %vm205, %v2207
      %2240 = vst.msk [vmem:[#allocation2 + $0x90] sm:$0xff] %vm205, %v2208
      %2241 = vst.msk [vmem:[#allocation2 + $0x98] sm:$0xff] %vm205, %v2209
      %2242 = vst.msk [vmem:[#allocation2 + $0xa0] sm:$0xff] %vm205, %v2210
      %2243 = vst.msk [vmem:[#allocation2 + $0xa8] sm:$0xff] %vm205, %v2211
      %2244 = vst.msk [vmem:[#allocation2 + $0xb0] sm:$0xff] %vm205, %v2212
      %2245 = vst.msk [vmem:[#allocation2 + $0xb8] sm:$0xff] %vm205, %v2213
      %2246 = vst.msk [vmem:[#allocation2 + $0xc0] sm:$0xff] %vm205, %v2214
      %2247 = vst.msk [vmem:[#allocation2 + $0xc8] sm:$0xff] %vm205, %v2215
      %2248 = vst.msk [vmem:[#allocation2 + $0xd0] sm:$0xff] %vm205, %v2216
      %2249 = vst.msk [vmem:[#allocation2 + $0xd8] sm:$0xff] %vm205, %v2217
      %2250 = vst.msk [vmem:[#allocation2 + $0xe0] sm:$0xff] %vm205, %v2218
      %2251 = vst.msk [vmem:[#allocation2 + $0xe8] sm:$0xff] %vm205, %v2219
      %2252 = vst.msk [vmem:[#allocation2 + $0xf0] sm:$0xff] %vm205, %v2220
      %2253 = vst.msk [vmem:[#allocation2 + $0xf8] sm:$0xff] %vm205, %v2221
      %s2254 = sadd.s32 %s197, 1
      %s2255 = smul.u32 %s2254, 20
      %s2256 = smul.addr %s2255, 4
      %s2257 = scalar_lea.vmem %s184, %s2256
      %v2258 = vld [vmem:[%s2257] sm:$0xf]
      %v2259 = vld [vmem:[%s2257 + $0x4] sm:$0x1]
      %v2260 = vld [vmem:[%s2257 + $0x8] sm:$0xf]
      %v2261 = vld [vmem:[%s2257 + $0xc] sm:$0x1]
      %v2262 = vld [vmem:[%s2257 + $0x10] sm:$0xf]
      %v2263 = vld [vmem:[%s2257 + $0x14] sm:$0x1]
      %v2264 = vld [vmem:[%s2257 + $0x18] sm:$0xf]
      %v2265 = vld [vmem:[%s2257 + $0x1c] sm:$0x1]
      %v2266 = vld [vmem:[%s2257 + $0x20] sm:$0xf]
      %v2267 = vld [vmem:[%s2257 + $0x24] sm:$0x1]
      %v2268 = vld [vmem:[%s2257 + $0x28] sm:$0xf]
      %v2269 = vld [vmem:[%s2257 + $0x2c] sm:$0x1]
      %v2270 = vld [vmem:[%s2257 + $0x30] sm:$0xf]
      %v2271 = vld [vmem:[%s2257 + $0x34] sm:$0x1]
      %v2272 = vld [vmem:[%s2257 + $0x38] sm:$0xf]
      %v2273 = vld [vmem:[%s2257 + $0x3c] sm:$0x1]
      %v2274 = vld [vmem:[%s2257 + $0x40] sm:$0xf]
      %v2275 = vld [vmem:[%s2257 + $0x44] sm:$0x1]
      %v2276 = vld [vmem:[%s2257 + $0x48] sm:$0xf]
      %v2277 = vld [vmem:[%s2257 + $0x4c] sm:$0x1]
      %v2278 = vld [vmem:[%s2257 + $0x50] sm:$0xf]
      %v2279 = vld [vmem:[%s2257 + $0x54] sm:$0x1]
      %v2280 = vld [vmem:[%s2257 + $0x58] sm:$0xf]
      %v2281 = vld [vmem:[%s2257 + $0x5c] sm:$0x1]
      %v2282 = vld [vmem:[%s2257 + $0x60] sm:$0xf]
      %v2283 = vld [vmem:[%s2257 + $0x64] sm:$0x1]
      %v2284 = vld [vmem:[%s2257 + $0x68] sm:$0xf]
      %v2285 = vld [vmem:[%s2257 + $0x6c] sm:$0x1]
      %v2286 = vld [vmem:[%s2257 + $0x70] sm:$0xf]
      %v2287 = vld [vmem:[%s2257 + $0x74] sm:$0x1]
      %v2288 = vld [vmem:[%s2257 + $0x78] sm:$0xf]
      %v2289 = vld [vmem:[%s2257 + $0x7c] sm:$0x1]
      %v2290 = vld [vmem:[%s2257 + $0x80] sm:$0xf]
      %v2291 = vld [vmem:[%s2257 + $0x84] sm:$0x1]
      %v2292 = vld [vmem:[%s2257 + $0x88] sm:$0xf]
      %v2293 = vld [vmem:[%s2257 + $0x8c] sm:$0x1]
      %v2294 = vld [vmem:[%s2257 + $0x90] sm:$0xf]
      %v2295 = vld [vmem:[%s2257 + $0x94] sm:$0x1]
      %v2296 = vld [vmem:[%s2257 + $0x98] sm:$0xf]
      %v2297 = vld [vmem:[%s2257 + $0x9c] sm:$0x1]
      %v2298 = vld [vmem:[%s2257 + $0xa0] sm:$0xf]
      %v2299 = vld [vmem:[%s2257 + $0xa4] sm:$0x1]
      %v2300 = vld [vmem:[%s2257 + $0xa8] sm:$0xf]
      %v2301 = vld [vmem:[%s2257 + $0xac] sm:$0x1]
      %v2302 = vld [vmem:[%s2257 + $0xb0] sm:$0xf]
      %v2303 = vld [vmem:[%s2257 + $0xb4] sm:$0x1]
      %v2304 = vld [vmem:[%s2257 + $0xb8] sm:$0xf]
      %v2305 = vld [vmem:[%s2257 + $0xbc] sm:$0x1]
      %v2306 = vld [vmem:[%s2257 + $0xc0] sm:$0xf]
      %v2307 = vld [vmem:[%s2257 + $0xc4] sm:$0x1]
      %v2308 = vld [vmem:[%s2257 + $0xc8] sm:$0xf]
      %v2309 = vld [vmem:[%s2257 + $0xcc] sm:$0x1]
      %v2310 = vld [vmem:[%s2257 + $0xd0] sm:$0xf]
      %v2311 = vld [vmem:[%s2257 + $0xd4] sm:$0x1]
      %v2312 = vld [vmem:[%s2257 + $0xd8] sm:$0xf]
      %v2313 = vld [vmem:[%s2257 + $0xdc] sm:$0x1]
      %v2314 = vld [vmem:[%s2257 + $0xe0] sm:$0xf]
      %v2315 = vld [vmem:[%s2257 + $0xe4] sm:$0x1]
      %v2316 = vld [vmem:[%s2257 + $0xe8] sm:$0xf]
      %v2317 = vld [vmem:[%s2257 + $0xec] sm:$0x1]
      %v2318 = vld [vmem:[%s2257 + $0xf0] sm:$0xf]
      %v2319 = vld [vmem:[%s2257 + $0xf4] sm:$0x1]
      %v2320 = vld [vmem:[%s2257 + $0xf8] sm:$0xf]
      %v2321 = vld [vmem:[%s2257 + $0xfc] sm:$0x1]
      %v2322 = vld [vmem:[%s2257 + $0x100] sm:$0xf]
      %v2323 = vld [vmem:[%s2257 + $0x104] sm:$0x1]
      %v2324 = vld [vmem:[%s2257 + $0x108] sm:$0xf]
      %v2325 = vld [vmem:[%s2257 + $0x10c] sm:$0x1]
      %v2326 = vld [vmem:[%s2257 + $0x110] sm:$0xf]
      %v2327 = vld [vmem:[%s2257 + $0x114] sm:$0x1]
      %v2328 = vld [vmem:[%s2257 + $0x118] sm:$0xf]
      %v2329 = vld [vmem:[%s2257 + $0x11c] sm:$0x1]
      %v2330 = vld [vmem:[%s2257 + $0x120] sm:$0xf]
      %v2331 = vld [vmem:[%s2257 + $0x124] sm:$0x1]
      %v2332 = vld [vmem:[%s2257 + $0x128] sm:$0xf]
      %v2333 = vld [vmem:[%s2257 + $0x12c] sm:$0x1]
      %v2334 = vld [vmem:[%s2257 + $0x130] sm:$0xf]
      %v2335 = vld [vmem:[%s2257 + $0x134] sm:$0x1]
      %v2336 = vld [vmem:[%s2257 + $0x138] sm:$0xf]
      %v2337 = vld [vmem:[%s2257 + $0x13c] sm:$0x1]
      %v2370 = vunpack.c.l.b16 %v2258
      %v2371 = vunpack.c.l.b16 %v2260
      %v2372 = vunpack.c.l.b16 %v2262
      %v2373 = vunpack.c.l.b16 %v2264
      %v2374 = vunpack.c.l.b16 %v2266
      %v2375 = vunpack.c.l.b16 %v2268
      %v2376 = vunpack.c.l.b16 %v2270
      %v2377 = vunpack.c.l.b16 %v2272
      %v2378 = vunpack.c.l.b16 %v2278
      %v2379 = vunpack.c.l.b16 %v2280
      %v2380 = vunpack.c.l.b16 %v2282
      %v2381 = vunpack.c.l.b16 %v2284
      %v2382 = vunpack.c.l.b16 %v2286
      %v2383 = vunpack.c.l.b16 %v2288
      %v2384 = vunpack.c.l.b16 %v2290
      %v2385 = vunpack.c.l.b16 %v2292
      %v2386 = vunpack.c.l.b16 %v2298
      %v2387 = vunpack.c.l.b16 %v2300
      %v2388 = vunpack.c.l.b16 %v2302
      %v2389 = vunpack.c.l.b16 %v2304
      %v2390 = vunpack.c.l.b16 %v2306
      %v2391 = vunpack.c.l.b16 %v2308
      %v2392 = vunpack.c.l.b16 %v2310
      %v2393 = vunpack.c.l.b16 %v2312
      %v2394 = vunpack.c.l.b16 %v2318
      %v2395 = vunpack.c.l.b16 %v2320
      %v2396 = vunpack.c.l.b16 %v2322
      %v2397 = vunpack.c.l.b16 %v2324
      %v2398 = vunpack.c.l.b16 %v2326
      %v2399 = vunpack.c.l.b16 %v2328
      %v2400 = vunpack.c.l.b16 %v2330
      %v2401 = vunpack.c.l.b16 %v2332
      %v2402 = vpack.c.b16 %v2371, %v2370
      %v2403 = vpack.c.b16 %v2373, %v2372
      %v2404 = vpack.c.b16 %v2375, %v2374
      %v2405 = vpack.c.b16 %v2377, %v2376
      %v2406 = vpack.c.b16 %v2379, %v2378
      %v2407 = vpack.c.b16 %v2381, %v2380
      %v2408 = vpack.c.b16 %v2383, %v2382
      %v2409 = vpack.c.b16 %v2385, %v2384
      %v2410 = vpack.c.b16 %v2387, %v2386
      %v2411 = vpack.c.b16 %v2389, %v2388
      %v2412 = vpack.c.b16 %v2391, %v2390
      %v2413 = vpack.c.b16 %v2393, %v2392
      %v2414 = vpack.c.b16 %v2395, %v2394
      %v2415 = vpack.c.b16 %v2397, %v2396
      %v2416 = vpack.c.b16 %v2399, %v2398
      %v2417 = vpack.c.b16 %v2401, %v2400
      %2434 = vst.msk [vmem:[#allocation3] sm:$0xff] %vm417, %v2402
      %2435 = vst.msk [vmem:[#allocation3 + $0x8] sm:$0xff] %vm417, %v2403
      %2436 = vst.msk [vmem:[#allocation3 + $0x10] sm:$0xff] %vm417, %v2404
      %2437 = vst.msk [vmem:[#allocation3 + $0x18] sm:$0xff] %vm417, %v2405
      %2438 = vst.msk [vmem:[#allocation3 + $0x20] sm:$0xff] %vm417, %v2406
      %2439 = vst.msk [vmem:[#allocation3 + $0x28] sm:$0xff] %vm417, %v2407
      %2440 = vst.msk [vmem:[#allocation3 + $0x30] sm:$0xff] %vm417, %v2408
      %2441 = vst.msk [vmem:[#allocation3 + $0x38] sm:$0xff] %vm417, %v2409
      %2442 = vst.msk [vmem:[#allocation3 + $0x40] sm:$0xff] %vm417, %v2410
      %2443 = vst.msk [vmem:[#allocation3 + $0x48] sm:$0xff] %vm417, %v2411
      %2444 = vst.msk [vmem:[#allocation3 + $0x50] sm:$0xff] %vm417, %v2412
      %2445 = vst.msk [vmem:[#allocation3 + $0x58] sm:$0xff] %vm417, %v2413
      %2446 = vst.msk [vmem:[#allocation3 + $0x60] sm:$0xff] %vm417, %v2414
      %2447 = vst.msk [vmem:[#allocation3 + $0x68] sm:$0xff] %vm417, %v2415
      %2448 = vst.msk [vmem:[#allocation3 + $0x70] sm:$0xff] %vm417, %v2416
      %2449 = vst.msk [vmem:[#allocation3 + $0x78] sm:$0xff] %vm417, %v2417
      %v2451 = vshrl.u32 %v2258, 16
      %v2453 = vrot.slane %v2451, 4
      %v2454 = vshll.u32 %v2258, 16
      %v2456 = vrot.slane %v2454, 5
      %v2457 = vor.u32 %v2453, %v2456
      %v2458 = vrot.slane %v2457, 4
      %v2460 = vshll.u32 %v2259, 16
      %v2462 = vrot.slane %v2460, 5
      %v2463 = vsel %vm436, %v2458, %v2462
      %v2465 = vshrl.u32 %v2260, 16
      %v2467 = vrot.slane %v2465, 4
      %v2468 = vshll.u32 %v2260, 16
      %v2470 = vrot.slane %v2468, 5
      %v2471 = vor.u32 %v2467, %v2470
      %v2472 = vrot.slane %v2471, 4
      %v2474 = vshll.u32 %v2261, 16
      %v2476 = vrot.slane %v2474, 5
      %v2477 = vsel %vm436, %v2472, %v2476
      %v2479 = vshrl.u32 %v2262, 16
      %v2481 = vrot.slane %v2479, 4
      %v2482 = vshll.u32 %v2262, 16
      %v2484 = vrot.slane %v2482, 5
      %v2485 = vor.u32 %v2481, %v2484
      %v2486 = vrot.slane %v2485, 4
      %v2488 = vshll.u32 %v2263, 16
      %v2490 = vrot.slane %v2488, 5
      %v2491 = vsel %vm436, %v2486, %v2490
      %v2493 = vshrl.u32 %v2264, 16
      %v2495 = vrot.slane %v2493, 4
      %v2496 = vshll.u32 %v2264, 16
      %v2498 = vrot.slane %v2496, 5
      %v2499 = vor.u32 %v2495, %v2498
      %v2500 = vrot.slane %v2499, 4
      %v2502 = vshll.u32 %v2265, 16
      %v2504 = vrot.slane %v2502, 5
      %v2505 = vsel %vm436, %v2500, %v2504
      %v2507 = vshrl.u32 %v2266, 16
      %v2509 = vrot.slane %v2507, 4
      %v2510 = vshll.u32 %v2266, 16
      %v2512 = vrot.slane %v2510, 5
      %v2513 = vor.u32 %v2509, %v2512
      %v2514 = vrot.slane %v2513, 4
      %v2516 = vshll.u32 %v2267, 16
      %v2518 = vrot.slane %v2516, 5
      %v2519 = vsel %vm436, %v2514, %v2518
      %v2521 = vshrl.u32 %v2268, 16
      %v2523 = vrot.slane %v2521, 4
      %v2524 = vshll.u32 %v2268, 16
      %v2526 = vrot.slane %v2524, 5
      %v2527 = vor.u32 %v2523, %v2526
      %v2528 = vrot.slane %v2527, 4
      %v2530 = vshll.u32 %v2269, 16
      %v2532 = vrot.slane %v2530, 5
      %v2533 = vsel %vm436, %v2528, %v2532
      %v2535 = vshrl.u32 %v2270, 16
      %v2537 = vrot.slane %v2535, 4
      %v2538 = vshll.u32 %v2270, 16
      %v2540 = vrot.slane %v2538, 5
      %v2541 = vor.u32 %v2537, %v2540
      %v2542 = vrot.slane %v2541, 4
      %v2544 = vshll.u32 %v2271, 16
      %v2546 = vrot.slane %v2544, 5
      %v2547 = vsel %vm436, %v2542, %v2546
      %v2549 = vshrl.u32 %v2272, 16
      %v2551 = vrot.slane %v2549, 4
      %v2552 = vshll.u32 %v2272, 16
      %v2554 = vrot.slane %v2552, 5
      %v2555 = vor.u32 %v2551, %v2554
      %v2556 = vrot.slane %v2555, 4
      %v2558 = vshll.u32 %v2273, 16
      %v2560 = vrot.slane %v2558, 5
      %v2561 = vsel %vm436, %v2556, %v2560
      %v2563 = vshrl.u32 %v2278, 16
      %v2565 = vrot.slane %v2563, 4
      %v2566 = vshll.u32 %v2278, 16
      %v2568 = vrot.slane %v2566, 5
      %v2569 = vor.u32 %v2565, %v2568
      %v2570 = vrot.slane %v2569, 4
      %v2572 = vshll.u32 %v2279, 16
      %v2574 = vrot.slane %v2572, 5
      %v2575 = vsel %vm436, %v2570, %v2574
      %v2577 = vshrl.u32 %v2280, 16
      %v2579 = vrot.slane %v2577, 4
      %v2580 = vshll.u32 %v2280, 16
      %v2582 = vrot.slane %v2580, 5
      %v2583 = vor.u32 %v2579, %v2582
      %v2584 = vrot.slane %v2583, 4
      %v2586 = vshll.u32 %v2281, 16
      %v2588 = vrot.slane %v2586, 5
      %v2589 = vsel %vm436, %v2584, %v2588
      %v2591 = vshrl.u32 %v2282, 16
      %v2593 = vrot.slane %v2591, 4
      %v2594 = vshll.u32 %v2282, 16
      %v2596 = vrot.slane %v2594, 5
      %v2597 = vor.u32 %v2593, %v2596
      %v2598 = vrot.slane %v2597, 4
      %v2600 = vshll.u32 %v2283, 16
      %v2602 = vrot.slane %v2600, 5
      %v2603 = vsel %vm436, %v2598, %v2602
      %v2605 = vshrl.u32 %v2284, 16
      %v2607 = vrot.slane %v2605, 4
      %v2608 = vshll.u32 %v2284, 16
      %v2610 = vrot.slane %v2608, 5
      %v2611 = vor.u32 %v2607, %v2610
      %v2612 = vrot.slane %v2611, 4
      %v2614 = vshll.u32 %v2285, 16
      %v2616 = vrot.slane %v2614, 5
      %v2617 = vsel %vm436, %v2612, %v2616
      %v2619 = vshrl.u32 %v2286, 16
      %v2621 = vrot.slane %v2619, 4
      %v2622 = vshll.u32 %v2286, 16
      %v2624 = vrot.slane %v2622, 5
      %v2625 = vor.u32 %v2621, %v2624
      %v2626 = vrot.slane %v2625, 4
      %v2628 = vshll.u32 %v2287, 16
      %v2630 = vrot.slane %v2628, 5
      %v2631 = vsel %vm436, %v2626, %v2630
      %v2633 = vshrl.u32 %v2288, 16
      %v2635 = vrot.slane %v2633, 4
      %v2636 = vshll.u32 %v2288, 16
      %v2638 = vrot.slane %v2636, 5
      %v2639 = vor.u32 %v2635, %v2638
      %v2640 = vrot.slane %v2639, 4
      %v2642 = vshll.u32 %v2289, 16
      %v2644 = vrot.slane %v2642, 5
      %v2645 = vsel %vm436, %v2640, %v2644
      %v2647 = vshrl.u32 %v2290, 16
      %v2649 = vrot.slane %v2647, 4
      %v2650 = vshll.u32 %v2290, 16
      %v2652 = vrot.slane %v2650, 5
      %v2653 = vor.u32 %v2649, %v2652
      %v2654 = vrot.slane %v2653, 4
      %v2656 = vshll.u32 %v2291, 16
      %v2658 = vrot.slane %v2656, 5
      %v2659 = vsel %vm436, %v2654, %v2658
      %v2661 = vshrl.u32 %v2292, 16
      %v2663 = vrot.slane %v2661, 4
      %v2664 = vshll.u32 %v2292, 16
      %v2666 = vrot.slane %v2664, 5
      %v2667 = vor.u32 %v2663, %v2666
      %v2668 = vrot.slane %v2667, 4
      %v2670 = vshll.u32 %v2293, 16
      %v2672 = vrot.slane %v2670, 5
      %v2673 = vsel %vm436, %v2668, %v2672
      %v2675 = vshrl.u32 %v2298, 16
      %v2677 = vrot.slane %v2675, 4
      %v2678 = vshll.u32 %v2298, 16
      %v2680 = vrot.slane %v2678, 5
      %v2681 = vor.u32 %v2677, %v2680
      %v2682 = vrot.slane %v2681, 4
      %v2684 = vshll.u32 %v2299, 16
      %v2686 = vrot.slane %v2684, 5
      %v2687 = vsel %vm436, %v2682, %v2686
      %v2689 = vshrl.u32 %v2300, 16
      %v2691 = vrot.slane %v2689, 4
      %v2692 = vshll.u32 %v2300, 16
      %v2694 = vrot.slane %v2692, 5
      %v2695 = vor.u32 %v2691, %v2694
      %v2696 = vrot.slane %v2695, 4
      %v2698 = vshll.u32 %v2301, 16
      %v2700 = vrot.slane %v2698, 5
      %v2701 = vsel %vm436, %v2696, %v2700
      %v2703 = vshrl.u32 %v2302, 16
      %v2705 = vrot.slane %v2703, 4
      %v2706 = vshll.u32 %v2302, 16
      %v2708 = vrot.slane %v2706, 5
      %v2709 = vor.u32 %v2705, %v2708
      %v2710 = vrot.slane %v2709, 4
      %v2712 = vshll.u32 %v2303, 16
      %v2714 = vrot.slane %v2712, 5
      %v2715 = vsel %vm436, %v2710, %v2714
      %v2717 = vshrl.u32 %v2304, 16
      %v2719 = vrot.slane %v2717, 4
      %v2720 = vshll.u32 %v2304, 16
      %v2722 = vrot.slane %v2720, 5
      %v2723 = vor.u32 %v2719, %v2722
      %v2724 = vrot.slane %v2723, 4
      %v2726 = vshll.u32 %v2305, 16
      %v2728 = vrot.slane %v2726, 5
      %v2729 = vsel %vm436, %v2724, %v2728
      %v2731 = vshrl.u32 %v2306, 16
      %v2733 = vrot.slane %v2731, 4
      %v2734 = vshll.u32 %v2306, 16
      %v2736 = vrot.slane %v2734, 5
      %v2737 = vor.u32 %v2733, %v2736
      %v2738 = vrot.slane %v2737, 4
      %v2740 = vshll.u32 %v2307, 16
      %v2742 = vrot.slane %v2740, 5
      %v2743 = vsel %vm436, %v2738, %v2742
      %v2745 = vshrl.u32 %v2308, 16
      %v2747 = vrot.slane %v2745, 4
      %v2748 = vshll.u32 %v2308, 16
      %v2750 = vrot.slane %v2748, 5
      %v2751 = vor.u32 %v2747, %v2750
      %v2752 = vrot.slane %v2751, 4
      %v2754 = vshll.u32 %v2309, 16
      %v2756 = vrot.slane %v2754, 5
      %v2757 = vsel %vm436, %v2752, %v2756
      %v2759 = vshrl.u32 %v2310, 16
      %v2761 = vrot.slane %v2759, 4
      %v2762 = vshll.u32 %v2310, 16
      %v2764 = vrot.slane %v2762, 5
      %v2765 = vor.u32 %v2761, %v2764
      %v2766 = vrot.slane %v2765, 4
      %v2768 = vshll.u32 %v2311, 16
      %v2770 = vrot.slane %v2768, 5
      %v2771 = vsel %vm436, %v2766, %v2770
      %v2773 = vshrl.u32 %v2312, 16
      %v2775 = vrot.slane %v2773, 4
      %v2776 = vshll.u32 %v2312, 16
      %v2778 = vrot.slane %v2776, 5
      %v2779 = vor.u32 %v2775, %v2778
      %v2780 = vrot.slane %v2779, 4
      %v2782 = vshll.u32 %v2313, 16
      %v2784 = vrot.slane %v2782, 5
      %v2785 = vsel %vm436, %v2780, %v2784
      %v2787 = vshrl.u32 %v2318, 16
      %v2789 = vrot.slane %v2787, 4
      %v2790 = vshll.u32 %v2318, 16
      %v2792 = vrot.slane %v2790, 5
      %v2793 = vor.u32 %v2789, %v2792
      %v2794 = vrot.slane %v2793, 4
      %v2796 = vshll.u32 %v2319, 16
      %v2798 = vrot.slane %v2796, 5
      %v2799 = vsel %vm436, %v2794, %v2798
      %v2801 = vshrl.u32 %v2320, 16
      %v2803 = vrot.slane %v2801, 4
      %v2804 = vshll.u32 %v2320, 16
      %v2806 = vrot.slane %v2804, 5
      %v2807 = vor.u32 %v2803, %v2806
      %v2808 = vrot.slane %v2807, 4
      %v2810 = vshll.u32 %v2321, 16
      %v2812 = vrot.slane %v2810, 5
      %v2813 = vsel %vm436, %v2808, %v2812
      %v2815 = vshrl.u32 %v2322, 16
      %v2817 = vrot.slane %v2815, 4
      %v2818 = vshll.u32 %v2322, 16
      %v2820 = vrot.slane %v2818, 5
      %v2821 = vor.u32 %v2817, %v2820
      %v2822 = vrot.slane %v2821, 4
      %v2824 = vshll.u32 %v2323, 16
      %v2826 = vrot.slane %v2824, 5
      %v2827 = vsel %vm436, %v2822, %v2826
      %v2829 = vshrl.u32 %v2324, 16
      %v2831 = vrot.slane %v2829, 4
      %v2832 = vshll.u32 %v2324, 16
      %v2834 = vrot.slane %v2832, 5
      %v2835 = vor.u32 %v2831, %v2834
      %v2836 = vrot.slane %v2835, 4
      %v2838 = vshll.u32 %v2325, 16
      %v2840 = vrot.slane %v2838, 5
      %v2841 = vsel %vm436, %v2836, %v2840
      %v2843 = vshrl.u32 %v2326, 16
      %v2845 = vrot.slane %v2843, 4
      %v2846 = vshll.u32 %v2326, 16
      %v2848 = vrot.slane %v2846, 5
      %v2849 = vor.u32 %v2845, %v2848
      %v2850 = vrot.slane %v2849, 4
      %v2852 = vshll.u32 %v2327, 16
      %v2854 = vrot.slane %v2852, 5
      %v2855 = vsel %vm436, %v2850, %v2854
      %v2857 = vshrl.u32 %v2328, 16
      %v2859 = vrot.slane %v2857, 4
      %v2860 = vshll.u32 %v2328, 16
      %v2862 = vrot.slane %v2860, 5
      %v2863 = vor.u32 %v2859, %v2862
      %v2864 = vrot.slane %v2863, 4
      %v2866 = vshll.u32 %v2329, 16
      %v2868 = vrot.slane %v2866, 5
      %v2869 = vsel %vm436, %v2864, %v2868
      %v2871 = vshrl.u32 %v2330, 16
      %v2873 = vrot.slane %v2871, 4
      %v2874 = vshll.u32 %v2330, 16
      %v2876 = vrot.slane %v2874, 5
      %v2877 = vor.u32 %v2873, %v2876
      %v2878 = vrot.slane %v2877, 4
      %v2880 = vshll.u32 %v2331, 16
      %v2882 = vrot.slane %v2880, 5
      %v2883 = vsel %vm436, %v2878, %v2882
      %v2885 = vshrl.u32 %v2332, 16
      %v2887 = vrot.slane %v2885, 4
      %v2888 = vshll.u32 %v2332, 16
      %v2890 = vrot.slane %v2888, 5
      %v2891 = vor.u32 %v2887, %v2890
      %v2892 = vrot.slane %v2891, 4
      %v2894 = vshll.u32 %v2333, 16
      %v2896 = vrot.slane %v2894, 5
      %v2897 = vsel %vm436, %v2892, %v2896
      %v2898 = vunpack.c.l.b16 %v2463
      %v2899 = vunpack.c.l.b16 %v2477
      %v2900 = vunpack.c.l.b16 %v2491
      %v2901 = vunpack.c.l.b16 %v2505
      %v2902 = vunpack.c.l.b16 %v2519
      %v2903 = vunpack.c.l.b16 %v2533
      %v2904 = vunpack.c.l.b16 %v2547
      %v2905 = vunpack.c.l.b16 %v2561
      %v2906 = vunpack.c.l.b16 %v2575
      %v2907 = vunpack.c.l.b16 %v2589
      %v2908 = vunpack.c.l.b16 %v2603
      %v2909 = vunpack.c.l.b16 %v2617
      %v2910 = vunpack.c.l.b16 %v2631
      %v2911 = vunpack.c.l.b16 %v2645
      %v2912 = vunpack.c.l.b16 %v2659
      %v2913 = vunpack.c.l.b16 %v2673
      %v2914 = vunpack.c.l.b16 %v2687
      %v2915 = vunpack.c.l.b16 %v2701
      %v2916 = vunpack.c.l.b16 %v2715
      %v2917 = vunpack.c.l.b16 %v2729
      %v2918 = vunpack.c.l.b16 %v2743
      %v2919 = vunpack.c.l.b16 %v2757
      %v2920 = vunpack.c.l.b16 %v2771
      %v2921 = vunpack.c.l.b16 %v2785
      %v2922 = vunpack.c.l.b16 %v2799
      %v2923 = vunpack.c.l.b16 %v2813
      %v2924 = vunpack.c.l.b16 %v2827
      %v2925 = vunpack.c.l.b16 %v2841
      %v2926 = vunpack.c.l.b16 %v2855
      %v2927 = vunpack.c.l.b16 %v2869
      %v2928 = vunpack.c.l.b16 %v2883
      %v2929 = vunpack.c.l.b16 %v2897
      %v2930 = vpack.c.b16 %v2899, %v2898
      %v2931 = vpack.c.b16 %v2901, %v2900
      %v2932 = vpack.c.b16 %v2903, %v2902
      %v2933 = vpack.c.b16 %v2905, %v2904
      %v2934 = vpack.c.b16 %v2907, %v2906
      %v2935 = vpack.c.b16 %v2909, %v2908
      %v2936 = vpack.c.b16 %v2911, %v2910
      %v2937 = vpack.c.b16 %v2913, %v2912
      %v2938 = vpack.c.b16 %v2915, %v2914
      %v2939 = vpack.c.b16 %v2917, %v2916
      %v2940 = vpack.c.b16 %v2919, %v2918
      %v2941 = vpack.c.b16 %v2921, %v2920
      %v2942 = vpack.c.b16 %v2923, %v2922
      %v2943 = vpack.c.b16 %v2925, %v2924
      %v2944 = vpack.c.b16 %v2927, %v2926
      %v2945 = vpack.c.b16 %v2929, %v2928
      %2946 = vrot.lane.b32.xlu0 %v2930, 4
      %v2947 = vpop.permute.xlu0 %2946
      %2948 = vrot.lane.b32.xlu0 %v2931, 4
      %v2949 = vpop.permute.xlu0 %2948
      %2950 = vrot.lane.b32.xlu0 %v2932, 4
      %v2951 = vpop.permute.xlu0 %2950
      %2952 = vrot.lane.b32.xlu0 %v2933, 4
      %v2953 = vpop.permute.xlu0 %2952
      %2954 = vrot.lane.b32.xlu0 %v2934, 4
      %v2955 = vpop.permute.xlu0 %2954
      %2956 = vrot.lane.b32.xlu0 %v2935, 4
      %v2957 = vpop.permute.xlu0 %2956
      %2958 = vrot.lane.b32.xlu0 %v2936, 4
      %v2959 = vpop.permute.xlu0 %2958
      %2960 = vrot.lane.b32.xlu0 %v2937, 4
      %v2961 = vpop.permute.xlu0 %2960
      %2962 = vrot.lane.b32.xlu0 %v2938, 4
      %v2963 = vpop.permute.xlu0 %2962
      %2964 = vrot.lane.b32.xlu0 %v2939, 4
      %v2965 = vpop.permute.xlu0 %2964
      %2966 = vrot.lane.b32.xlu0 %v2940, 4
      %v2967 = vpop.permute.xlu0 %2966
      %2968 = vrot.lane.b32.xlu0 %v2941, 4
      %v2969 = vpop.permute.xlu0 %2968
      %2970 = vrot.lane.b32.xlu0 %v2942, 4
      %v2971 = vpop.permute.xlu0 %2970
      %2972 = vrot.lane.b32.xlu0 %v2943, 4
      %v2973 = vpop.permute.xlu0 %2972
      %2974 = vrot.lane.b32.xlu0 %v2944, 4
      %v2975 = vpop.permute.xlu0 %2974
      %2976 = vrot.lane.b32.xlu0 %v2945, 4
      %v2977 = vpop.permute.xlu0 %2976
      %2994 = vst.msk [vmem:[#allocation3] sm:$0xff] %vm981, %v2947
      %2995 = vst.msk [vmem:[#allocation3 + $0x8] sm:$0xff] %vm981, %v2949
      %2996 = vst.msk [vmem:[#allocation3 + $0x10] sm:$0xff] %vm981, %v2951
      %2997 = vst.msk [vmem:[#allocation3 + $0x18] sm:$0xff] %vm981, %v2953
      %2998 = vst.msk [vmem:[#allocation3 + $0x20] sm:$0xff] %vm981, %v2955
      %2999 = vst.msk [vmem:[#allocation3 + $0x28] sm:$0xff] %vm981, %v2957
      %3000 = vst.msk [vmem:[#allocation3 + $0x30] sm:$0xff] %vm981, %v2959
      %3001 = vst.msk [vmem:[#allocation3 + $0x38] sm:$0xff] %vm981, %v2961
      %3002 = vst.msk [vmem:[#allocation3 + $0x40] sm:$0xff] %vm981, %v2963
      %3003 = vst.msk [vmem:[#allocation3 + $0x48] sm:$0xff] %vm981, %v2965
      %3004 = vst.msk [vmem:[#allocation3 + $0x50] sm:$0xff] %vm981, %v2967
      %3005 = vst.msk [vmem:[#allocation3 + $0x58] sm:$0xff] %vm981, %v2969
      %3006 = vst.msk [vmem:[#allocation3 + $0x60] sm:$0xff] %vm981, %v2971
      %3007 = vst.msk [vmem:[#allocation3 + $0x68] sm:$0xff] %vm981, %v2973
      %3008 = vst.msk [vmem:[#allocation3 + $0x70] sm:$0xff] %vm981, %v2975
      %3009 = vst.msk [vmem:[#allocation3 + $0x78] sm:$0xff] %vm981, %v2977
      %v3042 = vrot.slane %v2258, 5
      %v3043 = vrot.slane %v3042, 4
      %v3044 = vrot.slane %v2259, 5
      %v3045 = vsel %vm1032, %v3043, %v3044
      %v3046 = vrot.slane %v2260, 5
      %v3047 = vrot.slane %v3046, 4
      %v3048 = vrot.slane %v2261, 5
      %v3049 = vsel %vm1032, %v3047, %v3048
      %v3050 = vrot.slane %v2262, 5
      %v3051 = vrot.slane %v3050, 4
      %v3052 = vrot.slane %v2263, 5
      %v3053 = vsel %vm1032, %v3051, %v3052
      %v3054 = vrot.slane %v2264, 5
      %v3055 = vrot.slane %v3054, 4
      %v3056 = vrot.slane %v2265, 5
      %v3057 = vsel %vm1032, %v3055, %v3056
      %v3058 = vrot.slane %v2266, 5
      %v3059 = vrot.slane %v3058, 4
      %v3060 = vrot.slane %v2267, 5
      %v3061 = vsel %vm1032, %v3059, %v3060
      %v3062 = vrot.slane %v2268, 5
      %v3063 = vrot.slane %v3062, 4
      %v3064 = vrot.slane %v2269, 5
      %v3065 = vsel %vm1032, %v3063, %v3064
      %v3066 = vrot.slane %v2270, 5
      %v3067 = vrot.slane %v3066, 4
      %v3068 = vrot.slane %v2271, 5
      %v3069 = vsel %vm1032, %v3067, %v3068
      %v3070 = vrot.slane %v2272, 5
      %v3071 = vrot.slane %v3070, 4
      %v3072 = vrot.slane %v2273, 5
      %v3073 = vsel %vm1032, %v3071, %v3072
      %v3074 = vrot.slane %v2278, 5
      %v3075 = vrot.slane %v3074, 4
      %v3076 = vrot.slane %v2279, 5
      %v3077 = vsel %vm1032, %v3075, %v3076
      %v3078 = vrot.slane %v2280, 5
      %v3079 = vrot.slane %v3078, 4
      %v3080 = vrot.slane %v2281, 5
      %v3081 = vsel %vm1032, %v3079, %v3080
      %v3082 = vrot.slane %v2282, 5
      %v3083 = vrot.slane %v3082, 4
      %v3084 = vrot.slane %v2283, 5
      %v3085 = vsel %vm1032, %v3083, %v3084
      %v3086 = vrot.slane %v2284, 5
      %v3087 = vrot.slane %v3086, 4
      %v3088 = vrot.slane %v2285, 5
      %v3089 = vsel %vm1032, %v3087, %v3088
      %v3090 = vrot.slane %v2286, 5
      %v3091 = vrot.slane %v3090, 4
      %v3092 = vrot.slane %v2287, 5
      %v3093 = vsel %vm1032, %v3091, %v3092
      %v3094 = vrot.slane %v2288, 5
      %v3095 = vrot.slane %v3094, 4
      %v3096 = vrot.slane %v2289, 5
      %v3097 = vsel %vm1032, %v3095, %v3096
      %v3098 = vrot.slane %v2290, 5
      %v3099 = vrot.slane %v3098, 4
      %v3100 = vrot.slane %v2291, 5
      %v3101 = vsel %vm1032, %v3099, %v3100
      %v3102 = vrot.slane %v2292, 5
      %v3103 = vrot.slane %v3102, 4
      %v3104 = vrot.slane %v2293, 5
      %v3105 = vsel %vm1032, %v3103, %v3104
      %v3106 = vrot.slane %v2298, 5
      %v3107 = vrot.slane %v3106, 4
      %v3108 = vrot.slane %v2299, 5
      %v3109 = vsel %vm1032, %v3107, %v3108
      %v3110 = vrot.slane %v2300, 5
      %v3111 = vrot.slane %v3110, 4
      %v3112 = vrot.slane %v2301, 5
      %v3113 = vsel %vm1032, %v3111, %v3112
      %v3114 = vrot.slane %v2302, 5
      %v3115 = vrot.slane %v3114, 4
      %v3116 = vrot.slane %v2303, 5
      %v3117 = vsel %vm1032, %v3115, %v3116
      %v3118 = vrot.slane %v2304, 5
      %v3119 = vrot.slane %v3118, 4
      %v3120 = vrot.slane %v2305, 5
      %v3121 = vsel %vm1032, %v3119, %v3120
      %v3122 = vrot.slane %v2306, 5
      %v3123 = vrot.slane %v3122, 4
      %v3124 = vrot.slane %v2307, 5
      %v3125 = vsel %vm1032, %v3123, %v3124
      %v3126 = vrot.slane %v2308, 5
      %v3127 = vrot.slane %v3126, 4
      %v3128 = vrot.slane %v2309, 5
      %v3129 = vsel %vm1032, %v3127, %v3128
      %v3130 = vrot.slane %v2310, 5
      %v3131 = vrot.slane %v3130, 4
      %v3132 = vrot.slane %v2311, 5
      %v3133 = vsel %vm1032, %v3131, %v3132
      %v3134 = vrot.slane %v2312, 5
      %v3135 = vrot.slane %v3134, 4
      %v3136 = vrot.slane %v2313, 5
      %v3137 = vsel %vm1032, %v3135, %v3136
      %v3138 = vrot.slane %v2318, 5
      %v3139 = vrot.slane %v3138, 4
      %v3140 = vrot.slane %v2319, 5
      %v3141 = vsel %vm1032, %v3139, %v3140
      %v3142 = vrot.slane %v2320, 5
      %v3143 = vrot.slane %v3142, 4
      %v3144 = vrot.slane %v2321, 5
      %v3145 = vsel %vm1032, %v3143, %v3144
      %v3146 = vrot.slane %v2322, 5
      %v3147 = vrot.slane %v3146, 4
      %v3148 = vrot.slane %v2323, 5
      %v3149 = vsel %vm1032, %v3147, %v3148
      %v3150 = vrot.slane %v2324, 5
      %v3151 = vrot.slane %v3150, 4
      %v3152 = vrot.slane %v2325, 5
      %v3153 = vsel %vm1032, %v3151, %v3152
      %v3154 = vrot.slane %v2326, 5
      %v3155 = vrot.slane %v3154, 4
      %v3156 = vrot.slane %v2327, 5
      %v3157 = vsel %vm1032, %v3155, %v3156
      %v3158 = vrot.slane %v2328, 5
      %v3159 = vrot.slane %v3158, 4
      %v3160 = vrot.slane %v2329, 5
      %v3161 = vsel %vm1032, %v3159, %v3160
      %v3162 = vrot.slane %v2330, 5
      %v3163 = vrot.slane %v3162, 4
      %v3164 = vrot.slane %v2331, 5
      %v3165 = vsel %vm1032, %v3163, %v3164
      %v3166 = vrot.slane %v2332, 5
      %v3167 = vrot.slane %v3166, 4
      %v3168 = vrot.slane %v2333, 5
      %v3169 = vsel %vm1032, %v3167, %v3168
      %v3170 = vunpack.c.l.b16 %v3045
      %v3171 = vunpack.c.l.b16 %v3049
      %v3172 = vunpack.c.l.b16 %v3053
      %v3173 = vunpack.c.l.b16 %v3057
      %v3174 = vunpack.c.l.b16 %v3061
      %v3175 = vunpack.c.l.b16 %v3065
      %v3176 = vunpack.c.l.b16 %v3069
      %v3177 = vunpack.c.l.b16 %v3073
      %v3178 = vunpack.c.l.b16 %v3077
      %v3179 = vunpack.c.l.b16 %v3081
      %v3180 = vunpack.c.l.b16 %v3085
      %v3181 = vunpack.c.l.b16 %v3089
      %v3182 = vunpack.c.l.b16 %v3093
      %v3183 = vunpack.c.l.b16 %v3097
      %v3184 = vunpack.c.l.b16 %v3101
      %v3185 = vunpack.c.l.b16 %v3105
      %v3186 = vunpack.c.l.b16 %v3109
      %v3187 = vunpack.c.l.b16 %v3113
      %v3188 = vunpack.c.l.b16 %v3117
      %v3189 = vunpack.c.l.b16 %v3121
      %v3190 = vunpack.c.l.b16 %v3125
      %v3191 = vunpack.c.l.b16 %v3129
      %v3192 = vunpack.c.l.b16 %v3133
      %v3193 = vunpack.c.l.b16 %v3137
      %v3194 = vunpack.c.l.b16 %v3141
      %v3195 = vunpack.c.l.b16 %v3145
      %v3196 = vunpack.c.l.b16 %v3149
      %v3197 = vunpack.c.l.b16 %v3153
      %v3198 = vunpack.c.l.b16 %v3157
      %v3199 = vunpack.c.l.b16 %v3161
      %v3200 = vunpack.c.l.b16 %v3165
      %v3201 = vunpack.c.l.b16 %v3169
      %v3202 = vpack.c.b16 %v3171, %v3170
      %v3203 = vpack.c.b16 %v3173, %v3172
      %v3204 = vpack.c.b16 %v3175, %v3174
      %v3205 = vpack.c.b16 %v3177, %v3176
      %v3206 = vpack.c.b16 %v3179, %v3178
      %v3207 = vpack.c.b16 %v3181, %v3180
      %v3208 = vpack.c.b16 %v3183, %v3182
      %v3209 = vpack.c.b16 %v3185, %v3184
      %v3210 = vpack.c.b16 %v3187, %v3186
      %v3211 = vpack.c.b16 %v3189, %v3188
      %v3212 = vpack.c.b16 %v3191, %v3190
      %v3213 = vpack.c.b16 %v3193, %v3192
      %v3214 = vpack.c.b16 %v3195, %v3194
      %v3215 = vpack.c.b16 %v3197, %v3196
      %v3216 = vpack.c.b16 %v3199, %v3198
      %v3217 = vpack.c.b16 %v3201, %v3200
      %3218 = vrot.lane.b32.xlu0 %v3202, 8
      %v3219 = vpop.permute.xlu0 %3218
      %3220 = vrot.lane.b32.xlu0 %v3203, 8
      %v3221 = vpop.permute.xlu0 %3220
      %3222 = vrot.lane.b32.xlu0 %v3204, 8
      %v3223 = vpop.permute.xlu0 %3222
      %3224 = vrot.lane.b32.xlu0 %v3205, 8
      %v3225 = vpop.permute.xlu0 %3224
      %3226 = vrot.lane.b32.xlu0 %v3206, 8
      %v3227 = vpop.permute.xlu0 %3226
      %3228 = vrot.lane.b32.xlu0 %v3207, 8
      %v3229 = vpop.permute.xlu0 %3228
      %3230 = vrot.lane.b32.xlu0 %v3208, 8
      %v3231 = vpop.permute.xlu0 %3230
      %3232 = vrot.lane.b32.xlu0 %v3209, 8
      %v3233 = vpop.permute.xlu0 %3232
      %3234 = vrot.lane.b32.xlu0 %v3210, 8
      %v3235 = vpop.permute.xlu0 %3234
      %3236 = vrot.lane.b32.xlu0 %v3211, 8
      %v3237 = vpop.permute.xlu0 %3236
      %3238 = vrot.lane.b32.xlu0 %v3212, 8
      %v3239 = vpop.permute.xlu0 %3238
      %3240 = vrot.lane.b32.xlu0 %v3213, 8
      %v3241 = vpop.permute.xlu0 %3240
      %3242 = vrot.lane.b32.xlu0 %v3214, 8
      %v3243 = vpop.permute.xlu0 %3242
      %3244 = vrot.lane.b32.xlu0 %v3215, 8
      %v3245 = vpop.permute.xlu0 %3244
      %3246 = vrot.lane.b32.xlu0 %v3216, 8
      %v3247 = vpop.permute.xlu0 %3246
      %3248 = vrot.lane.b32.xlu0 %v3217, 8
      %v3249 = vpop.permute.xlu0 %3248
      %3266 = vst.msk [vmem:[#allocation3] sm:$0xff] %vm1257, %v3219
      %3267 = vst.msk [vmem:[#allocation3 + $0x8] sm:$0xff] %vm1257, %v3221
      %3268 = vst.msk [vmem:[#allocation3 + $0x10] sm:$0xff] %vm1257, %v3223
      %3269 = vst.msk [vmem:[#allocation3 + $0x18] sm:$0xff] %vm1257, %v3225
      %3270 = vst.msk [vmem:[#allocation3 + $0x20] sm:$0xff] %vm1257, %v3227
      %3271 = vst.msk [vmem:[#allocation3 + $0x28] sm:$0xff] %vm1257, %v3229
      %3272 = vst.msk [vmem:[#allocation3 + $0x30] sm:$0xff] %vm1257, %v3231
      %3273 = vst.msk [vmem:[#allocation3 + $0x38] sm:$0xff] %vm1257, %v3233
      %3274 = vst.msk [vmem:[#allocation3 + $0x40] sm:$0xff] %vm1257, %v3235
      %3275 = vst.msk [vmem:[#allocation3 + $0x48] sm:$0xff] %vm1257, %v3237
      %3276 = vst.msk [vmem:[#allocation3 + $0x50] sm:$0xff] %vm1257, %v3239
      %3277 = vst.msk [vmem:[#allocation3 + $0x58] sm:$0xff] %vm1257, %v3241
      %3278 = vst.msk [vmem:[#allocation3 + $0x60] sm:$0xff] %vm1257, %v3243
      %3279 = vst.msk [vmem:[#allocation3 + $0x68] sm:$0xff] %vm1257, %v3245
      %3280 = vst.msk [vmem:[#allocation3 + $0x70] sm:$0xff] %vm1257, %v3247
      %3281 = vst.msk [vmem:[#allocation3 + $0x78] sm:$0xff] %vm1257, %v3249
      %v3286 = vunpack.c.l.b16 %v2274
      %v3287 = vunpack.c.l.b16 %v2294
      %v3288 = vunpack.c.l.b16 %v2314
      %v3289 = vunpack.c.l.b16 %v2334
      %v3290 = vpack.c.b16 %v2372, %v2371
      %v3291 = vpack.c.b16 %v2374, %v2373
      %v3292 = vpack.c.b16 %v2376, %v2375
      %v3293 = vpack.c.b16 %v3286, %v2377
      %v3294 = vpack.c.b16 %v2380, %v2379
      %v3295 = vpack.c.b16 %v2382, %v2381
      %v3296 = vpack.c.b16 %v2384, %v2383
      %v3297 = vpack.c.b16 %v3287, %v2385
      %v3298 = vpack.c.b16 %v2388, %v2387
      %v3299 = vpack.c.b16 %v2390, %v2389
      %v3300 = vpack.c.b16 %v2392, %v2391
      %v3301 = vpack.c.b16 %v3288, %v2393
      %v3302 = vpack.c.b16 %v2396, %v2395
      %v3303 = vpack.c.b16 %v2398, %v2397
      %v3304 = vpack.c.b16 %v2400, %v2399
      %v3305 = vpack.c.b16 %v3289, %v2401
      %3306 = vrot.lane.b32.xlu0 %v3290, 12
      %v3307 = vpop.permute.xlu0 %3306
      %3308 = vrot.lane.b32.xlu0 %v3291, 12
      %v3309 = vpop.permute.xlu0 %3308
      %3310 = vrot.lane.b32.xlu0 %v3292, 12
      %v3311 = vpop.permute.xlu0 %3310
      %3312 = vrot.lane.b32.xlu0 %v3293, 12
      %v3313 = vpop.permute.xlu0 %3312
      %3314 = vrot.lane.b32.xlu0 %v3294, 12
      %v3315 = vpop.permute.xlu0 %3314
      %3316 = vrot.lane.b32.xlu0 %v3295, 12
      %v3317 = vpop.permute.xlu0 %3316
      %3318 = vrot.lane.b32.xlu0 %v3296, 12
      %v3319 = vpop.permute.xlu0 %3318
      %3320 = vrot.lane.b32.xlu0 %v3297, 12
      %v3321 = vpop.permute.xlu0 %3320
      %3322 = vrot.lane.b32.xlu0 %v3298, 12
      %v3323 = vpop.permute.xlu0 %3322
      %3324 = vrot.lane.b32.xlu0 %v3299, 12
      %v3325 = vpop.permute.xlu0 %3324
      %3326 = vrot.lane.b32.xlu0 %v3300, 12
      %v3327 = vpop.permute.xlu0 %3326
      %3328 = vrot.lane.b32.xlu0 %v3301, 12
      %v3329 = vpop.permute.xlu0 %3328
      %3330 = vrot.lane.b32.xlu0 %v3302, 12
      %v3331 = vpop.permute.xlu0 %3330
      %3332 = vrot.lane.b32.xlu0 %v3303, 12
      %v3333 = vpop.permute.xlu0 %3332
      %3334 = vrot.lane.b32.xlu0 %v3304, 12
      %v3335 = vpop.permute.xlu0 %3334
      %3336 = vrot.lane.b32.xlu0 %v3305, 12
      %v3337 = vpop.permute.xlu0 %3336
      %3354 = vst.msk [vmem:[#allocation3] sm:$0xff] %vm1346, %v3307
      %3355 = vst.msk [vmem:[#allocation3 + $0x8] sm:$0xff] %vm1346, %v3309
      %3356 = vst.msk [vmem:[#allocation3 + $0x10] sm:$0xff] %vm1346, %v3311
      %3357 = vst.msk [vmem:[#allocation3 + $0x18] sm:$0xff] %vm1346, %v3313
      %3358 = vst.msk [vmem:[#allocation3 + $0x20] sm:$0xff] %vm1346, %v3315
      %3359 = vst.msk [vmem:[#allocation3 + $0x28] sm:$0xff] %vm1346, %v3317
      %3360 = vst.msk [vmem:[#allocation3 + $0x30] sm:$0xff] %vm1346, %v3319
      %3361 = vst.msk [vmem:[#allocation3 + $0x38] sm:$0xff] %vm1346, %v3321
      %3362 = vst.msk [vmem:[#allocation3 + $0x40] sm:$0xff] %vm1346, %v3323
      %3363 = vst.msk [vmem:[#allocation3 + $0x48] sm:$0xff] %vm1346, %v3325
      %3364 = vst.msk [vmem:[#allocation3 + $0x50] sm:$0xff] %vm1346, %v3327
      %3365 = vst.msk [vmem:[#allocation3 + $0x58] sm:$0xff] %vm1346, %v3329
      %3366 = vst.msk [vmem:[#allocation3 + $0x60] sm:$0xff] %vm1346, %v3331
      %3367 = vst.msk [vmem:[#allocation3 + $0x68] sm:$0xff] %vm1346, %v3333
      %3368 = vst.msk [vmem:[#allocation3 + $0x70] sm:$0xff] %vm1346, %v3335
      %3369 = vst.msk [vmem:[#allocation3 + $0x78] sm:$0xff] %vm1346, %v3337
      %v3371 = vshrl.u32 %v2274, 16
      %v3373 = vrot.slane %v3371, 4
      %v3374 = vshll.u32 %v2274, 16
      %v3376 = vrot.slane %v3374, 5
      %v3377 = vor.u32 %v3373, %v3376
      %v3378 = vrot.slane %v3377, 4
      %v3380 = vshll.u32 %v2275, 16
      %v3382 = vrot.slane %v3380, 5
      %v3383 = vsel %vm436, %v3378, %v3382
      %v3385 = vshrl.u32 %v2294, 16
      %v3387 = vrot.slane %v3385, 4
      %v3388 = vshll.u32 %v2294, 16
      %v3390 = vrot.slane %v3388, 5
      %v3391 = vor.u32 %v3387, %v3390
      %v3392 = vrot.slane %v3391, 4
      %v3394 = vshll.u32 %v2295, 16
      %v3396 = vrot.slane %v3394, 5
      %v3397 = vsel %vm436, %v3392, %v3396
      %v3399 = vshrl.u32 %v2314, 16
      %v3401 = vrot.slane %v3399, 4
      %v3402 = vshll.u32 %v2314, 16
      %v3404 = vrot.slane %v3402, 5
      %v3405 = vor.u32 %v3401, %v3404
      %v3406 = vrot.slane %v3405, 4
      %v3408 = vshll.u32 %v2315, 16
      %v3410 = vrot.slane %v3408, 5
      %v3411 = vsel %vm436, %v3406, %v3410
      %v3413 = vshrl.u32 %v2334, 16
      %v3415 = vrot.slane %v3413, 4
      %v3416 = vshll.u32 %v2334, 16
      %v3418 = vrot.slane %v3416, 5
      %v3419 = vor.u32 %v3415, %v3418
      %v3420 = vrot.slane %v3419, 4
      %v3422 = vshll.u32 %v2335, 16
      %v3424 = vrot.slane %v3422, 5
      %v3425 = vsel %vm436, %v3420, %v3424
      %v3426 = vunpack.c.l.b16 %v3383
      %v3427 = vunpack.c.l.b16 %v3397
      %v3428 = vunpack.c.l.b16 %v3411
      %v3429 = vunpack.c.l.b16 %v3425
      %v3430 = vpack.c.b16 %v2900, %v2899
      %v3431 = vpack.c.b16 %v2902, %v2901
      %v3432 = vpack.c.b16 %v2904, %v2903
      %v3433 = vpack.c.b16 %v3426, %v2905
      %v3434 = vpack.c.b16 %v2908, %v2907
      %v3435 = vpack.c.b16 %v2910, %v2909
      %v3436 = vpack.c.b16 %v2912, %v2911
      %v3437 = vpack.c.b16 %v3427, %v2913
      %v3438 = vpack.c.b16 %v2916, %v2915
      %v3439 = vpack.c.b16 %v2918, %v2917
      %v3440 = vpack.c.b16 %v2920, %v2919
      %v3441 = vpack.c.b16 %v3428, %v2921
      %v3442 = vpack.c.b16 %v2924, %v2923
      %v3443 = vpack.c.b16 %v2926, %v2925
      %v3444 = vpack.c.b16 %v2928, %v2927
      %v3445 = vpack.c.b16 %v3429, %v2929
      %3446 = vrot.lane.b32.xlu0 %v3430, 16
      %v3447 = vpop.permute.xlu0 %3446
      %3448 = vrot.lane.b32.xlu0 %v3431, 16
      %v3449 = vpop.permute.xlu0 %3448
      %3450 = vrot.lane.b32.xlu0 %v3432, 16
      %v3451 = vpop.permute.xlu0 %3450
      %3452 = vrot.lane.b32.xlu0 %v3433, 16
      %v3453 = vpop.permute.xlu0 %3452
      %3454 = vrot.lane.b32.xlu0 %v3434, 16
      %v3455 = vpop.permute.xlu0 %3454
      %3456 = vrot.lane.b32.xlu0 %v3435, 16
      %v3457 = vpop.permute.xlu0 %3456
      %3458 = vrot.lane.b32.xlu0 %v3436, 16
      %v3459 = vpop.permute.xlu0 %3458
      %3460 = vrot.lane.b32.xlu0 %v3437, 16
      %v3461 = vpop.permute.xlu0 %3460
      %3462 = vrot.lane.b32.xlu0 %v3438, 16
      %v3463 = vpop.permute.xlu0 %3462
      %3464 = vrot.lane.b32.xlu0 %v3439, 16
      %v3465 = vpop.permute.xlu0 %3464
      %3466 = vrot.lane.b32.xlu0 %v3440, 16
      %v3467 = vpop.permute.xlu0 %3466
      %3468 = vrot.lane.b32.xlu0 %v3441, 16
      %v3469 = vpop.permute.xlu0 %3468
      %3470 = vrot.lane.b32.xlu0 %v3442, 16
      %v3471 = vpop.permute.xlu0 %3470
      %3472 = vrot.lane.b32.xlu0 %v3443, 16
      %v3473 = vpop.permute.xlu0 %3472
      %3474 = vrot.lane.b32.xlu0 %v3444, 16
      %v3475 = vpop.permute.xlu0 %3474
      %3476 = vrot.lane.b32.xlu0 %v3445, 16
      %v3477 = vpop.permute.xlu0 %3476
      %3494 = vst.msk [vmem:[#allocation3] sm:$0xff] %vm1487, %v3447
      %3495 = vst.msk [vmem:[#allocation3 + $0x8] sm:$0xff] %vm1487, %v3449
      %3496 = vst.msk [vmem:[#allocation3 + $0x10] sm:$0xff] %vm1487, %v3451
      %3497 = vst.msk [vmem:[#allocation3 + $0x18] sm:$0xff] %vm1487, %v3453
      %3498 = vst.msk [vmem:[#allocation3 + $0x20] sm:$0xff] %vm1487, %v3455
      %3499 = vst.msk [vmem:[#allocation3 + $0x28] sm:$0xff] %vm1487, %v3457
      %3500 = vst.msk [vmem:[#allocation3 + $0x30] sm:$0xff] %vm1487, %v3459
      %3501 = vst.msk [vmem:[#allocation3 + $0x38] sm:$0xff] %vm1487, %v3461
      %3502 = vst.msk [vmem:[#allocation3 + $0x40] sm:$0xff] %vm1487, %v3463
      %3503 = vst.msk [vmem:[#allocation3 + $0x48] sm:$0xff] %vm1487, %v3465
      %3504 = vst.msk [vmem:[#allocation3 + $0x50] sm:$0xff] %vm1487, %v3467
      %3505 = vst.msk [vmem:[#allocation3 + $0x58] sm:$0xff] %vm1487, %v3469
      %3506 = vst.msk [vmem:[#allocation3 + $0x60] sm:$0xff] %vm1487, %v3471
      %3507 = vst.msk [vmem:[#allocation3 + $0x68] sm:$0xff] %vm1487, %v3473
      %3508 = vst.msk [vmem:[#allocation3 + $0x70] sm:$0xff] %vm1487, %v3475
      %3509 = vst.msk [vmem:[#allocation3 + $0x78] sm:$0xff] %vm1487, %v3477
      %v3514 = vrot.slane %v2274, 5
      %v3515 = vrot.slane %v3514, 4
      %v3516 = vrot.slane %v2275, 5
      %v3517 = vsel %vm1032, %v3515, %v3516
      %v3518 = vrot.slane %v2294, 5
      %v3519 = vrot.slane %v3518, 4
      %v3520 = vrot.slane %v2295, 5
      %v3521 = vsel %vm1032, %v3519, %v3520
      %v3522 = vrot.slane %v2314, 5
      %v3523 = vrot.slane %v3522, 4
      %v3524 = vrot.slane %v2315, 5
      %v3525 = vsel %vm1032, %v3523, %v3524
      %v3526 = vrot.slane %v2334, 5
      %v3527 = vrot.slane %v3526, 4
      %v3528 = vrot.slane %v2335, 5
      %v3529 = vsel %vm1032, %v3527, %v3528
      %v3530 = vunpack.c.l.b16 %v3517
      %v3531 = vunpack.c.l.b16 %v3521
      %v3532 = vunpack.c.l.b16 %v3525
      %v3533 = vunpack.c.l.b16 %v3529
      %v3534 = vpack.c.b16 %v3172, %v3171
      %v3535 = vpack.c.b16 %v3174, %v3173
      %v3536 = vpack.c.b16 %v3176, %v3175
      %v3537 = vpack.c.b16 %v3530, %v3177
      %v3538 = vpack.c.b16 %v3180, %v3179
      %v3539 = vpack.c.b16 %v3182, %v3181
      %v3540 = vpack.c.b16 %v3184, %v3183
      %v3541 = vpack.c.b16 %v3531, %v3185
      %v3542 = vpack.c.b16 %v3188, %v3187
      %v3543 = vpack.c.b16 %v3190, %v3189
      %v3544 = vpack.c.b16 %v3192, %v3191
      %v3545 = vpack.c.b16 %v3532, %v3193
      %v3546 = vpack.c.b16 %v3196, %v3195
      %v3547 = vpack.c.b16 %v3198, %v3197
      %v3548 = vpack.c.b16 %v3200, %v3199
      %v3549 = vpack.c.b16 %v3533, %v3201
      %3550 = vrot.lane.b32.xlu0 %v3534, 20
      %v3551 = vpop.permute.xlu0 %3550
      %3552 = vrot.lane.b32.xlu0 %v3535, 20
      %v3553 = vpop.permute.xlu0 %3552
      %3554 = vrot.lane.b32.xlu0 %v3536, 20
      %v3555 = vpop.permute.xlu0 %3554
      %3556 = vrot.lane.b32.xlu0 %v3537, 20
      %v3557 = vpop.permute.xlu0 %3556
      %3558 = vrot.lane.b32.xlu0 %v3538, 20
      %v3559 = vpop.permute.xlu0 %3558
      %3560 = vrot.lane.b32.xlu0 %v3539, 20
      %v3561 = vpop.permute.xlu0 %3560
      %3562 = vrot.lane.b32.xlu0 %v3540, 20
      %v3563 = vpop.permute.xlu0 %3562
      %3564 = vrot.lane.b32.xlu0 %v3541, 20
      %v3565 = vpop.permute.xlu0 %3564
      %3566 = vrot.lane.b32.xlu0 %v3542, 20
      %v3567 = vpop.permute.xlu0 %3566
      %3568 = vrot.lane.b32.xlu0 %v3543, 20
      %v3569 = vpop.permute.xlu0 %3568
      %3570 = vrot.lane.b32.xlu0 %v3544, 20
      %v3571 = vpop.permute.xlu0 %3570
      %3572 = vrot.lane.b32.xlu0 %v3545, 20
      %v3573 = vpop.permute.xlu0 %3572
      %3574 = vrot.lane.b32.xlu0 %v3546, 20
      %v3575 = vpop.permute.xlu0 %3574
      %3576 = vrot.lane.b32.xlu0 %v3547, 20
      %v3577 = vpop.permute.xlu0 %3576
      %3578 = vrot.lane.b32.xlu0 %v3548, 20
      %v3579 = vpop.permute.xlu0 %3578
      %3580 = vrot.lane.b32.xlu0 %v3549, 20
      %v3581 = vpop.permute.xlu0 %3580
      %3598 = vst.msk [vmem:[#allocation3] sm:$0xff] %vm1592, %v3551
      %3599 = vst.msk [vmem:[#allocation3 + $0x8] sm:$0xff] %vm1592, %v3553
      %3600 = vst.msk [vmem:[#allocation3 + $0x10] sm:$0xff] %vm1592, %v3555
      %3601 = vst.msk [vmem:[#allocation3 + $0x18] sm:$0xff] %vm1592, %v3557
      %3602 = vst.msk [vmem:[#allocation3 + $0x20] sm:$0xff] %vm1592, %v3559
      %3603 = vst.msk [vmem:[#allocation3 + $0x28] sm:$0xff] %vm1592, %v3561
      %3604 = vst.msk [vmem:[#allocation3 + $0x30] sm:$0xff] %vm1592, %v3563
      %3605 = vst.msk [vmem:[#allocation3 + $0x38] sm:$0xff] %vm1592, %v3565
      %3606 = vst.msk [vmem:[#allocation3 + $0x40] sm:$0xff] %vm1592, %v3567
      %3607 = vst.msk [vmem:[#allocation3 + $0x48] sm:$0xff] %vm1592, %v3569
      %3608 = vst.msk [vmem:[#allocation3 + $0x50] sm:$0xff] %vm1592, %v3571
      %3609 = vst.msk [vmem:[#allocation3 + $0x58] sm:$0xff] %vm1592, %v3573
      %3610 = vst.msk [vmem:[#allocation3 + $0x60] sm:$0xff] %vm1592, %v3575
      %3611 = vst.msk [vmem:[#allocation3 + $0x68] sm:$0xff] %vm1592, %v3577
      %3612 = vst.msk [vmem:[#allocation3 + $0x70] sm:$0xff] %vm1592, %v3579
      %3613 = vst.msk [vmem:[#allocation3 + $0x78] sm:$0xff] %vm1592, %v3581
      %v3618 = vunpack.c.l.b16 %v2276
      %v3619 = vunpack.c.l.b16 %v2296
      %v3620 = vunpack.c.l.b16 %v2316
      %v3621 = vunpack.c.l.b16 %v2336
      %v3622 = vpack.c.b16 %v3618, %v3286
      %v3623 = vpack.c.b16 %v3619, %v3287
      %v3624 = vpack.c.b16 %v3620, %v3288
      %v3625 = vpack.c.b16 %v3621, %v3289
      %3626 = vrot.lane.b32.xlu0 %v2403, 24
      %v3627 = vpop.permute.xlu0 %3626
      %3628 = vrot.lane.b32.xlu0 %v2404, 24
      %v3629 = vpop.permute.xlu0 %3628
      %3630 = vrot.lane.b32.xlu0 %v2405, 24
      %v3631 = vpop.permute.xlu0 %3630
      %3632 = vrot.lane.b32.xlu0 %v3622, 24
      %v3633 = vpop.permute.xlu0 %3632
      %3634 = vrot.lane.b32.xlu0 %v2407, 24
      %v3635 = vpop.permute.xlu0 %3634
      %3636 = vrot.lane.b32.xlu0 %v2408, 24
      %v3637 = vpop.permute.xlu0 %3636
      %3638 = vrot.lane.b32.xlu0 %v2409, 24
      %v3639 = vpop.permute.xlu0 %3638
      %3640 = vrot.lane.b32.xlu0 %v3623, 24
      %v3641 = vpop.permute.xlu0 %3640
      %3642 = vrot.lane.b32.xlu0 %v2411, 24
      %v3643 = vpop.permute.xlu0 %3642
      %3644 = vrot.lane.b32.xlu0 %v2412, 24
      %v3645 = vpop.permute.xlu0 %3644
      %3646 = vrot.lane.b32.xlu0 %v2413, 24
      %v3647 = vpop.permute.xlu0 %3646
      %3648 = vrot.lane.b32.xlu0 %v3624, 24
      %v3649 = vpop.permute.xlu0 %3648
      %3650 = vrot.lane.b32.xlu0 %v2415, 24
      %v3651 = vpop.permute.xlu0 %3650
      %3652 = vrot.lane.b32.xlu0 %v2416, 24
      %v3653 = vpop.permute.xlu0 %3652
      %3654 = vrot.lane.b32.xlu0 %v2417, 24
      %v3655 = vpop.permute.xlu0 %3654
      %3656 = vrot.lane.b32.xlu0 %v3625, 24
      %v3657 = vpop.permute.xlu0 %3656
      %3674 = vst.msk [vmem:[#allocation3] sm:$0xff] %vm1669, %v3627
      %3675 = vst.msk [vmem:[#allocation3 + $0x8] sm:$0xff] %vm1669, %v3629
      %3676 = vst.msk [vmem:[#allocation3 + $0x10] sm:$0xff] %vm1669, %v3631
      %3677 = vst.msk [vmem:[#allocation3 + $0x18] sm:$0xff] %vm1669, %v3633
      %3678 = vst.msk [vmem:[#allocation3 + $0x20] sm:$0xff] %vm1669, %v3635
      %3679 = vst.msk [vmem:[#allocation3 + $0x28] sm:$0xff] %vm1669, %v3637
      %3680 = vst.msk [vmem:[#allocation3 + $0x30] sm:$0xff] %vm1669, %v3639
      %3681 = vst.msk [vmem:[#allocation3 + $0x38] sm:$0xff] %vm1669, %v3641
      %3682 = vst.msk [vmem:[#allocation3 + $0x40] sm:$0xff] %vm1669, %v3643
      %3683 = vst.msk [vmem:[#allocation3 + $0x48] sm:$0xff] %vm1669, %v3645
      %3684 = vst.msk [vmem:[#allocation3 + $0x50] sm:$0xff] %vm1669, %v3647
      %3685 = vst.msk [vmem:[#allocation3 + $0x58] sm:$0xff] %vm1669, %v3649
      %3686 = vst.msk [vmem:[#allocation3 + $0x60] sm:$0xff] %vm1669, %v3651
      %3687 = vst.msk [vmem:[#allocation3 + $0x68] sm:$0xff] %vm1669, %v3653
      %3688 = vst.msk [vmem:[#allocation3 + $0x70] sm:$0xff] %vm1669, %v3655
      %3689 = vst.msk [vmem:[#allocation3 + $0x78] sm:$0xff] %vm1669, %v3657
      %v3691 = vshrl.u32 %v2276, 16
      %v3693 = vrot.slane %v3691, 4
      %v3694 = vshll.u32 %v2276, 16
      %v3696 = vrot.slane %v3694, 5
      %v3697 = vor.u32 %v3693, %v3696
      %v3698 = vrot.slane %v3697, 4
      %v3700 = vshll.u32 %v2277, 16
      %v3702 = vrot.slane %v3700, 5
      %v3703 = vsel %vm436, %v3698, %v3702
      %v3705 = vshrl.u32 %v2296, 16
      %v3707 = vrot.slane %v3705, 4
      %v3708 = vshll.u32 %v2296, 16
      %v3710 = vrot.slane %v3708, 5
      %v3711 = vor.u32 %v3707, %v3710
      %v3712 = vrot.slane %v3711, 4
      %v3714 = vshll.u32 %v2297, 16
      %v3716 = vrot.slane %v3714, 5
      %v3717 = vsel %vm436, %v3712, %v3716
      %v3719 = vshrl.u32 %v2316, 16
      %v3721 = vrot.slane %v3719, 4
      %v3722 = vshll.u32 %v2316, 16
      %v3724 = vrot.slane %v3722, 5
      %v3725 = vor.u32 %v3721, %v3724
      %v3726 = vrot.slane %v3725, 4
      %v3728 = vshll.u32 %v2317, 16
      %v3730 = vrot.slane %v3728, 5
      %v3731 = vsel %vm436, %v3726, %v3730
      %v3733 = vshrl.u32 %v2336, 16
      %v3735 = vrot.slane %v3733, 4
      %v3736 = vshll.u32 %v2336, 16
      %v3738 = vrot.slane %v3736, 5
      %v3739 = vor.u32 %v3735, %v3738
      %v3740 = vrot.slane %v3739, 4
      %v3742 = vshll.u32 %v2337, 16
      %v3744 = vrot.slane %v3742, 5
      %v3745 = vsel %vm436, %v3740, %v3744
      %v3746 = vunpack.c.l.b16 %v3703
      %v3747 = vunpack.c.l.b16 %v3717
      %v3748 = vunpack.c.l.b16 %v3731
      %v3749 = vunpack.c.l.b16 %v3745
      %v3750 = vpack.c.b16 %v3746, %v3426
      %v3751 = vpack.c.b16 %v3747, %v3427
      %v3752 = vpack.c.b16 %v3748, %v3428
      %v3753 = vpack.c.b16 %v3749, %v3429
      %3754 = vrot.lane.b32.xlu0 %v2931, 28
      %v3755 = vpop.permute.xlu0 %3754
      %3756 = vrot.lane.b32.xlu0 %v2932, 28
      %v3757 = vpop.permute.xlu0 %3756
      %3758 = vrot.lane.b32.xlu0 %v2933, 28
      %v3759 = vpop.permute.xlu0 %3758
      %3760 = vrot.lane.b32.xlu0 %v3750, 28
      %v3761 = vpop.permute.xlu0 %3760
      %3762 = vrot.lane.b32.xlu0 %v2935, 28
      %v3763 = vpop.permute.xlu0 %3762
      %3764 = vrot.lane.b32.xlu0 %v2936, 28
      %v3765 = vpop.permute.xlu0 %3764
      %3766 = vrot.lane.b32.xlu0 %v2937, 28
      %v3767 = vpop.permute.xlu0 %3766
      %3768 = vrot.lane.b32.xlu0 %v3751, 28
      %v3769 = vpop.permute.xlu0 %3768
      %3770 = vrot.lane.b32.xlu0 %v2939, 28
      %v3771 = vpop.permute.xlu0 %3770
      %3772 = vrot.lane.b32.xlu0 %v2940, 28
      %v3773 = vpop.permute.xlu0 %3772
      %3774 = vrot.lane.b32.xlu0 %v2941, 28
      %v3775 = vpop.permute.xlu0 %3774
      %3776 = vrot.lane.b32.xlu0 %v3752, 28
      %v3777 = vpop.permute.xlu0 %3776
      %3778 = vrot.lane.b32.xlu0 %v2943, 28
      %v3779 = vpop.permute.xlu0 %3778
      %3780 = vrot.lane.b32.xlu0 %v2944, 28
      %v3781 = vpop.permute.xlu0 %3780
      %3782 = vrot.lane.b32.xlu0 %v2945, 28
      %v3783 = vpop.permute.xlu0 %3782
      %3784 = vrot.lane.b32.xlu0 %v3753, 28
      %v3785 = vpop.permute.xlu0 %3784
      %3802 = vst.msk [vmem:[#allocation3] sm:$0xff] %vm1798, %v3755
      %3803 = vst.msk [vmem:[#allocation3 + $0x8] sm:$0xff] %vm1798, %v3757
      %3804 = vst.msk [vmem:[#allocation3 + $0x10] sm:$0xff] %vm1798, %v3759
      %3805 = vst.msk [vmem:[#allocation3 + $0x18] sm:$0xff] %vm1798, %v3761
      %3806 = vst.msk [vmem:[#allocation3 + $0x20] sm:$0xff] %vm1798, %v3763
      %3807 = vst.msk [vmem:[#allocation3 + $0x28] sm:$0xff] %vm1798, %v3765
      %3808 = vst.msk [vmem:[#allocation3 + $0x30] sm:$0xff] %vm1798, %v3767
      %3809 = vst.msk [vmem:[#allocation3 + $0x38] sm:$0xff] %vm1798, %v3769
      %3810 = vst.msk [vmem:[#allocation3 + $0x40] sm:$0xff] %vm1798, %v3771
      %3811 = vst.msk [vmem:[#allocation3 + $0x48] sm:$0xff] %vm1798, %v3773
      %3812 = vst.msk [vmem:[#allocation3 + $0x50] sm:$0xff] %vm1798, %v3775
      %3813 = vst.msk [vmem:[#allocation3 + $0x58] sm:$0xff] %vm1798, %v3777
      %3814 = vst.msk [vmem:[#allocation3 + $0x60] sm:$0xff] %vm1798, %v3779
      %3815 = vst.msk [vmem:[#allocation3 + $0x68] sm:$0xff] %vm1798, %v3781
      %3816 = vst.msk [vmem:[#allocation3 + $0x70] sm:$0xff] %vm1798, %v3783
      %3817 = vst.msk [vmem:[#allocation3 + $0x78] sm:$0xff] %vm1798, %v3785
      %v3822 = vrot.slane %v2276, 5
      %v3823 = vrot.slane %v3822, 4
      %v3824 = vrot.slane %v2277, 5
      %v3825 = vsel %vm1032, %v3823, %v3824
      %v3826 = vrot.slane %v2296, 5
      %v3827 = vrot.slane %v3826, 4
      %v3828 = vrot.slane %v2297, 5
      %v3829 = vsel %vm1032, %v3827, %v3828
      %v3830 = vrot.slane %v2316, 5
      %v3831 = vrot.slane %v3830, 4
      %v3832 = vrot.slane %v2317, 5
      %v3833 = vsel %vm1032, %v3831, %v3832
      %v3834 = vrot.slane %v2336, 5
      %v3835 = vrot.slane %v3834, 4
      %v3836 = vrot.slane %v2337, 5
      %v3837 = vsel %vm1032, %v3835, %v3836
      %v3838 = vunpack.c.l.b16 %v3825
      %v3839 = vunpack.c.l.b16 %v3829
      %v3840 = vunpack.c.l.b16 %v3833
      %v3841 = vunpack.c.l.b16 %v3837
      %v3842 = vpack.c.b16 %v3838, %v3530
      %v3843 = vpack.c.b16 %v3839, %v3531
      %v3844 = vpack.c.b16 %v3840, %v3532
      %v3845 = vpack.c.b16 %v3841, %v3533
      %3846 = vrot.lane.b32.xlu0 %v3203, 32
      %v3847 = vpop.permute.xlu0 %3846
      %3848 = vrot.lane.b32.xlu0 %v3204, 32
      %v3849 = vpop.permute.xlu0 %3848
      %3850 = vrot.lane.b32.xlu0 %v3205, 32
      %v3851 = vpop.permute.xlu0 %3850
      %3852 = vrot.lane.b32.xlu0 %v3842, 32
      %v3853 = vpop.permute.xlu0 %3852
      %3854 = vrot.lane.b32.xlu0 %v3207, 32
      %v3855 = vpop.permute.xlu0 %3854
      %3856 = vrot.lane.b32.xlu0 %v3208, 32
      %v3857 = vpop.permute.xlu0 %3856
      %3858 = vrot.lane.b32.xlu0 %v3209, 32
      %v3859 = vpop.permute.xlu0 %3858
      %3860 = vrot.lane.b32.xlu0 %v3843, 32
      %v3861 = vpop.permute.xlu0 %3860
      %3862 = vrot.lane.b32.xlu0 %v3211, 32
      %v3863 = vpop.permute.xlu0 %3862
      %3864 = vrot.lane.b32.xlu0 %v3212, 32
      %v3865 = vpop.permute.xlu0 %3864
      %3866 = vrot.lane.b32.xlu0 %v3213, 32
      %v3867 = vpop.permute.xlu0 %3866
      %3868 = vrot.lane.b32.xlu0 %v3844, 32
      %v3869 = vpop.permute.xlu0 %3868
      %3870 = vrot.lane.b32.xlu0 %v3215, 32
      %v3871 = vpop.permute.xlu0 %3870
      %3872 = vrot.lane.b32.xlu0 %v3216, 32
      %v3873 = vpop.permute.xlu0 %3872
      %3874 = vrot.lane.b32.xlu0 %v3217, 32
      %v3875 = vpop.permute.xlu0 %3874
      %3876 = vrot.lane.b32.xlu0 %v3845, 32
      %v3877 = vpop.permute.xlu0 %3876
      %3894 = vst.msk [vmem:[#allocation3] sm:$0xff] %vm1891, %v3847
      %3895 = vst.msk [vmem:[#allocation3 + $0x8] sm:$0xff] %vm1891, %v3849
      %3896 = vst.msk [vmem:[#allocation3 + $0x10] sm:$0xff] %vm1891, %v3851
      %3897 = vst.msk [vmem:[#allocation3 + $0x18] sm:$0xff] %vm1891, %v3853
      %3898 = vst.msk [vmem:[#allocation3 + $0x20] sm:$0xff] %vm1891, %v3855
      %3899 = vst.msk [vmem:[#allocation3 + $0x28] sm:$0xff] %vm1891, %v3857
      %3900 = vst.msk [vmem:[#allocation3 + $0x30] sm:$0xff] %vm1891, %v3859
      %3901 = vst.msk [vmem:[#allocation3 + $0x38] sm:$0xff] %vm1891, %v3861
      %3902 = vst.msk [vmem:[#allocation3 + $0x40] sm:$0xff] %vm1891, %v3863
      %3903 = vst.msk [vmem:[#allocation3 + $0x48] sm:$0xff] %vm1891, %v3865
      %3904 = vst.msk [vmem:[#allocation3 + $0x50] sm:$0xff] %vm1891, %v3867
      %3905 = vst.msk [vmem:[#allocation3 + $0x58] sm:$0xff] %vm1891, %v3869
      %3906 = vst.msk [vmem:[#allocation3 + $0x60] sm:$0xff] %vm1891, %v3871
      %3907 = vst.msk [vmem:[#allocation3 + $0x68] sm:$0xff] %vm1891, %v3873
      %3908 = vst.msk [vmem:[#allocation3 + $0x70] sm:$0xff] %vm1891, %v3875
      %3909 = vst.msk [vmem:[#allocation3 + $0x78] sm:$0xff] %vm1891, %v3877
      %v3910 = vld [vmem:[#allocation2] sm:$0xff]
      %v3911 = vld [vmem:[#allocation2 + $0x8] sm:$0xff]
      %v3912 = vld [vmem:[#allocation2 + $0x10] sm:$0xff]
      %v3913 = vld [vmem:[#allocation2 + $0x18] sm:$0xff]
      %v3914 = vld [vmem:[#allocation2 + $0x20] sm:$0xff]
      %v3915 = vld [vmem:[#allocation2 + $0x28] sm:$0xff]
      %v3916 = vld [vmem:[#allocation2 + $0x30] sm:$0xff]
      %v3917 = vld [vmem:[#allocation2 + $0x38] sm:$0xff]
      %v3918 = vld [vmem:[#allocation2 + $0x40] sm:$0xff]
      %v3919 = vld [vmem:[#allocation2 + $0x48] sm:$0xff]
      %v3920 = vld [vmem:[#allocation2 + $0x50] sm:$0xff]
      %v3921 = vld [vmem:[#allocation2 + $0x58] sm:$0xff]
      %v3922 = vld [vmem:[#allocation2 + $0x60] sm:$0xff]
      %v3923 = vld [vmem:[#allocation2 + $0x68] sm:$0xff]
      %v3924 = vld [vmem:[#allocation2 + $0x70] sm:$0xff]
      %v3925 = vld [vmem:[#allocation2 + $0x78] sm:$0xff]
      %v3926 = vld [vmem:[#allocation2 + $0x80] sm:$0xff]
      %v3927 = vld [vmem:[#allocation2 + $0x88] sm:$0xff]
      %v3928 = vld [vmem:[#allocation2 + $0x90] sm:$0xff]
      %v3929 = vld [vmem:[#allocation2 + $0x98] sm:$0xff]
      %v3930 = vld [vmem:[#allocation2 + $0xa0] sm:$0xff]
      %v3931 = vld [vmem:[#allocation2 + $0xa8] sm:$0xff]
      %v3932 = vld [vmem:[#allocation2 + $0xb0] sm:$0xff]
      %v3933 = vld [vmem:[#allocation2 + $0xb8] sm:$0xff]
      %v3934 = vld [vmem:[#allocation2 + $0xc0] sm:$0xff]
      %v3935 = vld [vmem:[#allocation2 + $0xc8] sm:$0xff]
      %v3936 = vld [vmem:[#allocation2 + $0xd0] sm:$0xff]
      %v3937 = vld [vmem:[#allocation2 + $0xd8] sm:$0xff]
      %v3938 = vld [vmem:[#allocation2 + $0xe0] sm:$0xff]
      %v3939 = vld [vmem:[#allocation2 + $0xe8] sm:$0xff]
      %v3940 = vld [vmem:[#allocation2 + $0xf0] sm:$0xff]
      %v3941 = vld [vmem:[#allocation2 + $0xf8] sm:$0xff]
      %v3942 = vld [vmem:[#allocation3] sm:$0xff]
      %v3943 = vld [vmem:[#allocation3 + $0x8] sm:$0xff]
      %v3944 = vld [vmem:[#allocation3 + $0x10] sm:$0xff]
      %v3945 = vld [vmem:[#allocation3 + $0x18] sm:$0xff]
      %v3946 = vld [vmem:[#allocation3 + $0x20] sm:$0xff]
      %v3947 = vld [vmem:[#allocation3 + $0x28] sm:$0xff]
      %v3948 = vld [vmem:[#allocation3 + $0x30] sm:$0xff]
      %v3949 = vld [vmem:[#allocation3 + $0x38] sm:$0xff]
      %v3950 = vld [vmem:[#allocation3 + $0x40] sm:$0xff]
      %v3951 = vld [vmem:[#allocation3 + $0x48] sm:$0xff]
      %v3952 = vld [vmem:[#allocation3 + $0x50] sm:$0xff]
      %v3953 = vld [vmem:[#allocation3 + $0x58] sm:$0xff]
      %v3954 = vld [vmem:[#allocation3 + $0x60] sm:$0xff]
      %v3955 = vld [vmem:[#allocation3 + $0x68] sm:$0xff]
      %v3956 = vld [vmem:[#allocation3 + $0x70] sm:$0xff]
      %v3957 = vld [vmem:[#allocation3 + $0x78] sm:$0xff]
      %s3958 = scalar_lea.vmem %s1, 20
      %v3959 = vld [vmem:[%s3958] sm:$0xf]
      %v3960 = vld [vmem:[%s3958 + $0x4] sm:$0xf]
      %v3961 = vld [vmem:[%s3958 + $0x8] sm:$0xf]
      %v3962 = vld [vmem:[%s3958 + $0xc] sm:$0xf]
      %v3963 = vld [vmem:[%s3958 + $0x10] sm:$0x3]
      %v3969 = vunpack.c.l.b16 %v3959
      %v3970 = vunpack.c.l.b16 %v3960
      %v3971 = vunpack.c.l.b16 %v3961
      %v3972 = vunpack.c.l.b16 %v3962
      %v3973 = vunpack.c.l.b16 %v3963
      %v3974 = vpack.c.b16 %v3970, %v3969
      %v3975 = vpack.c.b16 %v3972, %v3971
      %v3976 = vpack.c.b16 %v3973, %v3973
      %v3980 = vsel %vm1976, %v3942, 0
      %v3983 = vsel %vm1976, %v3943, 0
      %v3986 = vsel %vm1976, %v3944, 0
      %v3989 = vsel %vm1976, %v3945, 0
      %v3992 = vsel %vm1976, %v3946, 0
      %v3995 = vsel %vm1976, %v3947, 0
      %v3998 = vsel %vm1976, %v3948, 0
      %v4001 = vsel %vm1976, %v3949, 0
      %v4004 = vsel %vm1976, %v3950, 0
      %v4007 = vsel %vm1976, %v3951, 0
      %v4010 = vsel %vm1976, %v3952, 0
      %v4013 = vsel %vm1976, %v3953, 0
      %v4016 = vsel %vm1976, %v3954, 0
      %v4019 = vsel %vm1976, %v3955, 0
      %v4022 = vsel %vm1976, %v3956, 0
      %v4025 = vsel %vm1976, %v3957, 0
      %v4028 = vsel %vm2025, %v3976, 0
      %4030 = vmatprep.subr.bf16.mxu0 0
      %4031 = vmatpush1.bf16.msra.mxu0 %v3974
      %4032 = vmatprep.subr.bf16.mxu0 0
      %4033 = vmatpush1.bf16.msra.mxu0 %v3975
      %4034 = vmatprep.subr.bf16.mxu0 0
      %4035 = vmatpush1.bf16.msra.mxu0 %v4028
      %4036 = vmatprep.subr.bf16.mxu0 0
      %4037 = vmatpush1.bf16.msra.mxu0 0
      %4038 = vmatprep.subr.bf16.mxu0 0
      %4039 = vmatpush1.bf16.msra.mxu0 0
      %4040 = vmatprep.subr.bf16.mxu0 0
      %4041 = vmatpush1.bf16.msra.mxu0 0
      %4042 = vmatprep.subr.bf16.mxu0 0
      %4043 = vmatpush1.bf16.msra.mxu0 0
      %4044 = vmatprep.subr.bf16.mxu0 0
      %4045 = vmatpush1.bf16.msra.mxu0 0
      %4046 = vmatprep.subr.bf16.mxu0 0
      %4047 = vmatpush1.bf16.msra.mxu0 0
      %4048 = vmatprep.subr.bf16.mxu0 0
      %4049 = vmatpush1.bf16.msra.mxu0 0
      %4050 = vmatprep.subr.bf16.mxu0 0
      %4051 = vmatpush1.bf16.msra.mxu0 0
      %4052 = vmatprep.subr.bf16.mxu0 0
      %4053 = vmatpush1.bf16.msra.mxu0 0
      %4054 = vmatprep.subr.bf16.mxu0 0
      %4055 = vmatpush1.bf16.msra.mxu0 0
      %4056 = vmatprep.subr.bf16.mxu0 0
      %4057 = vmatpush1.bf16.msra.mxu0 0
      %4058 = vmatprep.subr.bf16.mxu0 0
      %4059 = vmatpush1.bf16.msra.mxu0 0
      %4060 = vmatprep.subr.bf16.mxu0 0
      %4061 = vmatpush1.bf16.msra.mxu0 0
      %4062 = vmatprep.mubr.bf16.mxu0 0
      %4063 = vmatmul.mubr.bf16.gmra.mrb[0].mxu0 %v3980
      %v4064 = vpop.f32.mrb[0].mxu0
      %v4065 = vadd.f32 0.0, %v4064
      %v4066 = vpop.f32.mrb[0].mxu0
      %v4067 = vpop.f32.mrb[0].mxu0
      %v4068 = vadd.f32 0.0, %v4067
      %v4069 = vpop.f32.mrb[0].mxu0
      %4070 = vmatprep.mubr.bf16.mxu0 0
      %4071 = vmatmul.mubr.bf16.gmra.mrb[0].mxu0 %v3983
      %v4072 = vpop.f32.mrb[0].mxu0
      %v4073 = vadd.f32 0.0, %v4072
      %v4074 = vpop.f32.mrb[0].mxu0
      %v4075 = vpop.f32.mrb[0].mxu0
      %v4076 = vadd.f32 0.0, %v4075
      %v4077 = vpop.f32.mrb[0].mxu0
      %4078 = vmatprep.mubr.bf16.mxu0 0
      %4079 = vmatmul.mubr.bf16.gmra.mrb[0].mxu0 %v3986
      %v4080 = vpop.f32.mrb[0].mxu0
      %v4081 = vadd.f32 0.0, %v4080
      %v4082 = vpop.f32.mrb[0].mxu0
      %v4083 = vpop.f32.mrb[0].mxu0
      %v4084 = vadd.f32 0.0, %v4083
      %v4085 = vpop.f32.mrb[0].mxu0
      %4086 = vmatprep.mubr.bf16.mxu0 0
      %4087 = vmatmul.mubr.bf16.gmra.mrb[0].mxu0 %v3989
      %v4088 = vpop.f32.mrb[0].mxu0
      %v4089 = vadd.f32 0.0, %v4088
      %v4090 = vpop.f32.mrb[0].mxu0
      %v4091 = vpop.f32.mrb[0].mxu0
      %v4092 = vadd.f32 0.0, %v4091
      %v4093 = vpop.f32.mrb[0].mxu0
      %4094 = vmatprep.mubr.bf16.mxu0 0
      %4095 = vmatmul.mubr.bf16.gmra.mrb[0].mxu0 %v3992
      %v4096 = vpop.f32.mrb[0].mxu0
      %v4097 = vadd.f32 0.0, %v4096
      %v4098 = vpop.f32.mrb[0].mxu0
      %v4099 = vpop.f32.mrb[0].mxu0
      %v4100 = vadd.f32 0.0, %v4099
      %v4101 = vpop.f32.mrb[0].mxu0
      %4102 = vmatprep.mubr.bf16.mxu0 0
      %4103 = vmatmul.mubr.bf16.gmra.mrb[0].mxu0 %v3995
      %v4104 = vpop.f32.mrb[0].mxu0
      %v4105 = vadd.f32 0.0, %v4104
      %v4106 = vpop.f32.mrb[0].mxu0
      %v4107 = vpop.f32.mrb[0].mxu0
      %v4108 = vadd.f32 0.0, %v4107
      %v4109 = vpop.f32.mrb[0].mxu0
      %4110 = vmatprep.mubr.bf16.mxu0 0
      %4111 = vmatmul.mubr.bf16.gmra.mrb[0].mxu0 %v3998
      %v4112 = vpop.f32.mrb[0].mxu0
      %v4113 = vadd.f32 0.0, %v4112
      %v4114 = vpop.f32.mrb[0].mxu0
      %v4115 = vpop.f32.mrb[0].mxu0
      %v4116 = vadd.f32 0.0, %v4115
      %v4117 = vpop.f32.mrb[0].mxu0
      %4118 = vmatprep.mubr.bf16.mxu0 0
      %4119 = vmatmul.mubr.bf16.gmra.mrb[0].mxu0 %v4001
      %v4120 = vpop.f32.mrb[0].mxu0
      %v4121 = vadd.f32 0.0, %v4120
      %v4122 = vpop.f32.mrb[0].mxu0
      %v4123 = vpop.f32.mrb[0].mxu0
      %v4124 = vadd.f32 0.0, %v4123
      %v4125 = vpop.f32.mrb[0].mxu0
      %4126 = vmatprep.mubr.bf16.mxu0 0
      %4127 = vmatmul.mubr.bf16.gmra.mrb[0].mxu0 %v4004
      %v4128 = vpop.f32.mrb[0].mxu0
      %v4129 = vadd.f32 0.0, %v4128
      %v4130 = vpop.f32.mrb[0].mxu0
      %v4131 = vpop.f32.mrb[0].mxu0
      %v4132 = vadd.f32 0.0, %v4131
      %v4133 = vpop.f32.mrb[0].mxu0
      %4134 = vmatprep.mubr.bf16.mxu0 0
      %4135 = vmatmul.mubr.bf16.gmra.mrb[0].mxu0 %v4007
      %v4136 = vpop.f32.mrb[0].mxu0
      %v4137 = vadd.f32 0.0, %v4136
      %v4138 = vpop.f32.mrb[0].mxu0
      %v4139 = vpop.f32.mrb[0].mxu0
      %v4140 = vadd.f32 0.0, %v4139
      %v4141 = vpop.f32.mrb[0].mxu0
      %4142 = vmatprep.mubr.bf16.mxu0 0
      %4143 = vmatmul.mubr.bf16.gmra.mrb[0].mxu0 %v4010
      %v4144 = vpop.f32.mrb[0].mxu0
      %v4145 = vadd.f32 0.0, %v4144
      %v4146 = vpop.f32.mrb[0].mxu0
      %v4147 = vpop.f32.mrb[0].mxu0
      %v4148 = vadd.f32 0.0, %v4147
      %v4149 = vpop.f32.mrb[0].mxu0
      %4150 = vmatprep.mubr.bf16.mxu0 0
      %4151 = vmatmul.mubr.bf16.gmra.mrb[0].mxu0 %v4013
      %v4152 = vpop.f32.mrb[0].mxu0
      %v4153 = vadd.f32 0.0, %v4152
      %v4154 = vpop.f32.mrb[0].mxu0
      %v4155 = vpop.f32.mrb[0].mxu0
      %v4156 = vadd.f32 0.0, %v4155
      %v4157 = vpop.f32.mrb[0].mxu0
      %4158 = vmatprep.mubr.bf16.mxu0 0
      %4159 = vmatmul.mubr.bf16.gmra.mrb[0].mxu0 %v4016
      %v4160 = vpop.f32.mrb[0].mxu0
      %v4161 = vadd.f32 0.0, %v4160
      %v4162 = vpop.f32.mrb[0].mxu0
      %v4163 = vpop.f32.mrb[0].mxu0
      %v4164 = vadd.f32 0.0, %v4163
      %v4165 = vpop.f32.mrb[0].mxu0
      %4166 = vmatprep.mubr.bf16.mxu0 0
      %4167 = vmatmul.mubr.bf16.gmra.mrb[0].mxu0 %v4019
      %v4168 = vpop.f32.mrb[0].mxu0
      %v4169 = vadd.f32 0.0, %v4168
      %v4170 = vpop.f32.mrb[0].mxu0
      %v4171 = vpop.f32.mrb[0].mxu0
      %v4172 = vadd.f32 0.0, %v4171
      %v4173 = vpop.f32.mrb[0].mxu0
      %4174 = vmatprep.mubr.bf16.mxu0 0
      %4175 = vmatmul.mubr.bf16.gmra.mrb[0].mxu0 %v4022
      %v4176 = vpop.f32.mrb[0].mxu0
      %v4177 = vadd.f32 0.0, %v4176
      %v4178 = vpop.f32.mrb[0].mxu0
      %v4179 = vpop.f32.mrb[0].mxu0
      %v4180 = vadd.f32 0.0, %v4179
      %v4181 = vpop.f32.mrb[0].mxu0
      %4182 = vmatprep.mubr.bf16.mxu0 0
      %4183 = vmatmul.mubr.bf16.gmra.mrb[0].mxu0 %v4025
      %v4184 = vpop.f32.mrb[0].mxu0
      %v4185 = vadd.f32 0.0, %v4184
      %v4186 = vpop.f32.mrb[0].mxu0
      %v4187 = vpop.f32.mrb[0].mxu0
      %v4188 = vadd.f32 0.0, %v4187
      %v4189 = vpop.f32.mrb[0].mxu0
      %4190 = vdwg.mxu0
      %v4191 = vadd.f32 %v3910, %v4065
      %v4192 = vadd.f32 %v3911, %v4068
      %v4193 = vadd.f32 %v3912, %v4073
      %v4194 = vadd.f32 %v3913, %v4076
      %v4195 = vadd.f32 %v3914, %v4081
      %v4196 = vadd.f32 %v3915, %v4084
      %v4197 = vadd.f32 %v3916, %v4089
      %v4198 = vadd.f32 %v3917, %v4092
      %v4199 = vadd.f32 %v3918, %v4097
      %v4200 = vadd.f32 %v3919, %v4100
      %v4201 = vadd.f32 %v3920, %v4105
      %v4202 = vadd.f32 %v3921, %v4108
      %v4203 = vadd.f32 %v3922, %v4113
      %v4204 = vadd.f32 %v3923, %v4116
      %v4205 = vadd.f32 %v3924, %v4121
      %v4206 = vadd.f32 %v3925, %v4124
      %v4207 = vadd.f32 %v3926, %v4129
      %v4208 = vadd.f32 %v3927, %v4132
      %v4209 = vadd.f32 %v3928, %v4137
      %v4210 = vadd.f32 %v3929, %v4140
      %v4211 = vadd.f32 %v3930, %v4145
      %v4212 = vadd.f32 %v3931, %v4148
      %v4213 = vadd.f32 %v3932, %v4153
      %v4214 = vadd.f32 %v3933, %v4156
      %v4215 = vadd.f32 %v3934, %v4161
      %v4216 = vadd.f32 %v3935, %v4164
      %v4217 = vadd.f32 %v3936, %v4169
      %v4218 = vadd.f32 %v3937, %v4172
      %v4219 = vadd.f32 %v3938, %v4177
      %v4220 = vadd.f32 %v3939, %v4180
      %v4221 = vadd.f32 %v3940, %v4185
      %v4222 = vadd.f32 %v3941, %v4188
      %4223 = vst.msk [vmem:[#allocation2] sm:$0xff] %vm205, %v4191
      %4224 = vst.msk [vmem:[#allocation2 + $0x8] sm:$0xff] %vm205, %v4192
      %4225 = vst.msk [vmem:[#allocation2 + $0x10] sm:$0xff] %vm205, %v4193
      %4226 = vst.msk [vmem:[#allocation2 + $0x18] sm:$0xff] %vm205, %v4194
      %4227 = vst.msk [vmem:[#allocation2 + $0x20] sm:$0xff] %vm205, %v4195
      %4228 = vst.msk [vmem:[#allocation2 + $0x28] sm:$0xff] %vm205, %v4196
      %4229 = vst.msk [vmem:[#allocation2 + $0x30] sm:$0xff] %vm205, %v4197
      %4230 = vst.msk [vmem:[#allocation2 + $0x38] sm:$0xff] %vm205, %v4198
      %4231 = vst.msk [vmem:[#allocation2 + $0x40] sm:$0xff] %vm205, %v4199
      %4232 = vst.msk [vmem:[#allocation2 + $0x48] sm:$0xff] %vm205, %v4200
      %4233 = vst.msk [vmem:[#allocation2 + $0x50] sm:$0xff] %vm205, %v4201
      %4234 = vst.msk [vmem:[#allocation2 + $0x58] sm:$0xff] %vm205, %v4202
      %4235 = vst.msk [vmem:[#allocation2 + $0x60] sm:$0xff] %vm205, %v4203
      %4236 = vst.msk [vmem:[#allocation2 + $0x68] sm:$0xff] %vm205, %v4204
      %4237 = vst.msk [vmem:[#allocation2 + $0x70] sm:$0xff] %vm205, %v4205
      %4238 = vst.msk [vmem:[#allocation2 + $0x78] sm:$0xff] %vm205, %v4206
      %4239 = vst.msk [vmem:[#allocation2 + $0x80] sm:$0xff] %vm205, %v4207
      %4240 = vst.msk [vmem:[#allocation2 + $0x88] sm:$0xff] %vm205, %v4208
      %4241 = vst.msk [vmem:[#allocation2 + $0x90] sm:$0xff] %vm205, %v4209
      %4242 = vst.msk [vmem:[#allocation2 + $0x98] sm:$0xff] %vm205, %v4210
      %4243 = vst.msk [vmem:[#allocation2 + $0xa0] sm:$0xff] %vm205, %v4211
      %4244 = vst.msk [vmem:[#allocation2 + $0xa8] sm:$0xff] %vm205, %v4212
      %4245 = vst.msk [vmem:[#allocation2 + $0xb0] sm:$0xff] %vm205, %v4213
      %4246 = vst.msk [vmem:[#allocation2 + $0xb8] sm:$0xff] %vm205, %v4214
      %4247 = vst.msk [vmem:[#allocation2 + $0xc0] sm:$0xff] %vm205, %v4215
      %4248 = vst.msk [vmem:[#allocation2 + $0xc8] sm:$0xff] %vm205, %v4216
      %4249 = vst.msk [vmem:[#allocation2 + $0xd0] sm:$0xff] %vm205, %v4217
      %4250 = vst.msk [vmem:[#allocation2 + $0xd8] sm:$0xff] %vm205, %v4218
      %4251 = vst.msk [vmem:[#allocation2 + $0xe0] sm:$0xff] %vm205, %v4219
      %4252 = vst.msk [vmem:[#allocation2 + $0xe8] sm:$0xff] %vm205, %v4220
      %4253 = vst.msk [vmem:[#allocation2 + $0xf0] sm:$0xff] %vm205, %v4221
      %4254 = vst.msk [vmem:[#allocation2 + $0xf8] sm:$0xff] %vm205, %v4222
      %s4255 = sadd.s32 %s197, 2
      %s4256 = smul.u32 %s4255, 20
      %s4257 = smul.addr %s4256, 4
      %s4258 = scalar_lea.vmem %s184, %s4257
      %v4259 = vld [vmem:[%s4258] sm:$0xf]
      %v4260 = vld [vmem:[%s4258 + $0x4] sm:$0x1]
      %v4261 = vld [vmem:[%s4258 + $0x8] sm:$0xf]
      %v4262 = vld [vmem:[%s4258 + $0xc] sm:$0x1]
      %v4263 = vld [vmem:[%s4258 + $0x10] sm:$0xf]
      %v4264 = vld [vmem:[%s4258 + $0x14] sm:$0x1]
      %v4265 = vld [vmem:[%s4258 + $0x18] sm:$0xf]
      %v4266 = vld [vmem:[%s4258 + $0x1c] sm:$0x1]
      %v4267 = vld [vmem:[%s4258 + $0x20] sm:$0xf]
      %v4268 = vld [vmem:[%s4258 + $0x24] sm:$0x1]
      %v4269 = vld [vmem:[%s4258 + $0x28] sm:$0xf]
      %v4270 = vld [vmem:[%s4258 + $0x2c] sm:$0x1]
      %v4271 = vld [vmem:[%s4258 + $0x30] sm:$0xf]
      %v4272 = vld [vmem:[%s4258 + $0x34] sm:$0x1]
      %v4273 = vld [vmem:[%s4258 + $0x38] sm:$0xf]
      %v4274 = vld [vmem:[%s4258 + $0x3c] sm:$0x1]
      %v4275 = vld [vmem:[%s4258 + $0x40] sm:$0xf]
      %v4276 = vld [vmem:[%s4258 + $0x44] sm:$0x1]
      %v4277 = vld [vmem:[%s4258 + $0x48] sm:$0xf]
      %v4278 = vld [vmem:[%s4258 + $0x4c] sm:$0x1]
      %v4279 = vld [vmem:[%s4258 + $0x50] sm:$0xf]
      %v4280 = vld [vmem:[%s4258 + $0x54] sm:$0x1]
      %v4281 = vld [vmem:[%s4258 + $0x58] sm:$0xf]
      %v4282 = vld [vmem:[%s4258 + $0x5c] sm:$0x1]
      %v4283 = vld [vmem:[%s4258 + $0x60] sm:$0xf]
      %v4284 = vld [vmem:[%s4258 + $0x64] sm:$0x1]
      %v4285 = vld [vmem:[%s4258 + $0x68] sm:$0xf]
      %v4286 = vld [vmem:[%s4258 + $0x6c] sm:$0x1]
      %v4287 = vld [vmem:[%s4258 + $0x70] sm:$0xf]
      %v4288 = vld [vmem:[%s4258 + $0x74] sm:$0x1]
      %v4289 = vld [vmem:[%s4258 + $0x78] sm:$0xf]
      %v4290 = vld [vmem:[%s4258 + $0x7c] sm:$0x1]
      %v4291 = vld [vmem:[%s4258 + $0x80] sm:$0xf]
      %v4292 = vld [vmem:[%s4258 + $0x84] sm:$0x1]
      %v4293 = vld [vmem:[%s4258 + $0x88] sm:$0xf]
      %v4294 = vld [vmem:[%s4258 + $0x8c] sm:$0x1]
      %v4295 = vld [vmem:[%s4258 + $0x90] sm:$0xf]
      %v4296 = vld [vmem:[%s4258 + $0x94] sm:$0x1]
      %v4297 = vld [vmem:[%s4258 + $0x98] sm:$0xf]
      %v4298 = vld [vmem:[%s4258 + $0x9c] sm:$0x1]
      %v4299 = vld [vmem:[%s4258 + $0xa0] sm:$0xf]
      %v4300 = vld [vmem:[%s4258 + $0xa4] sm:$0x1]
      %v4301 = vld [vmem:[%s4258 + $0xa8] sm:$0xf]
      %v4302 = vld [vmem:[%s4258 + $0xac] sm:$0x1]
      %v4303 = vld [vmem:[%s4258 + $0xb0] sm:$0xf]
      %v4304 = vld [vmem:[%s4258 + $0xb4] sm:$0x1]
      %v4305 = vld [vmem:[%s4258 + $0xb8] sm:$0xf]
      %v4306 = vld [vmem:[%s4258 + $0xbc] sm:$0x1]
      %v4307 = vld [vmem:[%s4258 + $0xc0] sm:$0xf]
      %v4308 = vld [vmem:[%s4258 + $0xc4] sm:$0x1]
      %v4309 = vld [vmem:[%s4258 + $0xc8] sm:$0xf]
      %v4310 = vld [vmem:[%s4258 + $0xcc] sm:$0x1]
      %v4311 = vld [vmem:[%s4258 + $0xd0] sm:$0xf]
      %v4312 = vld [vmem:[%s4258 + $0xd4] sm:$0x1]
      %v4313 = vld [vmem:[%s4258 + $0xd8] sm:$0xf]
      %v4314 = vld [vmem:[%s4258 + $0xdc] sm:$0x1]
      %v4315 = vld [vmem:[%s4258 + $0xe0] sm:$0xf]
      %v4316 = vld [vmem:[%s4258 + $0xe4] sm:$0x1]
      %v4317 = vld [vmem:[%s4258 + $0xe8] sm:$0xf]
      %v4318 = vld [vmem:[%s4258 + $0xec] sm:$0x1]
      %v4319 = vld [vmem:[%s4258 + $0xf0] sm:$0xf]
      %v4320 = vld [vmem:[%s4258 + $0xf4] sm:$0x1]
      %v4321 = vld [vmem:[%s4258 + $0xf8] sm:$0xf]
      %v4322 = vld [vmem:[%s4258 + $0xfc] sm:$0x1]
      %v4323 = vld [vmem:[%s4258 + $0x100] sm:$0xf]
      %v4324 = vld [vmem:[%s4258 + $0x104] sm:$0x1]
      %v4325 = vld [vmem:[%s4258 + $0x108] sm:$0xf]
      %v4326 = vld [vmem:[%s4258 + $0x10c] sm:$0x1]
      %v4327 = vld [vmem:[%s4258 + $0x110] sm:$0xf]
      %v4328 = vld [vmem:[%s4258 + $0x114] sm:$0x1]
      %v4329 = vld [vmem:[%s4258 + $0x118] sm:$0xf]
      %v4330 = vld [vmem:[%s4258 + $0x11c] sm:$0x1]
      %v4331 = vld [vmem:[%s4258 + $0x120] sm:$0xf]
      %v4332 = vld [vmem:[%s4258 + $0x124] sm:$0x1]
      %v4333 = vld [vmem:[%s4258 + $0x128] sm:$0xf]
      %v4334 = vld [vmem:[%s4258 + $0x12c] sm:$0x1]
      %v4335 = vld [vmem:[%s4258 + $0x130] sm:$0xf]
      %v4336 = vld [vmem:[%s4258 + $0x134] sm:$0x1]
      %v4337 = vld [vmem:[%s4258 + $0x138] sm:$0xf]
      %v4338 = vld [vmem:[%s4258 + $0x13c] sm:$0x1]
      %v4371 = vunpack.c.l.b16 %v4259
      %v4372 = vunpack.c.l.b16 %v4261
      %v4373 = vunpack.c.l.b16 %v4263
      %v4374 = vunpack.c.l.b16 %v4265
      %v4375 = vunpack.c.l.b16 %v4267
      %v4376 = vunpack.c.l.b16 %v4269
      %v4377 = vunpack.c.l.b16 %v4271
      %v4378 = vunpack.c.l.b16 %v4273
      %v4379 = vunpack.c.l.b16 %v4279
      %v4380 = vunpack.c.l.b16 %v4281
      %v4381 = vunpack.c.l.b16 %v4283
      %v4382 = vunpack.c.l.b16 %v4285
      %v4383 = vunpack.c.l.b16 %v4287
      %v4384 = vunpack.c.l.b16 %v4289
      %v4385 = vunpack.c.l.b16 %v4291
      %v4386 = vunpack.c.l.b16 %v4293
      %v4387 = vunpack.c.l.b16 %v4299
      %v4388 = vunpack.c.l.b16 %v4301
      %v4389 = vunpack.c.l.b16 %v4303
      %v4390 = vunpack.c.l.b16 %v4305
      %v4391 = vunpack.c.l.b16 %v4307
      %v4392 = vunpack.c.l.b16 %v4309
      %v4393 = vunpack.c.l.b16 %v4311
      %v4394 = vunpack.c.l.b16 %v4313
      %v4395 = vunpack.c.l.b16 %v4319
      %v4396 = vunpack.c.l.b16 %v4321
      %v4397 = vunpack.c.l.b16 %v4323
      %v4398 = vunpack.c.l.b16 %v4325
      %v4399 = vunpack.c.l.b16 %v4327
      %v4400 = vunpack.c.l.b16 %v4329
      %v4401 = vunpack.c.l.b16 %v4331
      %v4402 = vunpack.c.l.b16 %v4333
      %v4403 = vpack.c.b16 %v4372, %v4371
      %v4404 = vpack.c.b16 %v4374, %v4373
      %v4405 = vpack.c.b16 %v4376, %v4375
      %v4406 = vpack.c.b16 %v4378, %v4377
      %v4407 = vpack.c.b16 %v4380, %v4379
      %v4408 = vpack.c.b16 %v4382, %v4381
      %v4409 = vpack.c.b16 %v4384, %v4383
      %v4410 = vpack.c.b16 %v4386, %v4385
      %v4411 = vpack.c.b16 %v4388, %v4387
      %v4412 = vpack.c.b16 %v4390, %v4389
      %v4413 = vpack.c.b16 %v4392, %v4391
      %v4414 = vpack.c.b16 %v4394, %v4393
      %v4415 = vpack.c.b16 %v4396, %v4395
      %v4416 = vpack.c.b16 %v4398, %v4397
      %v4417 = vpack.c.b16 %v4400, %v4399
      %v4418 = vpack.c.b16 %v4402, %v4401
      %4435 = vst.msk [vmem:[#allocation3] sm:$0xff] %vm417, %v4403
      %4436 = vst.msk [vmem:[#allocation3 + $0x8] sm:$0xff] %vm417, %v4404
      %4437 = vst.msk [vmem:[#allocation3 + $0x10] sm:$0xff] %vm417, %v4405
      %4438 = vst.msk [vmem:[#allocation3 + $0x18] sm:$0xff] %vm417, %v4406
      %4439 = vst.msk [vmem:[#allocation3 + $0x20] sm:$0xff] %vm417, %v4407
      %4440 = vst.msk [vmem:[#allocation3 + $0x28] sm:$0xff] %vm417, %v4408
      %4441 = vst.msk [vmem:[#allocation3 + $0x30] sm:$0xff] %vm417, %v4409
      %4442 = vst.msk [vmem:[#allocation3 + $0x38] sm:$0xff] %vm417, %v4410
      %4443 = vst.msk [vmem:[#allocation3 + $0x40] sm:$0xff] %vm417, %v4411
      %4444 = vst.msk [vmem:[#allocation3 + $0x48] sm:$0xff] %vm417, %v4412
      %4445 = vst.msk [vmem:[#allocation3 + $0x50] sm:$0xff] %vm417, %v4413
      %4446 = vst.msk [vmem:[#allocation3 + $0x58] sm:$0xff] %vm417, %v4414
      %4447 = vst.msk [vmem:[#allocation3 + $0x60] sm:$0xff] %vm417, %v4415
      %4448 = vst.msk [vmem:[#allocation3 + $0x68] sm:$0xff] %vm417, %v4416
      %4449 = vst.msk [vmem:[#allocation3 + $0x70] sm:$0xff] %vm417, %v4417
      %4450 = vst.msk [vmem:[#allocation3 + $0x78] sm:$0xff] %vm417, %v4418
      %v4452 = vshrl.u32 %v4259, 16
      %v4454 = vrot.slane %v4452, 4
      %v4455 = vshll.u32 %v4259, 16
      %v4457 = vrot.slane %v4455, 5
      %v4458 = vor.u32 %v4454, %v4457
      %v4459 = vrot.slane %v4458, 4
      %v4461 = vshll.u32 %v4260, 16
      %v4463 = vrot.slane %v4461, 5
      %v4464 = vsel %vm436, %v4459, %v4463
      %v4466 = vshrl.u32 %v4261, 16
      %v4468 = vrot.slane %v4466, 4
      %v4469 = vshll.u32 %v4261, 16
      %v4471 = vrot.slane %v4469, 5
      %v4472 = vor.u32 %v4468, %v4471
      %v4473 = vrot.slane %v4472, 4
      %v4475 = vshll.u32 %v4262, 16
      %v4477 = vrot.slane %v4475, 5
      %v4478 = vsel %vm436, %v4473, %v4477
      %v4480 = vshrl.u32 %v4263, 16
      %v4482 = vrot.slane %v4480, 4
      %v4483 = vshll.u32 %v4263, 16
      %v4485 = vrot.slane %v4483, 5
      %v4486 = vor.u32 %v4482, %v4485
      %v4487 = vrot.slane %v4486, 4
      %v4489 = vshll.u32 %v4264, 16
      %v4491 = vrot.slane %v4489, 5
      %v4492 = vsel %vm436, %v4487, %v4491
      %v4494 = vshrl.u32 %v4265, 16
      %v4496 = vrot.slane %v4494, 4
      %v4497 = vshll.u32 %v4265, 16
      %v4499 = vrot.slane %v4497, 5
      %v4500 = vor.u32 %v4496, %v4499
      %v4501 = vrot.slane %v4500, 4
      %v4503 = vshll.u32 %v4266, 16
      %v4505 = vrot.slane %v4503, 5
      %v4506 = vsel %vm436, %v4501, %v4505
      %v4508 = vshrl.u32 %v4267, 16
      %v4510 = vrot.slane %v4508, 4
      %v4511 = vshll.u32 %v4267, 16
      %v4513 = vrot.slane %v4511, 5
      %v4514 = vor.u32 %v4510, %v4513
      %v4515 = vrot.slane %v4514, 4
      %v4517 = vshll.u32 %v4268, 16
      %v4519 = vrot.slane %v4517, 5
      %v4520 = vsel %vm436, %v4515, %v4519
      %v4522 = vshrl.u32 %v4269, 16
      %v4524 = vrot.slane %v4522, 4
      %v4525 = vshll.u32 %v4269, 16
      %v4527 = vrot.slane %v4525, 5
      %v4528 = vor.u32 %v4524, %v4527
      %v4529 = vrot.slane %v4528, 4
      %v4531 = vshll.u32 %v4270, 16
      %v4533 = vrot.slane %v4531, 5
      %v4534 = vsel %vm436, %v4529, %v4533
      %v4536 = vshrl.u32 %v4271, 16
      %v4538 = vrot.slane %v4536, 4
      %v4539 = vshll.u32 %v4271, 16
      %v4541 = vrot.slane %v4539, 5
      %v4542 = vor.u32 %v4538, %v4541
      %v4543 = vrot.slane %v4542, 4
      %v4545 = vshll.u32 %v4272, 16
      %v4547 = vrot.slane %v4545, 5
      %v4548 = vsel %vm436, %v4543, %v4547
      %v4550 = vshrl.u32 %v4273, 16
      %v4552 = vrot.slane %v4550, 4
      %v4553 = vshll.u32 %v4273, 16
      %v4555 = vrot.slane %v4553, 5
      %v4556 = vor.u32 %v4552, %v4555
      %v4557 = vrot.slane %v4556, 4
      %v4559 = vshll.u32 %v4274, 16
      %v4561 = vrot.slane %v4559, 5
      %v4562 = vsel %vm436, %v4557, %v4561
      %v4564 = vshrl.u32 %v4279, 16
      %v4566 = vrot.slane %v4564, 4
      %v4567 = vshll.u32 %v4279, 16
      %v4569 = vrot.slane %v4567, 5
      %v4570 = vor.u32 %v4566, %v4569
      %v4571 = vrot.slane %v4570, 4
      %v4573 = vshll.u32 %v4280, 16
      %v4575 = vrot.slane %v4573, 5
      %v4576 = vsel %vm436, %v4571, %v4575
      %v4578 = vshrl.u32 %v4281, 16
      %v4580 = vrot.slane %v4578, 4
      %v4581 = vshll.u32 %v4281, 16
      %v4583 = vrot.slane %v4581, 5
      %v4584 = vor.u32 %v4580, %v4583
      %v4585 = vrot.slane %v4584, 4
      %v4587 = vshll.u32 %v4282, 16
      %v4589 = vrot.slane %v4587, 5
      %v4590 = vsel %vm436, %v4585, %v4589
      %v4592 = vshrl.u32 %v4283, 16
      %v4594 = vrot.slane %v4592, 4
      %v4595 = vshll.u32 %v4283, 16
      %v4597 = vrot.slane %v4595, 5
      %v4598 = vor.u32 %v4594, %v4597
      %v4599 = vrot.slane %v4598, 4
      %v4601 = vshll.u32 %v4284, 16
      %v4603 = vrot.slane %v4601, 5
      %v4604 = vsel %vm436, %v4599, %v4603
      %v4606 = vshrl.u32 %v4285, 16
      %v4608 = vrot.slane %v4606, 4
      %v4609 = vshll.u32 %v4285, 16
      %v4611 = vrot.slane %v4609, 5
      %v4612 = vor.u32 %v4608, %v4611
      %v4613 = vrot.slane %v4612, 4
      %v4615 = vshll.u32 %v4286, 16
      %v4617 = vrot.slane %v4615, 5
      %v4618 = vsel %vm436, %v4613, %v4617
      %v4620 = vshrl.u32 %v4287, 16
      %v4622 = vrot.slane %v4620, 4
      %v4623 = vshll.u32 %v4287, 16
      %v4625 = vrot.slane %v4623, 5
      %v4626 = vor.u32 %v4622, %v4625
      %v4627 = vrot.slane %v4626, 4
      %v4629 = vshll.u32 %v4288, 16
      %v4631 = vrot.slane %v4629, 5
      %v4632 = vsel %vm436, %v4627, %v4631
      %v4634 = vshrl.u32 %v4289, 16
      %v4636 = vrot.slane %v4634, 4
      %v4637 = vshll.u32 %v4289, 16
      %v4639 = vrot.slane %v4637, 5
      %v4640 = vor.u32 %v4636, %v4639
      %v4641 = vrot.slane %v4640, 4
      %v4643 = vshll.u32 %v4290, 16
      %v4645 = vrot.slane %v4643, 5
      %v4646 = vsel %vm436, %v4641, %v4645
      %v4648 = vshrl.u32 %v4291, 16
      %v4650 = vrot.slane %v4648, 4
      %v4651 = vshll.u32 %v4291, 16
      %v4653 = vrot.slane %v4651, 5
      %v4654 = vor.u32 %v4650, %v4653
      %v4655 = vrot.slane %v4654, 4
      %v4657 = vshll.u32 %v4292, 16
      %v4659 = vrot.slane %v4657, 5
      %v4660 = vsel %vm436, %v4655, %v4659
      %v4662 = vshrl.u32 %v4293, 16
      %v4664 = vrot.slane %v4662, 4
      %v4665 = vshll.u32 %v4293, 16
      %v4667 = vrot.slane %v4665, 5
      %v4668 = vor.u32 %v4664, %v4667
      %v4669 = vrot.slane %v4668, 4
      %v4671 = vshll.u32 %v4294, 16
      %v4673 = vrot.slane %v4671, 5
      %v4674 = vsel %vm436, %v4669, %v4673
      %v4676 = vshrl.u32 %v4299, 16
      %v4678 = vrot.slane %v4676, 4
      %v4679 = vshll.u32 %v4299, 16
      %v4681 = vrot.slane %v4679, 5
      %v4682 = vor.u32 %v4678, %v4681
      %v4683 = vrot.slane %v4682, 4
      %v4685 = vshll.u32 %v4300, 16
      %v4687 = vrot.slane %v4685, 5
      %v4688 = vsel %vm436, %v4683, %v4687
      %v4690 = vshrl.u32 %v4301, 16
      %v4692 = vrot.slane %v4690, 4
      %v4693 = vshll.u32 %v4301, 16
      %v4695 = vrot.slane %v4693, 5
      %v4696 = vor.u32 %v4692, %v4695
      %v4697 = vrot.slane %v4696, 4
      %v4699 = vshll.u32 %v4302, 16
      %v4701 = vrot.slane %v4699, 5
      %v4702 = vsel %vm436, %v4697, %v4701
      %v4704 = vshrl.u32 %v4303, 16
      %v4706 = vrot.slane %v4704, 4
      %v4707 = vshll.u32 %v4303, 16
      %v4709 = vrot.slane %v4707, 5
      %v4710 = vor.u32 %v4706, %v4709
      %v4711 = vrot.slane %v4710, 4
      %v4713 = vshll.u32 %v4304, 16
      %v4715 = vrot.slane %v4713, 5
      %v4716 = vsel %vm436, %v4711, %v4715
      %v4718 = vshrl.u32 %v4305, 16
      %v4720 = vrot.slane %v4718, 4
      %v4721 = vshll.u32 %v4305, 16
      %v4723 = vrot.slane %v4721, 5
      %v4724 = vor.u32 %v4720, %v4723
      %v4725 = vrot.slane %v4724, 4
      %v4727 = vshll.u32 %v4306, 16
      %v4729 = vrot.slane %v4727, 5
      %v4730 = vsel %vm436, %v4725, %v4729
      %v4732 = vshrl.u32 %v4307, 16
      %v4734 = vrot.slane %v4732, 4
      %v4735 = vshll.u32 %v4307, 16
      %v4737 = vrot.slane %v4735, 5
      %v4738 = vor.u32 %v4734, %v4737
      %v4739 = vrot.slane %v4738, 4
      %v4741 = vshll.u32 %v4308, 16
      %v4743 = vrot.slane %v4741, 5
      %v4744 = vsel %vm436, %v4739, %v4743
      %v4746 = vshrl.u32 %v4309, 16
      %v4748 = vrot.slane %v4746, 4
      %v4749 = vshll.u32 %v4309, 16
      %v4751 = vrot.slane %v4749, 5
      %v4752 = vor.u32 %v4748, %v4751
      %v4753 = vrot.slane %v4752, 4
      %v4755 = vshll.u32 %v4310, 16
      %v4757 = vrot.slane %v4755, 5
      %v4758 = vsel %vm436, %v4753, %v4757
      %v4760 = vshrl.u32 %v4311, 16
      %v4762 = vrot.slane %v4760, 4
      %v4763 = vshll.u32 %v4311, 16
      %v4765 = vrot.slane %v4763, 5
      %v4766 = vor.u32 %v4762, %v4765
      %v4767 = vrot.slane %v4766, 4
      %v4769 = vshll.u32 %v4312, 16
      %v4771 = vrot.slane %v4769, 5
      %v4772 = vsel %vm436, %v4767, %v4771
      %v4774 = vshrl.u32 %v4313, 16
      %v4776 = vrot.slane %v4774, 4
      %v4777 = vshll.u32 %v4313, 16
      %v4779 = vrot.slane %v4777, 5
      %v4780 = vor.u32 %v4776, %v4779
      %v4781 = vrot.slane %v4780, 4
      %v4783 = vshll.u32 %v4314, 16
      %v4785 = vrot.slane %v4783, 5
      %v4786 = vsel %vm436, %v4781, %v4785
      %v4788 = vshrl.u32 %v4319, 16
      %v4790 = vrot.slane %v4788, 4
      %v4791 = vshll.u32 %v4319, 16
      %v4793 = vrot.slane %v4791, 5
      %v4794 = vor.u32 %v4790, %v4793
      %v4795 = vrot.slane %v4794, 4
      %v4797 = vshll.u32 %v4320, 16
      %v4799 = vrot.slane %v4797, 5
      %v4800 = vsel %vm436, %v4795, %v4799
      %v4802 = vshrl.u32 %v4321, 16
      %v4804 = vrot.slane %v4802, 4
      %v4805 = vshll.u32 %v4321, 16
      %v4807 = vrot.slane %v4805, 5
      %v4808 = vor.u32 %v4804, %v4807
      %v4809 = vrot.slane %v4808, 4
      %v4811 = vshll.u32 %v4322, 16
      %v4813 = vrot.slane %v4811, 5
      %v4814 = vsel %vm436, %v4809, %v4813
      %v4816 = vshrl.u32 %v4323, 16
      %v4818 = vrot.slane %v4816, 4
      %v4819 = vshll.u32 %v4323, 16
      %v4821 = vrot.slane %v4819, 5
      %v4822 = vor.u32 %v4818, %v4821
      %v4823 = vrot.slane %v4822, 4
      %v4825 = vshll.u32 %v4324, 16
      %v4827 = vrot.slane %v4825, 5
      %v4828 = vsel %vm436, %v4823, %v4827
      %v4830 = vshrl.u32 %v4325, 16
      %v4832 = vrot.slane %v4830, 4
      %v4833 = vshll.u32 %v4325, 16
      %v4835 = vrot.slane %v4833, 5
      %v4836 = vor.u32 %v4832, %v4835
      %v4837 = vrot.slane %v4836, 4
      %v4839 = vshll.u32 %v4326, 16
      %v4841 = vrot.slane %v4839, 5
      %v4842 = vsel %vm436, %v4837, %v4841
      %v4844 = vshrl.u32 %v4327, 16
      %v4846 = vrot.slane %v4844, 4
      %v4847 = vshll.u32 %v4327, 16
      %v4849 = vrot.slane %v4847, 5
      %v4850 = vor.u32 %v4846, %v4849
      %v4851 = vrot.slane %v4850, 4
      %v4853 = vshll.u32 %v4328, 16
      %v4855 = vrot.slane %v4853, 5
      %v4856 = vsel %vm436, %v4851, %v4855
      %v4858 = vshrl.u32 %v4329, 16
      %v4860 = vrot.slane %v4858, 4
      %v4861 = vshll.u32 %v4329, 16
      %v4863 = vrot.slane %v4861, 5
      %v4864 = vor.u32 %v4860, %v4863
      %v4865 = vrot.slane %v4864, 4
      %v4867 = vshll.u32 %v4330, 16
      %v4869 = vrot.slane %v4867, 5
      %v4870 = vsel %vm436, %v4865, %v4869
      %v4872 = vshrl.u32 %v4331, 16
      %v4874 = vrot.slane %v4872, 4
      %v4875 = vshll.u32 %v4331, 16
      %v4877 = vrot.slane %v4875, 5
      %v4878 = vor.u32 %v4874, %v4877
      %v4879 = vrot.slane %v4878, 4
      %v4881 = vshll.u32 %v4332, 16
      %v4883 = vrot.slane %v4881, 5
      %v4884 = vsel %vm436, %v4879, %v4883
      %v4886 = vshrl.u32 %v4333, 16
      %v4888 = vrot.slane %v4886, 4
      %v4889 = vshll.u32 %v4333, 16
      %v4891 = vrot.slane %v4889, 5
      %v4892 = vor.u32 %v4888, %v4891
      %v4893 = vrot.slane %v4892, 4
      %v4895 = vshll.u32 %v4334, 16
      %v4897 = vrot.slane %v4895, 5
      %v4898 = vsel %vm436, %v4893, %v4897
      %v4899 = vunpack.c.l.b16 %v4464
      %v4900 = vunpack.c.l.b16 %v4478
      %v4901 = vunpack.c.l.b16 %v4492
      %v4902 = vunpack.c.l.b16 %v4506
      %v4903 = vunpack.c.l.b16 %v4520
      %v4904 = vunpack.c.l.b16 %v4534
      %v4905 = vunpack.c.l.b16 %v4548
      %v4906 = vunpack.c.l.b16 %v4562
      %v4907 = vunpack.c.l.b16 %v4576
      %v4908 = vunpack.c.l.b16 %v4590
      %v4909 = vunpack.c.l.b16 %v4604
      %v4910 = vunpack.c.l.b16 %v4618
      %v4911 = vunpack.c.l.b16 %v4632
      %v4912 = vunpack.c.l.b16 %v4646
      %v4913 = vunpack.c.l.b16 %v4660
      %v4914 = vunpack.c.l.b16 %v4674
      %v4915 = vunpack.c.l.b16 %v4688
      %v4916 = vunpack.c.l.b16 %v4702
      %v4917 = vunpack.c.l.b16 %v4716
      %v4918 = vunpack.c.l.b16 %v4730
      %v4919 = vunpack.c.l.b16 %v4744
      %v4920 = vunpack.c.l.b16 %v4758
      %v4921 = vunpack.c.l.b16 %v4772
      %v4922 = vunpack.c.l.b16 %v4786
      %v4923 = vunpack.c.l.b16 %v4800
      %v4924 = vunpack.c.l.b16 %v4814
      %v4925 = vunpack.c.l.b16 %v4828
      %v4926 = vunpack.c.l.b16 %v4842
      %v4927 = vunpack.c.l.b16 %v4856
      %v4928 = vunpack.c.l.b16 %v4870
      %v4929 = vunpack.c.l.b16 %v4884
      %v4930 = vunpack.c.l.b16 %v4898
      %v4931 = vpack.c.b16 %v4900, %v4899
      %v4932 = vpack.c.b16 %v4902, %v4901
      %v4933 = vpack.c.b16 %v4904, %v4903
      %v4934 = vpack.c.b16 %v4906, %v4905
      %v4935 = vpack.c.b16 %v4908, %v4907
      %v4936 = vpack.c.b16 %v4910, %v4909
      %v4937 = vpack.c.b16 %v4912, %v4911
      %v4938 = vpack.c.b16 %v4914, %v4913
      %v4939 = vpack.c.b16 %v4916, %v4915
      %v4940 = vpack.c.b16 %v4918, %v4917
      %v4941 = vpack.c.b16 %v4920, %v4919
      %v4942 = vpack.c.b16 %v4922, %v4921
      %v4943 = vpack.c.b16 %v4924, %v4923
      %v4944 = vpack.c.b16 %v4926, %v4925
      %v4945 = vpack.c.b16 %v4928, %v4927
      %v4946 = vpack.c.b16 %v4930, %v4929
      %4947 = vrot.lane.b32.xlu0 %v4931, 4
      %v4948 = vpop.permute.xlu0 %4947
      %4949 = vrot.lane.b32.xlu0 %v4932, 4
      %v4950 = vpop.permute.xlu0 %4949
      %4951 = vrot.lane.b32.xlu0 %v4933, 4
      %v4952 = vpop.permute.xlu0 %4951
      %4953 = vrot.lane.b32.xlu0 %v4934, 4
      %v4954 = vpop.permute.xlu0 %4953
      %4955 = vrot.lane.b32.xlu0 %v4935, 4
      %v4956 = vpop.permute.xlu0 %4955
      %4957 = vrot.lane.b32.xlu0 %v4936, 4
      %v4958 = vpop.permute.xlu0 %4957
      %4959 = vrot.lane.b32.xlu0 %v4937, 4
      %v4960 = vpop.permute.xlu0 %4959
      %4961 = vrot.lane.b32.xlu0 %v4938, 4
      %v4962 = vpop.permute.xlu0 %4961
      %4963 = vrot.lane.b32.xlu0 %v4939, 4
      %v4964 = vpop.permute.xlu0 %4963
      %4965 = vrot.lane.b32.xlu0 %v4940, 4
      %v4966 = vpop.permute.xlu0 %4965
      %4967 = vrot.lane.b32.xlu0 %v4941, 4
      %v4968 = vpop.permute.xlu0 %4967
      %4969 = vrot.lane.b32.xlu0 %v4942, 4
      %v4970 = vpop.permute.xlu0 %4969
      %4971 = vrot.lane.b32.xlu0 %v4943, 4
      %v4972 = vpop.permute.xlu0 %4971
      %4973 = vrot.lane.b32.xlu0 %v4944, 4
      %v4974 = vpop.permute.xlu0 %4973
      %4975 = vrot.lane.b32.xlu0 %v4945, 4
      %v4976 = vpop.permute.xlu0 %4975
      %4977 = vrot.lane.b32.xlu0 %v4946, 4
      %v4978 = vpop.permute.xlu0 %4977
      %4995 = vst.msk [vmem:[#allocation3] sm:$0xff] %vm981, %v4948
      %4996 = vst.msk [vmem:[#allocation3 + $0x8] sm:$0xff] %vm981, %v4950
      %4997 = vst.msk [vmem:[#allocation3 + $0x10] sm:$0xff] %vm981, %v4952
      %4998 = vst.msk [vmem:[#allocation3 + $0x18] sm:$0xff] %vm981, %v4954
      %4999 = vst.msk [vmem:[#allocation3 + $0x20] sm:$0xff] %vm981, %v4956
      %5000 = vst.msk [vmem:[#allocation3 + $0x28] sm:$0xff] %vm981, %v4958
      %5001 = vst.msk [vmem:[#allocation3 + $0x30] sm:$0xff] %vm981, %v4960
      %5002 = vst.msk [vmem:[#allocation3 + $0x38] sm:$0xff] %vm981, %v4962
      %5003 = vst.msk [vmem:[#allocation3 + $0x40] sm:$0xff] %vm981, %v4964
      %5004 = vst.msk [vmem:[#allocation3 + $0x48] sm:$0xff] %vm981, %v4966
      %5005 = vst.msk [vmem:[#allocation3 + $0x50] sm:$0xff] %vm981, %v4968
      %5006 = vst.msk [vmem:[#allocation3 + $0x58] sm:$0xff] %vm981, %v4970
      %5007 = vst.msk [vmem:[#allocation3 + $0x60] sm:$0xff] %vm981, %v4972
      %5008 = vst.msk [vmem:[#allocation3 + $0x68] sm:$0xff] %vm981, %v4974
      %5009 = vst.msk [vmem:[#allocation3 + $0x70] sm:$0xff] %vm981, %v4976
      %5010 = vst.msk [vmem:[#allocation3 + $0x78] sm:$0xff] %vm981, %v4978
      %v5043 = vrot.slane %v4259, 5
      %v5044 = vrot.slane %v5043, 4
      %v5045 = vrot.slane %v4260, 5
      %v5046 = vsel %vm1032, %v5044, %v5045
      %v5047 = vrot.slane %v4261, 5
      %v5048 = vrot.slane %v5047, 4
      %v5049 = vrot.slane %v4262, 5
      %v5050 = vsel %vm1032, %v5048, %v5049
      %v5051 = vrot.slane %v4263, 5
      %v5052 = vrot.slane %v5051, 4
      %v5053 = vrot.slane %v4264, 5
      %v5054 = vsel %vm1032, %v5052, %v5053
      %v5055 = vrot.slane %v4265, 5
      %v5056 = vrot.slane %v5055, 4
      %v5057 = vrot.slane %v4266, 5
      %v5058 = vsel %vm1032, %v5056, %v5057
      %v5059 = vrot.slane %v4267, 5
      %v5060 = vrot.slane %v5059, 4
      %v5061 = vrot.slane %v4268, 5
      %v5062 = vsel %vm1032, %v5060, %v5061
      %v5063 = vrot.slane %v4269, 5
      %v5064 = vrot.slane %v5063, 4
      %v5065 = vrot.slane %v4270, 5
      %v5066 = vsel %vm1032, %v5064, %v5065
      %v5067 = vrot.slane %v4271, 5
      %v5068 = vrot.slane %v5067, 4
      %v5069 = vrot.slane %v4272, 5
      %v5070 = vsel %vm1032, %v5068, %v5069
      %v5071 = vrot.slane %v4273, 5
      %v5072 = vrot.slane %v5071, 4
      %v5073 = vrot.slane %v4274, 5
      %v5074 = vsel %vm1032, %v5072, %v5073
      %v5075 = vrot.slane %v4279, 5
      %v5076 = vrot.slane %v5075, 4
      %v5077 = vrot.slane %v4280, 5
      %v5078 = vsel %vm1032, %v5076, %v5077
      %v5079 = vrot.slane %v4281, 5
      %v5080 = vrot.slane %v5079, 4
      %v5081 = vrot.slane %v4282, 5
      %v5082 = vsel %vm1032, %v5080, %v5081
      %v5083 = vrot.slane %v4283, 5
      %v5084 = vrot.slane %v5083, 4
      %v5085 = vrot.slane %v4284, 5
      %v5086 = vsel %vm1032, %v5084, %v5085
      %v5087 = vrot.slane %v4285, 5
      %v5088 = vrot.slane %v5087, 4
      %v5089 = vrot.slane %v4286, 5
      %v5090 = vsel %vm1032, %v5088, %v5089
      %v5091 = vrot.slane %v4287, 5
      %v5092 = vrot.slane %v5091, 4
      %v5093 = vrot.slane %v4288, 5
      %v5094 = vsel %vm1032, %v5092, %v5093
      %v5095 = vrot.slane %v4289, 5
      %v5096 = vrot.slane %v5095, 4
      %v5097 = vrot.slane %v4290, 5
      %v5098 = vsel %vm1032, %v5096, %v5097
      %v5099 = vrot.slane %v4291, 5
      %v5100 = vrot.slane %v5099, 4
      %v5101 = vrot.slane %v4292, 5
      %v5102 = vsel %vm1032, %v5100, %v5101
      %v5103 = vrot.slane %v4293, 5
      %v5104 = vrot.slane %v5103, 4
      %v5105 = vrot.slane %v4294, 5
      %v5106 = vsel %vm1032, %v5104, %v5105
      %v5107 = vrot.slane %v4299, 5
      %v5108 = vrot.slane %v5107, 4
      %v5109 = vrot.slane %v4300, 5
      %v5110 = vsel %vm1032, %v5108, %v5109
      %v5111 = vrot.slane %v4301, 5
      %v5112 = vrot.slane %v5111, 4
      %v5113 = vrot.slane %v4302, 5
      %v5114 = vsel %vm1032, %v5112, %v5113
      %v5115 = vrot.slane %v4303, 5
      %v5116 = vrot.slane %v5115, 4
      %v5117 = vrot.slane %v4304, 5
      %v5118 = vsel %vm1032, %v5116, %v5117
      %v5119 = vrot.slane %v4305, 5
      %v5120 = vrot.slane %v5119, 4
      %v5121 = vrot.slane %v4306, 5
      %v5122 = vsel %vm1032, %v5120, %v5121
      %v5123 = vrot.slane %v4307, 5
      %v5124 = vrot.slane %v5123, 4
      %v5125 = vrot.slane %v4308, 5
      %v5126 = vsel %vm1032, %v5124, %v5125
      %v5127 = vrot.slane %v4309, 5
      %v5128 = vrot.slane %v5127, 4
      %v5129 = vrot.slane %v4310, 5
      %v5130 = vsel %vm1032, %v5128, %v5129
      %v5131 = vrot.slane %v4311, 5
      %v5132 = vrot.slane %v5131, 4
      %v5133 = vrot.slane %v4312, 5
      %v5134 = vsel %vm1032, %v5132, %v5133
      %v5135 = vrot.slane %v4313, 5
      %v5136 = vrot.slane %v5135, 4
      %v5137 = vrot.slane %v4314, 5
      %v5138 = vsel %vm1032, %v5136, %v5137
      %v5139 = vrot.slane %v4319, 5
      %v5140 = vrot.slane %v5139, 4
      %v5141 = vrot.slane %v4320, 5
      %v5142 = vsel %vm1032, %v5140, %v5141
      %v5143 = vrot.slane %v4321, 5
      %v5144 = vrot.slane %v5143, 4
      %v5145 = vrot.slane %v4322, 5
      %v5146 = vsel %vm1032, %v5144, %v5145
      %v5147 = vrot.slane %v4323, 5
      %v5148 = vrot.slane %v5147, 4
      %v5149 = vrot.slane %v4324, 5
      %v5150 = vsel %vm1032, %v5148, %v5149
      %v5151 = vrot.slane %v4325, 5
      %v5152 = vrot.slane %v5151, 4
      %v5153 = vrot.slane %v4326, 5
      %v5154 = vsel %vm1032, %v5152, %v5153
      %v5155 = vrot.slane %v4327, 5
      %v5156 = vrot.slane %v5155, 4
      %v5157 = vrot.slane %v4328, 5
      %v5158 = vsel %vm1032, %v5156, %v5157
      %v5159 = vrot.slane %v4329, 5
      %v5160 = vrot.slane %v5159, 4
      %v5161 = vrot.slane %v4330, 5
      %v5162 = vsel %vm1032, %v5160, %v5161
      %v5163 = vrot.slane %v4331, 5
      %v5164 = vrot.slane %v5163, 4
      %v5165 = vrot.slane %v4332, 5
      %v5166 = vsel %vm1032, %v5164, %v5165
      %v5167 = vrot.slane %v4333, 5
      %v5168 = vrot.slane %v5167, 4
      %v5169 = vrot.slane %v4334, 5
      %v5170 = vsel %vm1032, %v5168, %v5169
      %v5171 = vunpack.c.l.b16 %v5046
      %v5172 = vunpack.c.l.b16 %v5050
      %v5173 = vunpack.c.l.b16 %v5054
      %v5174 = vunpack.c.l.b16 %v5058
      %v5175 = vunpack.c.l.b16 %v5062
      %v5176 = vunpack.c.l.b16 %v5066
      %v5177 = vunpack.c.l.b16 %v5070
      %v5178 = vunpack.c.l.b16 %v5074
      %v5179 = vunpack.c.l.b16 %v5078
      %v5180 = vunpack.c.l.b16 %v5082
      %v5181 = vunpack.c.l.b16 %v5086
      %v5182 = vunpack.c.l.b16 %v5090
      %v5183 = vunpack.c.l.b16 %v5094
      %v5184 = vunpack.c.l.b16 %v5098
      %v5185 = vunpack.c.l.b16 %v5102
      %v5186 = vunpack.c.l.b16 %v5106
      %v5187 = vunpack.c.l.b16 %v5110
      %v5188 = vunpack.c.l.b16 %v5114
      %v5189 = vunpack.c.l.b16 %v5118
      %v5190 = vunpack.c.l.b16 %v5122
      %v5191 = vunpack.c.l.b16 %v5126
      %v5192 = vunpack.c.l.b16 %v5130
      %v5193 = vunpack.c.l.b16 %v5134
      %v5194 = vunpack.c.l.b16 %v5138
      %v5195 = vunpack.c.l.b16 %v5142
      %v5196 = vunpack.c.l.b16 %v5146
      %v5197 = vunpack.c.l.b16 %v5150
      %v5198 = vunpack.c.l.b16 %v5154
      %v5199 = vunpack.c.l.b16 %v5158
      %v5200 = vunpack.c.l.b16 %v5162
      %v5201 = vunpack.c.l.b16 %v5166
      %v5202 = vunpack.c.l.b16 %v5170
      %v5203 = vpack.c.b16 %v5172, %v5171
      %v5204 = vpack.c.b16 %v5174, %v5173
      %v5205 = vpack.c.b16 %v5176, %v5175
      %v5206 = vpack.c.b16 %v5178, %v5177
      %v5207 = vpack.c.b16 %v5180, %v5179
      %v5208 = vpack.c.b16 %v5182, %v5181
      %v5209 = vpack.c.b16 %v5184, %v5183
      %v5210 = vpack.c.b16 %v5186, %v5185
      %v5211 = vpack.c.b16 %v5188, %v5187
      %v5212 = vpack.c.b16 %v5190, %v5189
      %v5213 = vpack.c.b16 %v5192, %v5191
      %v5214 = vpack.c.b16 %v5194, %v5193
      %v5215 = vpack.c.b16 %v5196, %v5195
      %v5216 = vpack.c.b16 %v5198, %v5197
      %v5217 = vpack.c.b16 %v5200, %v5199
      %v5218 = vpack.c.b16 %v5202, %v5201
      %5219 = vrot.lane.b32.xlu0 %v5203, 8
      %v5220 = vpop.permute.xlu0 %5219
      %5221 = vrot.lane.b32.xlu0 %v5204, 8
      %v5222 = vpop.permute.xlu0 %5221
      %5223 = vrot.lane.b32.xlu0 %v5205, 8
      %v5224 = vpop.permute.xlu0 %5223
      %5225 = vrot.lane.b32.xlu0 %v5206, 8
      %v5226 = vpop.permute.xlu0 %5225
      %5227 = vrot.lane.b32.xlu0 %v5207, 8
      %v5228 = vpop.permute.xlu0 %5227
      %5229 = vrot.lane.b32.xlu0 %v5208, 8
      %v5230 = vpop.permute.xlu0 %5229
      %5231 = vrot.lane.b32.xlu0 %v5209, 8
      %v5232 = vpop.permute.xlu0 %5231
      %5233 = vrot.lane.b32.xlu0 %v5210, 8
      %v5234 = vpop.permute.xlu0 %5233
      %5235 = vrot.lane.b32.xlu0 %v5211, 8
      %v5236 = vpop.permute.xlu0 %5235
      %5237 = vrot.lane.b32.xlu0 %v5212, 8
      %v5238 = vpop.permute.xlu0 %5237
      %5239 = vrot.lane.b32.xlu0 %v5213, 8
      %v5240 = vpop.permute.xlu0 %5239
      %5241 = vrot.lane.b32.xlu0 %v5214, 8
      %v5242 = vpop.permute.xlu0 %5241
      %5243 = vrot.lane.b32.xlu0 %v5215, 8
      %v5244 = vpop.permute.xlu0 %5243
      %5245 = vrot.lane.b32.xlu0 %v5216, 8
      %v5246 = vpop.permute.xlu0 %5245
      %5247 = vrot.lane.b32.xlu0 %v5217, 8
      %v5248 = vpop.permute.xlu0 %5247
      %5249 = vrot.lane.b32.xlu0 %v5218, 8
      %v5250 = vpop.permute.xlu0 %5249
      %5267 = vst.msk [vmem:[#allocation3] sm:$0xff] %vm1257, %v5220
      %5268 = vst.msk [vmem:[#allocation3 + $0x8] sm:$0xff] %vm1257, %v5222
      %5269 = vst.msk [vmem:[#allocation3 + $0x10] sm:$0xff] %vm1257, %v5224
      %5270 = vst.msk [vmem:[#allocation3 + $0x18] sm:$0xff] %vm1257, %v5226
      %5271 = vst.msk [vmem:[#allocation3 + $0x20] sm:$0xff] %vm1257, %v5228
      %5272 = vst.msk [vmem:[#allocation3 + $0x28] sm:$0xff] %vm1257, %v5230
      %5273 = vst.msk [vmem:[#allocation3 + $0x30] sm:$0xff] %vm1257, %v5232
      %5274 = vst.msk [vmem:[#allocation3 + $0x38] sm:$0xff] %vm1257, %v5234
      %5275 = vst.msk [vmem:[#allocation3 + $0x40] sm:$0xff] %vm1257, %v5236
      %5276 = vst.msk [vmem:[#allocation3 + $0x48] sm:$0xff] %vm1257, %v5238
      %5277 = vst.msk [vmem:[#allocation3 + $0x50] sm:$0xff] %vm1257, %v5240
      %5278 = vst.msk [vmem:[#allocation3 + $0x58] sm:$0xff] %vm1257, %v5242
      %5279 = vst.msk [vmem:[#allocation3 + $0x60] sm:$0xff] %vm1257, %v5244
      %5280 = vst.msk [vmem:[#allocation3 + $0x68] sm:$0xff] %vm1257, %v5246
      %5281 = vst.msk [vmem:[#allocation3 + $0x70] sm:$0xff] %vm1257, %v5248
      %5282 = vst.msk [vmem:[#allocation3 + $0x78] sm:$0xff] %vm1257, %v5250
      %v5287 = vunpack.c.l.b16 %v4275
      %v5288 = vunpack.c.l.b16 %v4295
      %v5289 = vunpack.c.l.b16 %v4315
      %v5290 = vunpack.c.l.b16 %v4335
      %v5291 = vpack.c.b16 %v4373, %v4372
      %v5292 = vpack.c.b16 %v4375, %v4374
      %v5293 = vpack.c.b16 %v4377, %v4376
      %v5294 = vpack.c.b16 %v5287, %v4378
      %v5295 = vpack.c.b16 %v4381, %v4380
      %v5296 = vpack.c.b16 %v4383, %v4382
      %v5297 = vpack.c.b16 %v4385, %v4384
      %v5298 = vpack.c.b16 %v5288, %v4386
      %v5299 = vpack.c.b16 %v4389, %v4388
      %v5300 = vpack.c.b16 %v4391, %v4390
      %v5301 = vpack.c.b16 %v4393, %v4392
      %v5302 = vpack.c.b16 %v5289, %v4394
      %v5303 = vpack.c.b16 %v4397, %v4396
      %v5304 = vpack.c.b16 %v4399, %v4398
      %v5305 = vpack.c.b16 %v4401, %v4400
      %v5306 = vpack.c.b16 %v5290, %v4402
      %5307 = vrot.lane.b32.xlu0 %v5291, 12
      %v5308 = vpop.permute.xlu0 %5307
      %5309 = vrot.lane.b32.xlu0 %v5292, 12
      %v5310 = vpop.permute.xlu0 %5309
      %5311 = vrot.lane.b32.xlu0 %v5293, 12
      %v5312 = vpop.permute.xlu0 %5311
      %5313 = vrot.lane.b32.xlu0 %v5294, 12
      %v5314 = vpop.permute.xlu0 %5313
      %5315 = vrot.lane.b32.xlu0 %v5295, 12
      %v5316 = vpop.permute.xlu0 %5315
      %5317 = vrot.lane.b32.xlu0 %v5296, 12
      %v5318 = vpop.permute.xlu0 %5317
      %5319 = vrot.lane.b32.xlu0 %v5297, 12
      %v5320 = vpop.permute.xlu0 %5319
      %5321 = vrot.lane.b32.xlu0 %v5298, 12
      %v5322 = vpop.permute.xlu0 %5321
      %5323 = vrot.lane.b32.xlu0 %v5299, 12
      %v5324 = vpop.permute.xlu0 %5323
      %5325 = vrot.lane.b32.xlu0 %v5300, 12
      %v5326 = vpop.permute.xlu0 %5325
      %5327 = vrot.lane.b32.xlu0 %v5301, 12
      %v5328 = vpop.permute.xlu0 %5327
      %5329 = vrot.lane.b32.xlu0 %v5302, 12
      %v5330 = vpop.permute.xlu0 %5329
      %5331 = vrot.lane.b32.xlu0 %v5303, 12
      %v5332 = vpop.permute.xlu0 %5331
      %5333 = vrot.lane.b32.xlu0 %v5304, 12
      %v5334 = vpop.permute.xlu0 %5333
      %5335 = vrot.lane.b32.xlu0 %v5305, 12
      %v5336 = vpop.permute.xlu0 %5335
      %5337 = vrot.lane.b32.xlu0 %v5306, 12
      %v5338 = vpop.permute.xlu0 %5337
      %5355 = vst.msk [vmem:[#allocation3] sm:$0xff] %vm1346, %v5308
      %5356 = vst.msk [vmem:[#allocation3 + $0x8] sm:$0xff] %vm1346, %v5310
      %5357 = vst.msk [vmem:[#allocation3 + $0x10] sm:$0xff] %vm1346, %v5312
      %5358 = vst.msk [vmem:[#allocation3 + $0x18] sm:$0xff] %vm1346, %v5314
      %5359 = vst.msk [vmem:[#allocation3 + $0x20] sm:$0xff] %vm1346, %v5316
      %5360 = vst.msk [vmem:[#allocation3 + $0x28] sm:$0xff] %vm1346, %v5318
      %5361 = vst.msk [vmem:[#allocation3 + $0x30] sm:$0xff] %vm1346, %v5320
      %5362 = vst.msk [vmem:[#allocation3 + $0x38] sm:$0xff] %vm1346, %v5322
      %5363 = vst.msk [vmem:[#allocation3 + $0x40] sm:$0xff] %vm1346, %v5324
      %5364 = vst.msk [vmem:[#allocation3 + $0x48] sm:$0xff] %vm1346, %v5326
      %5365 = vst.msk [vmem:[#allocation3 + $0x50] sm:$0xff] %vm1346, %v5328
      %5366 = vst.msk [vmem:[#allocation3 + $0x58] sm:$0xff] %vm1346, %v5330
      %5367 = vst.msk [vmem:[#allocation3 + $0x60] sm:$0xff] %vm1346, %v5332
      %5368 = vst.msk [vmem:[#allocation3 + $0x68] sm:$0xff] %vm1346, %v5334
      %5369 = vst.msk [vmem:[#allocation3 + $0x70] sm:$0xff] %vm1346, %v5336
      %5370 = vst.msk [vmem:[#allocation3 + $0x78] sm:$0xff] %vm1346, %v5338
      %v5372 = vshrl.u32 %v4275, 16
      %v5374 = vrot.slane %v5372, 4
      %v5375 = vshll.u32 %v4275, 16
      %v5377 = vrot.slane %v5375, 5
      %v5378 = vor.u32 %v5374, %v5377
      %v5379 = vrot.slane %v5378, 4
      %v5381 = vshll.u32 %v4276, 16
      %v5383 = vrot.slane %v5381, 5
      %v5384 = vsel %vm436, %v5379, %v5383
      %v5386 = vshrl.u32 %v4295, 16
      %v5388 = vrot.slane %v5386, 4
      %v5389 = vshll.u32 %v4295, 16
      %v5391 = vrot.slane %v5389, 5
      %v5392 = vor.u32 %v5388, %v5391
      %v5393 = vrot.slane %v5392, 4
      %v5395 = vshll.u32 %v4296, 16
      %v5397 = vrot.slane %v5395, 5
      %v5398 = vsel %vm436, %v5393, %v5397
      %v5400 = vshrl.u32 %v4315, 16
      %v5402 = vrot.slane %v5400, 4
      %v5403 = vshll.u32 %v4315, 16
      %v5405 = vrot.slane %v5403, 5
      %v5406 = vor.u32 %v5402, %v5405
      %v5407 = vrot.slane %v5406, 4
      %v5409 = vshll.u32 %v4316, 16
      %v5411 = vrot.slane %v5409, 5
      %v5412 = vsel %vm436, %v5407, %v5411
      %v5414 = vshrl.u32 %v4335, 16
      %v5416 = vrot.slane %v5414, 4
      %v5417 = vshll.u32 %v4335, 16
      %v5419 = vrot.slane %v5417, 5
      %v5420 = vor.u32 %v5416, %v5419
      %v5421 = vrot.slane %v5420, 4
      %v5423 = vshll.u32 %v4336, 16
      %v5425 = vrot.slane %v5423, 5
      %v5426 = vsel %vm436, %v5421, %v5425
      %v5427 = vunpack.c.l.b16 %v5384
      %v5428 = vunpack.c.l.b16 %v5398
      %v5429 = vunpack.c.l.b16 %v5412
      %v5430 = vunpack.c.l.b16 %v5426
      %v5431 = vpack.c.b16 %v4901, %v4900
      %v5432 = vpack.c.b16 %v4903, %v4902
      %v5433 = vpack.c.b16 %v4905, %v4904
      %v5434 = vpack.c.b16 %v5427, %v4906
      %v5435 = vpack.c.b16 %v4909, %v4908
      %v5436 = vpack.c.b16 %v4911, %v4910
      %v5437 = vpack.c.b16 %v4913, %v4912
      %v5438 = vpack.c.b16 %v5428, %v4914
      %v5439 = vpack.c.b16 %v4917, %v4916
      %v5440 = vpack.c.b16 %v4919, %v4918
      %v5441 = vpack.c.b16 %v4921, %v4920
      %v5442 = vpack.c.b16 %v5429, %v4922
      %v5443 = vpack.c.b16 %v4925, %v4924
      %v5444 = vpack.c.b16 %v4927, %v4926
      %v5445 = vpack.c.b16 %v4929, %v4928
      %v5446 = vpack.c.b16 %v5430, %v4930
      %5447 = vrot.lane.b32.xlu0 %v5431, 16
      %v5448 = vpop.permute.xlu0 %5447
      %5449 = vrot.lane.b32.xlu0 %v5432, 16
      %v5450 = vpop.permute.xlu0 %5449
      %5451 = vrot.lane.b32.xlu0 %v5433, 16
      %v5452 = vpop.permute.xlu0 %5451
      %5453 = vrot.lane.b32.xlu0 %v5434, 16
      %v5454 = vpop.permute.xlu0 %5453
      %5455 = vrot.lane.b32.xlu0 %v5435, 16
      %v5456 = vpop.permute.xlu0 %5455
      %5457 = vrot.lane.b32.xlu0 %v5436, 16
      %v5458 = vpop.permute.xlu0 %5457
      %5459 = vrot.lane.b32.xlu0 %v5437, 16
      %v5460 = vpop.permute.xlu0 %5459
      %5461 = vrot.lane.b32.xlu0 %v5438, 16
      %v5462 = vpop.permute.xlu0 %5461
      %5463 = vrot.lane.b32.xlu0 %v5439, 16
      %v5464 = vpop.permute.xlu0 %5463
      %5465 = vrot.lane.b32.xlu0 %v5440, 16
      %v5466 = vpop.permute.xlu0 %5465
      %5467 = vrot.lane.b32.xlu0 %v5441, 16
      %v5468 = vpop.permute.xlu0 %5467
      %5469 = vrot.lane.b32.xlu0 %v5442, 16
      %v5470 = vpop.permute.xlu0 %5469
      %5471 = vrot.lane.b32.xlu0 %v5443, 16
      %v5472 = vpop.permute.xlu0 %5471
      %5473 = vrot.lane.b32.xlu0 %v5444, 16
      %v5474 = vpop.permute.xlu0 %5473
      %5475 = vrot.lane.b32.xlu0 %v5445, 16
      %v5476 = vpop.permute.xlu0 %5475
      %5477 = vrot.lane.b32.xlu0 %v5446, 16
      %v5478 = vpop.permute.xlu0 %5477
      %5495 = vst.msk [vmem:[#allocation3] sm:$0xff] %vm1487, %v5448
      %5496 = vst.msk [vmem:[#allocation3 + $0x8] sm:$0xff] %vm1487, %v5450
      %5497 = vst.msk [vmem:[#allocation3 + $0x10] sm:$0xff] %vm1487, %v5452
      %5498 = vst.msk [vmem:[#allocation3 + $0x18] sm:$0xff] %vm1487, %v5454
      %5499 = vst.msk [vmem:[#allocation3 + $0x20] sm:$0xff] %vm1487, %v5456
      %5500 = vst.msk [vmem:[#allocation3 + $0x28] sm:$0xff] %vm1487, %v5458
      %5501 = vst.msk [vmem:[#allocation3 + $0x30] sm:$0xff] %vm1487, %v5460
      %5502 = vst.msk [vmem:[#allocation3 + $0x38] sm:$0xff] %vm1487, %v5462
      %5503 = vst.msk [vmem:[#allocation3 + $0x40] sm:$0xff] %vm1487, %v5464
      %5504 = vst.msk [vmem:[#allocation3 + $0x48] sm:$0xff] %vm1487, %v5466
      %5505 = vst.msk [vmem:[#allocation3 + $0x50] sm:$0xff] %vm1487, %v5468
      %5506 = vst.msk [vmem:[#allocation3 + $0x58] sm:$0xff] %vm1487, %v5470
      %5507 = vst.msk [vmem:[#allocation3 + $0x60] sm:$0xff] %vm1487, %v5472
      %5508 = vst.msk [vmem:[#allocation3 + $0x68] sm:$0xff] %vm1487, %v5474
      %5509 = vst.msk [vmem:[#allocation3 + $0x70] sm:$0xff] %vm1487, %v5476
      %5510 = vst.msk [vmem:[#allocation3 + $0x78] sm:$0xff] %vm1487, %v5478
      %v5515 = vrot.slane %v4275, 5
      %v5516 = vrot.slane %v5515, 4
      %v5517 = vrot.slane %v4276, 5
      %v5518 = vsel %vm1032, %v5516, %v5517
      %v5519 = vrot.slane %v4295, 5
      %v5520 = vrot.slane %v5519, 4
      %v5521 = vrot.slane %v4296, 5
      %v5522 = vsel %vm1032, %v5520, %v5521
      %v5523 = vrot.slane %v4315, 5
      %v5524 = vrot.slane %v5523, 4
      %v5525 = vrot.slane %v4316, 5
      %v5526 = vsel %vm1032, %v5524, %v5525
      %v5527 = vrot.slane %v4335, 5
      %v5528 = vrot.slane %v5527, 4
      %v5529 = vrot.slane %v4336, 5
      %v5530 = vsel %vm1032, %v5528, %v5529
      %v5531 = vunpack.c.l.b16 %v5518
      %v5532 = vunpack.c.l.b16 %v5522
      %v5533 = vunpack.c.l.b16 %v5526
      %v5534 = vunpack.c.l.b16 %v5530
      %v5535 = vpack.c.b16 %v5173, %v5172
      %v5536 = vpack.c.b16 %v5175, %v5174
      %v5537 = vpack.c.b16 %v5177, %v5176
      %v5538 = vpack.c.b16 %v5531, %v5178
      %v5539 = vpack.c.b16 %v5181, %v5180
      %v5540 = vpack.c.b16 %v5183, %v5182
      %v5541 = vpack.c.b16 %v5185, %v5184
      %v5542 = vpack.c.b16 %v5532, %v5186
      %v5543 = vpack.c.b16 %v5189, %v5188
      %v5544 = vpack.c.b16 %v5191, %v5190
      %v5545 = vpack.c.b16 %v5193, %v5192
      %v5546 = vpack.c.b16 %v5533, %v5194
      %v5547 = vpack.c.b16 %v5197, %v5196
      %v5548 = vpack.c.b16 %v5199, %v5198
      %v5549 = vpack.c.b16 %v5201, %v5200
      %v5550 = vpack.c.b16 %v5534, %v5202
      %5551 = vrot.lane.b32.xlu0 %v5535, 20
      %v5552 = vpop.permute.xlu0 %5551
      %5553 = vrot.lane.b32.xlu0 %v5536, 20
      %v5554 = vpop.permute.xlu0 %5553
      %5555 = vrot.lane.b32.xlu0 %v5537, 20
      %v5556 = vpop.permute.xlu0 %5555
      %5557 = vrot.lane.b32.xlu0 %v5538, 20
      %v5558 = vpop.permute.xlu0 %5557
      %5559 = vrot.lane.b32.xlu0 %v5539, 20
      %v5560 = vpop.permute.xlu0 %5559
      %5561 = vrot.lane.b32.xlu0 %v5540, 20
      %v5562 = vpop.permute.xlu0 %5561
      %5563 = vrot.lane.b32.xlu0 %v5541, 20
      %v5564 = vpop.permute.xlu0 %5563
      %5565 = vrot.lane.b32.xlu0 %v5542, 20
      %v5566 = vpop.permute.xlu0 %5565
      %5567 = vrot.lane.b32.xlu0 %v5543, 20
      %v5568 = vpop.permute.xlu0 %5567
      %5569 = vrot.lane.b32.xlu0 %v5544, 20
      %v5570 = vpop.permute.xlu0 %5569
      %5571 = vrot.lane.b32.xlu0 %v5545, 20
      %v5572 = vpop.permute.xlu0 %5571
      %5573 = vrot.lane.b32.xlu0 %v5546, 20
      %v5574 = vpop.permute.xlu0 %5573
      %5575 = vrot.lane.b32.xlu0 %v5547, 20
      %v5576 = vpop.permute.xlu0 %5575
      %5577 = vrot.lane.b32.xlu0 %v5548, 20
      %v5578 = vpop.permute.xlu0 %5577
      %5579 = vrot.lane.b32.xlu0 %v5549, 20
      %v5580 = vpop.permute.xlu0 %5579
      %5581 = vrot.lane.b32.xlu0 %v5550, 20
      %v5582 = vpop.permute.xlu0 %5581
      %5599 = vst.msk [vmem:[#allocation3] sm:$0xff] %vm1592, %v5552
      %5600 = vst.msk [vmem:[#allocation3 + $0x8] sm:$0xff] %vm1592, %v5554
      %5601 = vst.msk [vmem:[#allocation3 + $0x10] sm:$0xff] %vm1592, %v5556
      %5602 = vst.msk [vmem:[#allocation3 + $0x18] sm:$0xff] %vm1592, %v5558
      %5603 = vst.msk [vmem:[#allocation3 + $0x20] sm:$0xff] %vm1592, %v5560
      %5604 = vst.msk [vmem:[#allocation3 + $0x28] sm:$0xff] %vm1592, %v5562
      %5605 = vst.msk [vmem:[#allocation3 + $0x30] sm:$0xff] %vm1592, %v5564
      %5606 = vst.msk [vmem:[#allocation3 + $0x38] sm:$0xff] %vm1592, %v5566
      %5607 = vst.msk [vmem:[#allocation3 + $0x40] sm:$0xff] %vm1592, %v5568
      %5608 = vst.msk [vmem:[#allocation3 + $0x48] sm:$0xff] %vm1592, %v5570
      %5609 = vst.msk [vmem:[#allocation3 + $0x50] sm:$0xff] %vm1592, %v5572
      %5610 = vst.msk [vmem:[#allocation3 + $0x58] sm:$0xff] %vm1592, %v5574
      %5611 = vst.msk [vmem:[#allocation3 + $0x60] sm:$0xff] %vm1592, %v5576
      %5612 = vst.msk [vmem:[#allocation3 + $0x68] sm:$0xff] %vm1592, %v5578
      %5613 = vst.msk [vmem:[#allocation3 + $0x70] sm:$0xff] %vm1592, %v5580
      %5614 = vst.msk [vmem:[#allocation3 + $0x78] sm:$0xff] %vm1592, %v5582
      %v5619 = vunpack.c.l.b16 %v4277
      %v5620 = vunpack.c.l.b16 %v4297
      %v5621 = vunpack.c.l.b16 %v4317
      %v5622 = vunpack.c.l.b16 %v4337
      %v5623 = vpack.c.b16 %v5619, %v5287
      %v5624 = vpack.c.b16 %v5620, %v5288
      %v5625 = vpack.c.b16 %v5621, %v5289
      %v5626 = vpack.c.b16 %v5622, %v5290
      %5627 = vrot.lane.b32.xlu0 %v4404, 24
      %v5628 = vpop.permute.xlu0 %5627
      %5629 = vrot.lane.b32.xlu0 %v4405, 24
      %v5630 = vpop.permute.xlu0 %5629
      %5631 = vrot.lane.b32.xlu0 %v4406, 24
      %v5632 = vpop.permute.xlu0 %5631
      %5633 = vrot.lane.b32.xlu0 %v5623, 24
      %v5634 = vpop.permute.xlu0 %5633
      %5635 = vrot.lane.b32.xlu0 %v4408, 24
      %v5636 = vpop.permute.xlu0 %5635
      %5637 = vrot.lane.b32.xlu0 %v4409, 24
      %v5638 = vpop.permute.xlu0 %5637
      %5639 = vrot.lane.b32.xlu0 %v4410, 24
      %v5640 = vpop.permute.xlu0 %5639
      %5641 = vrot.lane.b32.xlu0 %v5624, 24
      %v5642 = vpop.permute.xlu0 %5641
      %5643 = vrot.lane.b32.xlu0 %v4412, 24
      %v5644 = vpop.permute.xlu0 %5643
      %5645 = vrot.lane.b32.xlu0 %v4413, 24
      %v5646 = vpop.permute.xlu0 %5645
      %5647 = vrot.lane.b32.xlu0 %v4414, 24
      %v5648 = vpop.permute.xlu0 %5647
      %5649 = vrot.lane.b32.xlu0 %v5625, 24
      %v5650 = vpop.permute.xlu0 %5649
      %5651 = vrot.lane.b32.xlu0 %v4416, 24
      %v5652 = vpop.permute.xlu0 %5651
      %5653 = vrot.lane.b32.xlu0 %v4417, 24
      %v5654 = vpop.permute.xlu0 %5653
      %5655 = vrot.lane.b32.xlu0 %v4418, 24
      %v5656 = vpop.permute.xlu0 %5655
      %5657 = vrot.lane.b32.xlu0 %v5626, 24
      %v5658 = vpop.permute.xlu0 %5657
      %5675 = vst.msk [vmem:[#allocation3] sm:$0xff] %vm1669, %v5628
      %5676 = vst.msk [vmem:[#allocation3 + $0x8] sm:$0xff] %vm1669, %v5630
      %5677 = vst.msk [vmem:[#allocation3 + $0x10] sm:$0xff] %vm1669, %v5632
      %5678 = vst.msk [vmem:[#allocation3 + $0x18] sm:$0xff] %vm1669, %v5634
      %5679 = vst.msk [vmem:[#allocation3 + $0x20] sm:$0xff] %vm1669, %v5636
      %5680 = vst.msk [vmem:[#allocation3 + $0x28] sm:$0xff] %vm1669, %v5638
      %5681 = vst.msk [vmem:[#allocation3 + $0x30] sm:$0xff] %vm1669, %v5640
      %5682 = vst.msk [vmem:[#allocation3 + $0x38] sm:$0xff] %vm1669, %v5642
      %5683 = vst.msk [vmem:[#allocation3 + $0x40] sm:$0xff] %vm1669, %v5644
      %5684 = vst.msk [vmem:[#allocation3 + $0x48] sm:$0xff] %vm1669, %v5646
      %5685 = vst.msk [vmem:[#allocation3 + $0x50] sm:$0xff] %vm1669, %v5648
      %5686 = vst.msk [vmem:[#allocation3 + $0x58] sm:$0xff] %vm1669, %v5650
      %5687 = vst.msk [vmem:[#allocation3 + $0x60] sm:$0xff] %vm1669, %v5652
      %5688 = vst.msk [vmem:[#allocation3 + $0x68] sm:$0xff] %vm1669, %v5654
      %5689 = vst.msk [vmem:[#allocation3 + $0x70] sm:$0xff] %vm1669, %v5656
      %5690 = vst.msk [vmem:[#allocation3 + $0x78] sm:$0xff] %vm1669, %v5658
      %v5692 = vshrl.u32 %v4277, 16
      %v5694 = vrot.slane %v5692, 4
      %v5695 = vshll.u32 %v4277, 16
      %v5697 = vrot.slane %v5695, 5
      %v5698 = vor.u32 %v5694, %v5697
      %v5699 = vrot.slane %v5698, 4
      %v5701 = vshll.u32 %v4278, 16
      %v5703 = vrot.slane %v5701, 5
      %v5704 = vsel %vm436, %v5699, %v5703
      %v5706 = vshrl.u32 %v4297, 16
      %v5708 = vrot.slane %v5706, 4
      %v5709 = vshll.u32 %v4297, 16
      %v5711 = vrot.slane %v5709, 5
      %v5712 = vor.u32 %v5708, %v5711
      %v5713 = vrot.slane %v5712, 4
      %v5715 = vshll.u32 %v4298, 16
      %v5717 = vrot.slane %v5715, 5
      %v5718 = vsel %vm436, %v5713, %v5717
      %v5720 = vshrl.u32 %v4317, 16
      %v5722 = vrot.slane %v5720, 4
      %v5723 = vshll.u32 %v4317, 16
      %v5725 = vrot.slane %v5723, 5
      %v5726 = vor.u32 %v5722, %v5725
      %v5727 = vrot.slane %v5726, 4
      %v5729 = vshll.u32 %v4318, 16
      %v5731 = vrot.slane %v5729, 5
      %v5732 = vsel %vm436, %v5727, %v5731
      %v5734 = vshrl.u32 %v4337, 16
      %v5736 = vrot.slane %v5734, 4
      %v5737 = vshll.u32 %v4337, 16
      %v5739 = vrot.slane %v5737, 5
      %v5740 = vor.u32 %v5736, %v5739
      %v5741 = vrot.slane %v5740, 4
      %v5743 = vshll.u32 %v4338, 16
      %v5745 = vrot.slane %v5743, 5
      %v5746 = vsel %vm436, %v5741, %v5745
      %v5747 = vunpack.c.l.b16 %v5704
      %v5748 = vunpack.c.l.b16 %v5718
      %v5749 = vunpack.c.l.b16 %v5732
      %v5750 = vunpack.c.l.b16 %v5746
      %v5751 = vpack.c.b16 %v5747, %v5427
      %v5752 = vpack.c.b16 %v5748, %v5428
      %v5753 = vpack.c.b16 %v5749, %v5429
      %v5754 = vpack.c.b16 %v5750, %v5430
      %5755 = vrot.lane.b32.xlu0 %v4932, 28
      %v5756 = vpop.permute.xlu0 %5755
      %5757 = vrot.lane.b32.xlu0 %v4933, 28
      %v5758 = vpop.permute.xlu0 %5757
      %5759 = vrot.lane.b32.xlu0 %v4934, 28
      %v5760 = vpop.permute.xlu0 %5759
      %5761 = vrot.lane.b32.xlu0 %v5751, 28
      %v5762 = vpop.permute.xlu0 %5761
      %5763 = vrot.lane.b32.xlu0 %v4936, 28
      %v5764 = vpop.permute.xlu0 %5763
      %5765 = vrot.lane.b32.xlu0 %v4937, 28
      %v5766 = vpop.permute.xlu0 %5765
      %5767 = vrot.lane.b32.xlu0 %v4938, 28
      %v5768 = vpop.permute.xlu0 %5767
      %5769 = vrot.lane.b32.xlu0 %v5752, 28
      %v5770 = vpop.permute.xlu0 %5769
      %5771 = vrot.lane.b32.xlu0 %v4940, 28
      %v5772 = vpop.permute.xlu0 %5771
      %5773 = vrot.lane.b32.xlu0 %v4941, 28
      %v5774 = vpop.permute.xlu0 %5773
      %5775 = vrot.lane.b32.xlu0 %v4942, 28
      %v5776 = vpop.permute.xlu0 %5775
      %5777 = vrot.lane.b32.xlu0 %v5753, 28
      %v5778 = vpop.permute.xlu0 %5777
      %5779 = vrot.lane.b32.xlu0 %v4944, 28
      %v5780 = vpop.permute.xlu0 %5779
      %5781 = vrot.lane.b32.xlu0 %v4945, 28
      %v5782 = vpop.permute.xlu0 %5781
      %5783 = vrot.lane.b32.xlu0 %v4946, 28
      %v5784 = vpop.permute.xlu0 %5783
      %5785 = vrot.lane.b32.xlu0 %v5754, 28
      %v5786 = vpop.permute.xlu0 %5785
      %5803 = vst.msk [vmem:[#allocation3] sm:$0xff] %vm1798, %v5756
      %5804 = vst.msk [vmem:[#allocation3 + $0x8] sm:$0xff] %vm1798, %v5758
      %5805 = vst.msk [vmem:[#allocation3 + $0x10] sm:$0xff] %vm1798, %v5760
      %5806 = vst.msk [vmem:[#allocation3 + $0x18] sm:$0xff] %vm1798, %v5762
      %5807 = vst.msk [vmem:[#allocation3 + $0x20] sm:$0xff] %vm1798, %v5764
      %5808 = vst.msk [vmem:[#allocation3 + $0x28] sm:$0xff] %vm1798, %v5766
      %5809 = vst.msk [vmem:[#allocation3 + $0x30] sm:$0xff] %vm1798, %v5768
      %5810 = vst.msk [vmem:[#allocation3 + $0x38] sm:$0xff] %vm1798, %v5770
      %5811 = vst.msk [vmem:[#allocation3 + $0x40] sm:$0xff] %vm1798, %v5772
      %5812 = vst.msk [vmem:[#allocation3 + $0x48] sm:$0xff] %vm1798, %v5774
      %5813 = vst.msk [vmem:[#allocation3 + $0x50] sm:$0xff] %vm1798, %v5776
      %5814 = vst.msk [vmem:[#allocation3 + $0x58] sm:$0xff] %vm1798, %v5778
      %5815 = vst.msk [vmem:[#allocation3 + $0x60] sm:$0xff] %vm1798, %v5780
      %5816 = vst.msk [vmem:[#allocation3 + $0x68] sm:$0xff] %vm1798, %v5782
      %5817 = vst.msk [vmem:[#allocation3 + $0x70] sm:$0xff] %vm1798, %v5784
      %5818 = vst.msk [vmem:[#allocation3 + $0x78] sm:$0xff] %vm1798, %v5786
      %v5823 = vrot.slane %v4277, 5
      %v5824 = vrot.slane %v5823, 4
      %v5825 = vrot.slane %v4278, 5
      %v5826 = vsel %vm1032, %v5824, %v5825
      %v5827 = vrot.slane %v4297, 5
      %v5828 = vrot.slane %v5827, 4
      %v5829 = vrot.slane %v4298, 5
      %v5830 = vsel %vm1032, %v5828, %v5829
      %v5831 = vrot.slane %v4317, 5
      %v5832 = vrot.slane %v5831, 4
      %v5833 = vrot.slane %v4318, 5
      %v5834 = vsel %vm1032, %v5832, %v5833
      %v5835 = vrot.slane %v4337, 5
      %v5836 = vrot.slane %v5835, 4
      %v5837 = vrot.slane %v4338, 5
      %v5838 = vsel %vm1032, %v5836, %v5837
      %v5839 = vunpack.c.l.b16 %v5826
      %v5840 = vunpack.c.l.b16 %v5830
      %v5841 = vunpack.c.l.b16 %v5834
      %v5842 = vunpack.c.l.b16 %v5838
      %v5843 = vpack.c.b16 %v5839, %v5531
      %v5844 = vpack.c.b16 %v5840, %v5532
      %v5845 = vpack.c.b16 %v5841, %v5533
      %v5846 = vpack.c.b16 %v5842, %v5534
      %5847 = vrot.lane.b32.xlu0 %v5204, 32
      %v5848 = vpop.permute.xlu0 %5847
      %5849 = vrot.lane.b32.xlu0 %v5205, 32
      %v5850 = vpop.permute.xlu0 %5849
      %5851 = vrot.lane.b32.xlu0 %v5206, 32
      %v5852 = vpop.permute.xlu0 %5851
      %5853 = vrot.lane.b32.xlu0 %v5843, 32
      %v5854 = vpop.permute.xlu0 %5853
      %5855 = vrot.lane.b32.xlu0 %v5208, 32
      %v5856 = vpop.permute.xlu0 %5855
      %5857 = vrot.lane.b32.xlu0 %v5209, 32
      %v5858 = vpop.permute.xlu0 %5857
      %5859 = vrot.lane.b32.xlu0 %v5210, 32
      %v5860 = vpop.permute.xlu0 %5859
      %5861 = vrot.lane.b32.xlu0 %v5844, 32
      %v5862 = vpop.permute.xlu0 %5861
      %5863 = vrot.lane.b32.xlu0 %v5212, 32
      %v5864 = vpop.permute.xlu0 %5863
      %5865 = vrot.lane.b32.xlu0 %v5213, 32
      %v5866 = vpop.permute.xlu0 %5865
      %5867 = vrot.lane.b32.xlu0 %v5214, 32
      %v5868 = vpop.permute.xlu0 %5867
      %5869 = vrot.lane.b32.xlu0 %v5845, 32
      %v5870 = vpop.permute.xlu0 %5869
      %5871 = vrot.lane.b32.xlu0 %v5216, 32
      %v5872 = vpop.permute.xlu0 %5871
      %5873 = vrot.lane.b32.xlu0 %v5217, 32
      %v5874 = vpop.permute.xlu0 %5873
      %5875 = vrot.lane.b32.xlu0 %v5218, 32
      %v5876 = vpop.permute.xlu0 %5875
      %5877 = vrot.lane.b32.xlu0 %v5846, 32
      %v5878 = vpop.permute.xlu0 %5877
      %5895 = vst.msk [vmem:[#allocation3] sm:$0xff] %vm1891, %v5848
      %5896 = vst.msk [vmem:[#allocation3 + $0x8] sm:$0xff] %vm1891, %v5850
      %5897 = vst.msk [vmem:[#allocation3 + $0x10] sm:$0xff] %vm1891, %v5852
      %5898 = vst.msk [vmem:[#allocation3 + $0x18] sm:$0xff] %vm1891, %v5854
      %5899 = vst.msk [vmem:[#allocation3 + $0x20] sm:$0xff] %vm1891, %v5856
      %5900 = vst.msk [vmem:[#allocation3 + $0x28] sm:$0xff] %vm1891, %v5858
      %5901 = vst.msk [vmem:[#allocation3 + $0x30] sm:$0xff] %vm1891, %v5860
      %5902 = vst.msk [vmem:[#allocation3 + $0x38] sm:$0xff] %vm1891, %v5862
      %5903 = vst.msk [vmem:[#allocation3 + $0x40] sm:$0xff] %vm1891, %v5864
      %5904 = vst.msk [vmem:[#allocation3 + $0x48] sm:$0xff] %vm1891, %v5866
      %5905 = vst.msk [vmem:[#allocation3 + $0x50] sm:$0xff] %vm1891, %v5868
      %5906 = vst.msk [vmem:[#allocation3 + $0x58] sm:$0xff] %vm1891, %v5870
      %5907 = vst.msk [vmem:[#allocation3 + $0x60] sm:$0xff] %vm1891, %v5872
      %5908 = vst.msk [vmem:[#allocation3 + $0x68] sm:$0xff] %vm1891, %v5874
      %5909 = vst.msk [vmem:[#allocation3 + $0x70] sm:$0xff] %vm1891, %v5876
      %5910 = vst.msk [vmem:[#allocation3 + $0x78] sm:$0xff] %vm1891, %v5878
      %v5911 = vld [vmem:[#allocation2] sm:$0xff]
      %v5912 = vld [vmem:[#allocation2 + $0x8] sm:$0xff]
      %v5913 = vld [vmem:[#allocation2 + $0x10] sm:$0xff]
      %v5914 = vld [vmem:[#allocation2 + $0x18] sm:$0xff]
      %v5915 = vld [vmem:[#allocation2 + $0x20] sm:$0xff]
      %v5916 = vld [vmem:[#allocation2 + $0x28] sm:$0xff]
      %v5917 = vld [vmem:[#allocation2 + $0x30] sm:$0xff]
      %v5918 = vld [vmem:[#allocation2 + $0x38] sm:$0xff]
      %v5919 = vld [vmem:[#allocation2 + $0x40] sm:$0xff]
      %v5920 = vld [vmem:[#allocation2 + $0x48] sm:$0xff]
      %v5921 = vld [vmem:[#allocation2 + $0x50] sm:$0xff]
      %v5922 = vld [vmem:[#allocation2 + $0x58] sm:$0xff]
      %v5923 = vld [vmem:[#allocation2 + $0x60] sm:$0xff]
      %v5924 = vld [vmem:[#allocation2 + $0x68] sm:$0xff]
      %v5925 = vld [vmem:[#allocation2 + $0x70] sm:$0xff]
      %v5926 = vld [vmem:[#allocation2 + $0x78] sm:$0xff]
      %v5927 = vld [vmem:[#allocation2 + $0x80] sm:$0xff]
      %v5928 = vld [vmem:[#allocation2 + $0x88] sm:$0xff]
      %v5929 = vld [vmem:[#allocation2 + $0x90] sm:$0xff]
      %v5930 = vld [vmem:[#allocation2 + $0x98] sm:$0xff]
      %v5931 = vld [vmem:[#allocation2 + $0xa0] sm:$0xff]
      %v5932 = vld [vmem:[#allocation2 + $0xa8] sm:$0xff]
      %v5933 = vld [vmem:[#allocation2 + $0xb0] sm:$0xff]
      %v5934 = vld [vmem:[#allocation2 + $0xb8] sm:$0xff]
      %v5935 = vld [vmem:[#allocation2 + $0xc0] sm:$0xff]
      %v5936 = vld [vmem:[#allocation2 + $0xc8] sm:$0xff]
      %v5937 = vld [vmem:[#allocation2 + $0xd0] sm:$0xff]
      %v5938 = vld [vmem:[#allocation2 + $0xd8] sm:$0xff]
      %v5939 = vld [vmem:[#allocation2 + $0xe0] sm:$0xff]
      %v5940 = vld [vmem:[#allocation2 + $0xe8] sm:$0xff]
      %v5941 = vld [vmem:[#allocation2 + $0xf0] sm:$0xff]
      %v5942 = vld [vmem:[#allocation2 + $0xf8] sm:$0xff]
      %v5943 = vld [vmem:[#allocation3] sm:$0xff]
      %v5944 = vld [vmem:[#allocation3 + $0x8] sm:$0xff]
      %v5945 = vld [vmem:[#allocation3 + $0x10] sm:$0xff]
      %v5946 = vld [vmem:[#allocation3 + $0x18] sm:$0xff]
      %v5947 = vld [vmem:[#allocation3 + $0x20] sm:$0xff]
      %v5948 = vld [vmem:[#allocation3 + $0x28] sm:$0xff]
      %v5949 = vld [vmem:[#allocation3 + $0x30] sm:$0xff]
      %v5950 = vld [vmem:[#allocation3 + $0x38] sm:$0xff]
      %v5951 = vld [vmem:[#allocation3 + $0x40] sm:$0xff]
      %v5952 = vld [vmem:[#allocation3 + $0x48] sm:$0xff]
      %v5953 = vld [vmem:[#allocation3 + $0x50] sm:$0xff]
      %v5954 = vld [vmem:[#allocation3 + $0x58] sm:$0xff]
      %v5955 = vld [vmem:[#allocation3 + $0x60] sm:$0xff]
      %v5956 = vld [vmem:[#allocation3 + $0x68] sm:$0xff]
      %v5957 = vld [vmem:[#allocation3 + $0x70] sm:$0xff]
      %v5958 = vld [vmem:[#allocation3 + $0x78] sm:$0xff]
      %s5959 = scalar_lea.vmem %s1, 40
      %v5960 = vld [vmem:[%s5959] sm:$0xf]
      %v5961 = vld [vmem:[%s5959 + $0x4] sm:$0xf]
      %v5962 = vld [vmem:[%s5959 + $0x8] sm:$0xf]
      %v5963 = vld [vmem:[%s5959 + $0xc] sm:$0xf]
      %v5964 = vld [vmem:[%s5959 + $0x10] sm:$0x3]
      %v5970 = vunpack.c.l.b16 %v5960
      %v5971 = vunpack.c.l.b16 %v5961
      %v5972 = vunpack.c.l.b16 %v5962
      %v5973 = vunpack.c.l.b16 %v5963
      %v5974 = vunpack.c.l.b16 %v5964
      %v5975 = vpack.c.b16 %v5971, %v5970
      %v5976 = vpack.c.b16 %v5973, %v5972
      %v5977 = vpack.c.b16 %v5974, %v5974
      %v5981 = vsel %vm1976, %v5943, 0
      %v5984 = vsel %vm1976, %v5944, 0
      %v5987 = vsel %vm1976, %v5945, 0
      %v5990 = vsel %vm1976, %v5946, 0
      %v5993 = vsel %vm1976, %v5947, 0
      %v5996 = vsel %vm1976, %v5948, 0
      %v5999 = vsel %vm1976, %v5949, 0
      %v6002 = vsel %vm1976, %v5950, 0
      %v6005 = vsel %vm1976, %v5951, 0
      %v6008 = vsel %vm1976, %v5952, 0
      %v6011 = vsel %vm1976, %v5953, 0
      %v6014 = vsel %vm1976, %v5954, 0
      %v6017 = vsel %vm1976, %v5955, 0
      %v6020 = vsel %vm1976, %v5956, 0
      %v6023 = vsel %vm1976, %v5957, 0
      %v6026 = vsel %vm1976, %v5958, 0
      %v6029 = vsel %vm2025, %v5977, 0
      %6031 = vmatprep.subr.bf16.mxu0 0
      %6032 = vmatpush1.bf16.msra.mxu0 %v5975
      %6033 = vmatprep.subr.bf16.mxu0 0
      %6034 = vmatpush1.bf16.msra.mxu0 %v5976
      %6035 = vmatprep.subr.bf16.mxu0 0
      %6036 = vmatpush1.bf16.msra.mxu0 %v6029
      %6037 = vmatprep.subr.bf16.mxu0 0
      %6038 = vmatpush1.bf16.msra.mxu0 0
      %6039 = vmatprep.subr.bf16.mxu0 0
      %6040 = vmatpush1.bf16.msra.mxu0 0
      %6041 = vmatprep.subr.bf16.mxu0 0
      %6042 = vmatpush1.bf16.msra.mxu0 0
      %6043 = vmatprep.subr.bf16.mxu0 0
      %6044 = vmatpush1.bf16.msra.mxu0 0
      %6045 = vmatprep.subr.bf16.mxu0 0
      %6046 = vmatpush1.bf16.msra.mxu0 0
      %6047 = vmatprep.subr.bf16.mxu0 0
      %6048 = vmatpush1.bf16.msra.mxu0 0
      %6049 = vmatprep.subr.bf16.mxu0 0
      %6050 = vmatpush1.bf16.msra.mxu0 0
      %6051 = vmatprep.subr.bf16.mxu0 0
      %6052 = vmatpush1.bf16.msra.mxu0 0
      %6053 = vmatprep.subr.bf16.mxu0 0
      %6054 = vmatpush1.bf16.msra.mxu0 0
      %6055 = vmatprep.subr.bf16.mxu0 0
      %6056 = vmatpush1.bf16.msra.mxu0 0
      %6057 = vmatprep.subr.bf16.mxu0 0
      %6058 = vmatpush1.bf16.msra.mxu0 0
      %6059 = vmatprep.subr.bf16.mxu0 0
      %6060 = vmatpush1.bf16.msra.mxu0 0
      %6061 = vmatprep.subr.bf16.mxu0 0
      %6062 = vmatpush1.bf16.msra.mxu0 0
      %6063 = vmatprep.mubr.bf16.mxu0 0
      %6064 = vmatmul.mubr.bf16.gmra.mrb[0].mxu0 %v5981
      %v6065 = vpop.f32.mrb[0].mxu0
      %v6066 = vadd.f32 0.0, %v6065
      %v6067 = vpop.f32.mrb[0].mxu0
      %v6068 = vpop.f32.mrb[0].mxu0
      %v6069 = vadd.f32 0.0, %v6068
      %v6070 = vpop.f32.mrb[0].mxu0
      %6071 = vmatprep.mubr.bf16.mxu0 0
      %6072 = vmatmul.mubr.bf16.gmra.mrb[0].mxu0 %v5984
      %v6073 = vpop.f32.mrb[0].mxu0
      %v6074 = vadd.f32 0.0, %v6073
      %v6075 = vpop.f32.mrb[0].mxu0
      %v6076 = vpop.f32.mrb[0].mxu0
      %v6077 = vadd.f32 0.0, %v6076
      %v6078 = vpop.f32.mrb[0].mxu0
      %6079 = vmatprep.mubr.bf16.mxu0 0
      %6080 = vmatmul.mubr.bf16.gmra.mrb[0].mxu0 %v5987
      %v6081 = vpop.f32.mrb[0].mxu0
      %v6082 = vadd.f32 0.0, %v6081
      %v6083 = vpop.f32.mrb[0].mxu0
      %v6084 = vpop.f32.mrb[0].mxu0
      %v6085 = vadd.f32 0.0, %v6084
      %v6086 = vpop.f32.mrb[0].mxu0
      %6087 = vmatprep.mubr.bf16.mxu0 0
      %6088 = vmatmul.mubr.bf16.gmra.mrb[0].mxu0 %v5990
      %v6089 = vpop.f32.mrb[0].mxu0
      %v6090 = vadd.f32 0.0, %v6089
      %v6091 = vpop.f32.mrb[0].mxu0
      %v6092 = vpop.f32.mrb[0].mxu0
      %v6093 = vadd.f32 0.0, %v6092
      %v6094 = vpop.f32.mrb[0].mxu0
      %6095 = vmatprep.mubr.bf16.mxu0 0
      %6096 = vmatmul.mubr.bf16.gmra.mrb[0].mxu0 %v5993
      %v6097 = vpop.f32.mrb[0].mxu0
      %v6098 = vadd.f32 0.0, %v6097
      %v6099 = vpop.f32.mrb[0].mxu0
      %v6100 = vpop.f32.mrb[0].mxu0
      %v6101 = vadd.f32 0.0, %v6100
      %v6102 = vpop.f32.mrb[0].mxu0
      %6103 = vmatprep.mubr.bf16.mxu0 0
      %6104 = vmatmul.mubr.bf16.gmra.mrb[0].mxu0 %v5996
      %v6105 = vpop.f32.mrb[0].mxu0
      %v6106 = vadd.f32 0.0, %v6105
      %v6107 = vpop.f32.mrb[0].mxu0
      %v6108 = vpop.f32.mrb[0].mxu0
      %v6109 = vadd.f32 0.0, %v6108
      %v6110 = vpop.f32.mrb[0].mxu0
      %6111 = vmatprep.mubr.bf16.mxu0 0
      %6112 = vmatmul.mubr.bf16.gmra.mrb[0].mxu0 %v5999
      %v6113 = vpop.f32.mrb[0].mxu0
      %v6114 = vadd.f32 0.0, %v6113
      %v6115 = vpop.f32.mrb[0].mxu0
      %v6116 = vpop.f32.mrb[0].mxu0
      %v6117 = vadd.f32 0.0, %v6116
      %v6118 = vpop.f32.mrb[0].mxu0
      %6119 = vmatprep.mubr.bf16.mxu0 0
      %6120 = vmatmul.mubr.bf16.gmra.mrb[0].mxu0 %v6002
      %v6121 = vpop.f32.mrb[0].mxu0
      %v6122 = vadd.f32 0.0, %v6121
      %v6123 = vpop.f32.mrb[0].mxu0
      %v6124 = vpop.f32.mrb[0].mxu0
      %v6125 = vadd.f32 0.0, %v6124
      %v6126 = vpop.f32.mrb[0].mxu0
      %6127 = vmatprep.mubr.bf16.mxu0 0
      %6128 = vmatmul.mubr.bf16.gmra.mrb[0].mxu0 %v6005
      %v6129 = vpop.f32.mrb[0].mxu0
      %v6130 = vadd.f32 0.0, %v6129
      %v6131 = vpop.f32.mrb[0].mxu0
      %v6132 = vpop.f32.mrb[0].mxu0
      %v6133 = vadd.f32 0.0, %v6132
      %v6134 = vpop.f32.mrb[0].mxu0
      %6135 = vmatprep.mubr.bf16.mxu0 0
      %6136 = vmatmul.mubr.bf16.gmra.mrb[0].mxu0 %v6008
      %v6137 = vpop.f32.mrb[0].mxu0
      %v6138 = vadd.f32 0.0, %v6137
      %v6139 = vpop.f32.mrb[0].mxu0
      %v6140 = vpop.f32.mrb[0].mxu0
      %v6141 = vadd.f32 0.0, %v6140
      %v6142 = vpop.f32.mrb[0].mxu0
      %6143 = vmatprep.mubr.bf16.mxu0 0
      %6144 = vmatmul.mubr.bf16.gmra.mrb[0].mxu0 %v6011
      %v6145 = vpop.f32.mrb[0].mxu0
      %v6146 = vadd.f32 0.0, %v6145
      %v6147 = vpop.f32.mrb[0].mxu0
      %v6148 = vpop.f32.mrb[0].mxu0
      %v6149 = vadd.f32 0.0, %v6148
      %v6150 = vpop.f32.mrb[0].mxu0
      %6151 = vmatprep.mubr.bf16.mxu0 0
      %6152 = vmatmul.mubr.bf16.gmra.mrb[0].mxu0 %v6014
      %v6153 = vpop.f32.mrb[0].mxu0
      %v6154 = vadd.f32 0.0, %v6153
      %v6155 = vpop.f32.mrb[0].mxu0
      %v6156 = vpop.f32.mrb[0].mxu0
      %v6157 = vadd.f32 0.0, %v6156
      %v6158 = vpop.f32.mrb[0].mxu0
      %6159 = vmatprep.mubr.bf16.mxu0 0
      %6160 = vmatmul.mubr.bf16.gmra.mrb[0].mxu0 %v6017
      %v6161 = vpop.f32.mrb[0].mxu0
      %v6162 = vadd.f32 0.0, %v6161
      %v6163 = vpop.f32.mrb[0].mxu0
      %v6164 = vpop.f32.mrb[0].mxu0
      %v6165 = vadd.f32 0.0, %v6164
      %v6166 = vpop.f32.mrb[0].mxu0
      %6167 = vmatprep.mubr.bf16.mxu0 0
      %6168 = vmatmul.mubr.bf16.gmra.mrb[0].mxu0 %v6020
      %v6169 = vpop.f32.mrb[0].mxu0
      %v6170 = vadd.f32 0.0, %v6169
      %v6171 = vpop.f32.mrb[0].mxu0
      %v6172 = vpop.f32.mrb[0].mxu0
      %v6173 = vadd.f32 0.0, %v6172
      %v6174 = vpop.f32.mrb[0].mxu0
      %6175 = vmatprep.mubr.bf16.mxu0 0
      %6176 = vmatmul.mubr.bf16.gmra.mrb[0].mxu0 %v6023
      %v6177 = vpop.f32.mrb[0].mxu0
      %v6178 = vadd.f32 0.0, %v6177
      %v6179 = vpop.f32.mrb[0].mxu0
      %v6180 = vpop.f32.mrb[0].mxu0
      %v6181 = vadd.f32 0.0, %v6180
      %v6182 = vpop.f32.mrb[0].mxu0
      %6183 = vmatprep.mubr.bf16.mxu0 0
      %6184 = vmatmul.mubr.bf16.gmra.mrb[0].mxu0 %v6026
      %v6185 = vpop.f32.mrb[0].mxu0
      %v6186 = vadd.f32 0.0, %v6185
      %v6187 = vpop.f32.mrb[0].mxu0
      %v6188 = vpop.f32.mrb[0].mxu0
      %v6189 = vadd.f32 0.0, %v6188
      %v6190 = vpop.f32.mrb[0].mxu0
      %6191 = vdwg.mxu0
      %v6192 = vadd.f32 %v5911, %v6066
      %v6193 = vadd.f32 %v5912, %v6069
      %v6194 = vadd.f32 %v5913, %v6074
      %v6195 = vadd.f32 %v5914, %v6077
      %v6196 = vadd.f32 %v5915, %v6082
      %v6197 = vadd.f32 %v5916, %v6085
      %v6198 = vadd.f32 %v5917, %v6090
      %v6199 = vadd.f32 %v5918, %v6093
      %v6200 = vadd.f32 %v5919, %v6098
      %v6201 = vadd.f32 %v5920, %v6101
      %v6202 = vadd.f32 %v5921, %v6106
      %v6203 = vadd.f32 %v5922, %v6109
      %v6204 = vadd.f32 %v5923, %v6114
      %v6205 = vadd.f32 %v5924, %v6117
      %v6206 = vadd.f32 %v5925, %v6122
      %v6207 = vadd.f32 %v5926, %v6125
      %v6208 = vadd.f32 %v5927, %v6130
      %v6209 = vadd.f32 %v5928, %v6133
      %v6210 = vadd.f32 %v5929, %v6138
      %v6211 = vadd.f32 %v5930, %v6141
      %v6212 = vadd.f32 %v5931, %v6146
      %v6213 = vadd.f32 %v5932, %v6149
      %v6214 = vadd.f32 %v5933, %v6154
      %v6215 = vadd.f32 %v5934, %v6157
      %v6216 = vadd.f32 %v5935, %v6162
      %v6217 = vadd.f32 %v5936, %v6165
      %v6218 = vadd.f32 %v5937, %v6170
      %v6219 = vadd.f32 %v5938, %v6173
      %v6220 = vadd.f32 %v5939, %v6178
      %v6221 = vadd.f32 %v5940, %v6181
      %v6222 = vadd.f32 %v5941, %v6186
      %v6223 = vadd.f32 %v5942, %v6189
      %6224 = vst.msk [vmem:[#allocation2] sm:$0xff] %vm205, %v6192
      %6225 = vst.msk [vmem:[#allocation2 + $0x8] sm:$0xff] %vm205, %v6193
      %6226 = vst.msk [vmem:[#allocation2 + $0x10] sm:$0xff] %vm205, %v6194
      %6227 = vst.msk [vmem:[#allocation2 + $0x18] sm:$0xff] %vm205, %v6195
      %6228 = vst.msk [vmem:[#allocation2 + $0x20] sm:$0xff] %vm205, %v6196
      %6229 = vst.msk [vmem:[#allocation2 + $0x28] sm:$0xff] %vm205, %v6197
      %6230 = vst.msk [vmem:[#allocation2 + $0x30] sm:$0xff] %vm205, %v6198
      %6231 = vst.msk [vmem:[#allocation2 + $0x38] sm:$0xff] %vm205, %v6199
      %6232 = vst.msk [vmem:[#allocation2 + $0x40] sm:$0xff] %vm205, %v6200
      %6233 = vst.msk [vmem:[#allocation2 + $0x48] sm:$0xff] %vm205, %v6201
      %6234 = vst.msk [vmem:[#allocation2 + $0x50] sm:$0xff] %vm205, %v6202
      %6235 = vst.msk [vmem:[#allocation2 + $0x58] sm:$0xff] %vm205, %v6203
      %6236 = vst.msk [vmem:[#allocation2 + $0x60] sm:$0xff] %vm205, %v6204
      %6237 = vst.msk [vmem:[#allocation2 + $0x68] sm:$0xff] %vm205, %v6205
      %6238 = vst.msk [vmem:[#allocation2 + $0x70] sm:$0xff] %vm205, %v6206
      %6239 = vst.msk [vmem:[#allocation2 + $0x78] sm:$0xff] %vm205, %v6207
      %6240 = vst.msk [vmem:[#allocation2 + $0x80] sm:$0xff] %vm205, %v6208
      %6241 = vst.msk [vmem:[#allocation2 + $0x88] sm:$0xff] %vm205, %v6209
      %6242 = vst.msk [vmem:[#allocation2 + $0x90] sm:$0xff] %vm205, %v6210
      %6243 = vst.msk [vmem:[#allocation2 + $0x98] sm:$0xff] %vm205, %v6211
      %6244 = vst.msk [vmem:[#allocation2 + $0xa0] sm:$0xff] %vm205, %v6212
      %6245 = vst.msk [vmem:[#allocation2 + $0xa8] sm:$0xff] %vm205, %v6213
      %6246 = vst.msk [vmem:[#allocation2 + $0xb0] sm:$0xff] %vm205, %v6214
      %6247 = vst.msk [vmem:[#allocation2 + $0xb8] sm:$0xff] %vm205, %v6215
      %6248 = vst.msk [vmem:[#allocation2 + $0xc0] sm:$0xff] %vm205, %v6216
      %6249 = vst.msk [vmem:[#allocation2 + $0xc8] sm:$0xff] %vm205, %v6217
      %6250 = vst.msk [vmem:[#allocation2 + $0xd0] sm:$0xff] %vm205, %v6218
      %6251 = vst.msk [vmem:[#allocation2 + $0xd8] sm:$0xff] %vm205, %v6219
      %6252 = vst.msk [vmem:[#allocation2 + $0xe0] sm:$0xff] %vm205, %v6220
      %6253 = vst.msk [vmem:[#allocation2 + $0xe8] sm:$0xff] %vm205, %v6221
      %6254 = vst.msk [vmem:[#allocation2 + $0xf0] sm:$0xff] %vm205, %v6222
      %6255 = vst.msk [vmem:[#allocation2 + $0xf8] sm:$0xff] %vm205, %v6223
      %v6256 = vld [vmem:[#allocation2] sm:$0xff]
      %v6257 = vld [vmem:[#allocation2 + $0x8] sm:$0xff]
      %v6258 = vld [vmem:[#allocation2 + $0x10] sm:$0xff]
      %v6259 = vld [vmem:[#allocation2 + $0x18] sm:$0xff]
      %v6260 = vld [vmem:[#allocation2 + $0x20] sm:$0xff]
      %v6261 = vld [vmem:[#allocation2 + $0x28] sm:$0xff]
      %v6262 = vld [vmem:[#allocation2 + $0x30] sm:$0xff]
      %v6263 = vld [vmem:[#allocation2 + $0x38] sm:$0xff]
      %v6264 = vld [vmem:[#allocation2 + $0x40] sm:$0xff]
      %v6265 = vld [vmem:[#allocation2 + $0x48] sm:$0xff]
      %v6266 = vld [vmem:[#allocation2 + $0x50] sm:$0xff]
      %v6267 = vld [vmem:[#allocation2 + $0x58] sm:$0xff]
      %v6268 = vld [vmem:[#allocation2 + $0x60] sm:$0xff]
      %v6269 = vld [vmem:[#allocation2 + $0x68] sm:$0xff]
      %v6270 = vld [vmem:[#allocation2 + $0x70] sm:$0xff]
      %v6271 = vld [vmem:[#allocation2 + $0x78] sm:$0xff]
      %v6272 = vld [vmem:[#allocation2 + $0x80] sm:$0xff]
      %v6273 = vld [vmem:[#allocation2 + $0x88] sm:$0xff]
      %v6274 = vld [vmem:[#allocation2 + $0x90] sm:$0xff]
      %v6275 = vld [vmem:[#allocation2 + $0x98] sm:$0xff]
      %v6276 = vld [vmem:[#allocation2 + $0xa0] sm:$0xff]
      %v6277 = vld [vmem:[#allocation2 + $0xa8] sm:$0xff]
      %v6278 = vld [vmem:[#allocation2 + $0xb0] sm:$0xff]
      %v6279 = vld [vmem:[#allocation2 + $0xb8] sm:$0xff]
      %v6280 = vld [vmem:[#allocation2 + $0xc0] sm:$0xff]
      %v6281 = vld [vmem:[#allocation2 + $0xc8] sm:$0xff]
      %v6282 = vld [vmem:[#allocation2 + $0xd0] sm:$0xff]
      %v6283 = vld [vmem:[#allocation2 + $0xd8] sm:$0xff]
      %v6284 = vld [vmem:[#allocation2 + $0xe0] sm:$0xff]
      %v6285 = vld [vmem:[#allocation2 + $0xe8] sm:$0xff]
      %v6286 = vld [vmem:[#allocation2 + $0xf0] sm:$0xff]
      %v6287 = vld [vmem:[#allocation2 + $0xf8] sm:$0xff]
      %v6288 = vpack.c.bf16 %v6257, %v6256
      %v6289 = vpack.c.bf16 %v6259, %v6258
      %v6290 = vpack.c.bf16 %v6261, %v6260
      %v6291 = vpack.c.bf16 %v6263, %v6262
      %v6292 = vpack.c.bf16 %v6265, %v6264
      %v6293 = vpack.c.bf16 %v6267, %v6266
      %v6294 = vpack.c.bf16 %v6269, %v6268
      %v6295 = vpack.c.bf16 %v6271, %v6270
      %v6296 = vpack.c.bf16 %v6273, %v6272
      %v6297 = vpack.c.bf16 %v6275, %v6274
      %v6298 = vpack.c.bf16 %v6277, %v6276
      %v6299 = vpack.c.bf16 %v6279, %v6278
      %v6300 = vpack.c.bf16 %v6281, %v6280
      %v6301 = vpack.c.bf16 %v6283, %v6282
      %v6302 = vpack.c.bf16 %v6285, %v6284
      %v6303 = vpack.c.bf16 %v6287, %v6286
      %v6320 = vunpack.c.l.b16 %v6288
      %v6321 = vunpack.c.h.b16 %v6288
      %v6322 = vunpack.c.l.b16 %v6289
      %v6323 = vunpack.c.h.b16 %v6289
      %v6324 = vunpack.c.l.b16 %v6290
      %v6325 = vunpack.c.h.b16 %v6290
      %v6326 = vunpack.c.l.b16 %v6291
      %v6327 = vunpack.c.h.b16 %v6291
      %v6328 = vunpack.c.l.b16 %v6292
      %v6329 = vunpack.c.h.b16 %v6292
      %v6330 = vunpack.c.l.b16 %v6293
      %v6331 = vunpack.c.h.b16 %v6293
      %v6332 = vunpack.c.l.b16 %v6294
      %v6333 = vunpack.c.h.b16 %v6294
      %v6334 = vunpack.c.l.b16 %v6295
      %v6335 = vunpack.c.h.b16 %v6295
      %v6336 = vunpack.c.l.b16 %v6296
      %v6337 = vunpack.c.h.b16 %v6296
      %v6338 = vunpack.c.l.b16 %v6297
      %v6339 = vunpack.c.h.b16 %v6297
      %v6340 = vunpack.c.l.b16 %v6298
      %v6341 = vunpack.c.h.b16 %v6298
      %v6342 = vunpack.c.l.b16 %v6299
      %v6343 = vunpack.c.h.b16 %v6299
      %v6344 = vunpack.c.l.b16 %v6300
      %v6345 = vunpack.c.h.b16 %v6300
      %v6346 = vunpack.c.l.b16 %v6301
      %v6347 = vunpack.c.h.b16 %v6301
      %v6348 = vunpack.c.l.b16 %v6302
      %v6349 = vunpack.c.h.b16 %v6302
      %v6350 = vunpack.c.l.b16 %v6303
      %v6351 = vunpack.c.h.b16 %v6303
      %v6352 = vpack.c.b16 %v6320, %v6320
      %v6353 = vpack.c.b16 %v6321, %v6321
      %v6354 = vpack.c.b16 %v6322, %v6322
      %v6355 = vpack.c.b16 %v6323, %v6323
      %v6356 = vpack.c.b16 %v6324, %v6324
      %v6357 = vpack.c.b16 %v6325, %v6325
      %v6358 = vpack.c.b16 %v6326, %v6326
      %v6359 = vpack.c.b16 %v6327, %v6327
      %v6360 = vpack.c.b16 %v6328, %v6328
      %v6361 = vpack.c.b16 %v6329, %v6329
      %v6362 = vpack.c.b16 %v6330, %v6330
      %v6363 = vpack.c.b16 %v6331, %v6331
      %v6364 = vpack.c.b16 %v6332, %v6332
      %v6365 = vpack.c.b16 %v6333, %v6333
      %v6366 = vpack.c.b16 %v6334, %v6334
      %v6367 = vpack.c.b16 %v6335, %v6335
      %v6368 = vpack.c.b16 %v6336, %v6336
      %v6369 = vpack.c.b16 %v6337, %v6337
      %v6370 = vpack.c.b16 %v6338, %v6338
      %v6371 = vpack.c.b16 %v6339, %v6339
      %v6372 = vpack.c.b16 %v6340, %v6340
      %v6373 = vpack.c.b16 %v6341, %v6341
      %v6374 = vpack.c.b16 %v6342, %v6342
      %v6375 = vpack.c.b16 %v6343, %v6343
      %v6376 = vpack.c.b16 %v6344, %v6344
      %v6377 = vpack.c.b16 %v6345, %v6345
      %v6378 = vpack.c.b16 %v6346, %v6346
      %v6379 = vpack.c.b16 %v6347, %v6347
      %v6380 = vpack.c.b16 %v6348, %v6348
      %v6381 = vpack.c.b16 %v6349, %v6349
      %v6382 = vpack.c.b16 %v6350, %v6350
      %v6383 = vpack.c.b16 %v6351, %v6351
      %vm6416 = vcmask 257024
      %6417 = vst.msk [vmem:[%s194] sm:$0xf] %vm6416, %v6352
      %6418 = vst.msk [vmem:[%s194 + $0x4] sm:$0xf] %vm6416, %v6353
      %6419 = vst.msk [vmem:[%s194 + $0x8] sm:$0xf] %vm6416, %v6354
      %6420 = vst.msk [vmem:[%s194 + $0xc] sm:$0xf] %vm6416, %v6355
      %6421 = vst.msk [vmem:[%s194 + $0x10] sm:$0xf] %vm6416, %v6356
      %6422 = vst.msk [vmem:[%s194 + $0x14] sm:$0xf] %vm6416, %v6357
      %6423 = vst.msk [vmem:[%s194 + $0x18] sm:$0xf] %vm6416, %v6358
      %6424 = vst.msk [vmem:[%s194 + $0x1c] sm:$0xf] %vm6416, %v6359
      %6425 = vst.msk [vmem:[%s194 + $0x20] sm:$0xf] %vm6416, %v6360
      %6426 = vst.msk [vmem:[%s194 + $0x24] sm:$0xf] %vm6416, %v6361
      %6427 = vst.msk [vmem:[%s194 + $0x28] sm:$0xf] %vm6416, %v6362
      %6428 = vst.msk [vmem:[%s194 + $0x2c] sm:$0xf] %vm6416, %v6363
      %6429 = vst.msk [vmem:[%s194 + $0x30] sm:$0xf] %vm6416, %v6364
      %6430 = vst.msk [vmem:[%s194 + $0x34] sm:$0xf] %vm6416, %v6365
      %6431 = vst.msk [vmem:[%s194 + $0x38] sm:$0xf] %vm6416, %v6366
      %6432 = vst.msk [vmem:[%s194 + $0x3c] sm:$0xf] %vm6416, %v6367
      %6433 = vst.msk [vmem:[%s194 + $0x40] sm:$0xf] %vm6416, %v6368
      %6434 = vst.msk [vmem:[%s194 + $0x44] sm:$0xf] %vm6416, %v6369
      %6435 = vst.msk [vmem:[%s194 + $0x48] sm:$0xf] %vm6416, %v6370
      %6436 = vst.msk [vmem:[%s194 + $0x4c] sm:$0xf] %vm6416, %v6371
      %6437 = vst.msk [vmem:[%s194 + $0x50] sm:$0xf] %vm6416, %v6372
      %6438 = vst.msk [vmem:[%s194 + $0x54] sm:$0xf] %vm6416, %v6373
      %6439 = vst.msk [vmem:[%s194 + $0x58] sm:$0xf] %vm6416, %v6374
      %6440 = vst.msk [vmem:[%s194 + $0x5c] sm:$0xf] %vm6416, %v6375
      %6441 = vst.msk [vmem:[%s194 + $0x60] sm:$0xf] %vm6416, %v6376
      %6442 = vst.msk [vmem:[%s194 + $0x64] sm:$0xf] %vm6416, %v6377
      %6443 = vst.msk [vmem:[%s194 + $0x68] sm:$0xf] %vm6416, %v6378
      %6444 = vst.msk [vmem:[%s194 + $0x6c] sm:$0xf] %vm6416, %v6379
      %6445 = vst.msk [vmem:[%s194 + $0x70] sm:$0xf] %vm6416, %v6380
      %6446 = vst.msk [vmem:[%s194 + $0x74] sm:$0xf] %vm6416, %v6381
      %6447 = vst.msk [vmem:[%s194 + $0x78] sm:$0xf] %vm6416, %v6382
      %6448 = vst.msk [vmem:[%s194 + $0x7c] sm:$0xf] %vm6416, %v6383
      %s6449 = smul.u32 4, %s19
      %p6450 = scmp.lt.s32.totalorder %s18, 1
      %s6451 = scalar_select %p6450, %s18, 1
      %p6452 = scmp.lt.s32.totalorder %s6449, 7
      %s6453 = scalar_select %p6452, %s6449, 7
      %s6454 = smul.addr %s6453, 8
      %s6455 = smul.addr %s6451, 64
      %s6456 = sadd.s32 %s6454, %s6455
      %s6457 = smul.addr %s6456, 4
      %s6458 = scalar_lea.vmem %s3, %s6457
      // Predicated region
      $region33: #{tpu_custom_call.1} parent=31 // pred_check
        %p6459 = pneg %p114
      $region34: #{tpu_custom_call.1} parent=31 // pred_check_branch
        %6461 = sbr.rel (%p6459) target = $region36
      $region35: #{tpu_custom_call.1} parent=31 // pred_region
        %s6462 = smul.u32 4, %s19
      $region36: #{tpu_custom_call.1} parent=31 // pred_fallthru
        _
    $region32: #{tpu_custom_call.1} parent=5 // pred_fallthru
      _
    %p6463 = scmp.le.s32.totalorder 2, %s9
    // Predicated region
    $region37: #{tpu_custom_call.1} parent=5 // pred_check
      %p6464 = pneg %p6463
    $region38: #{tpu_custom_call.1} parent=5 // pred_check_branch
      %6466 = sbr.rel (%p6464) target = $region40
    $region39: #{tpu_custom_call.1} parent=5 // pred_region
      %s6467 = ssub.s32 %s9, 2
      // Predicated region
      $region41: #{tpu_custom_call.1} parent=39 // pred_check
        %p6468 = pneg %p120
      $region42: #{tpu_custom_call.1} parent=39 // pred_check_branch
        %6470 = sbr.rel (%p6468) target = $region44
      $region43: #{tpu_custom_call.1} parent=39 // pred_region
        %s6471 = smul.u32 4, %s21
        %p6472 = scmp.lt.s32.totalorder %s20, 1
        %s6473 = scalar_select %p6472, %s20, 1
        %p6474 = scmp.lt.s32.totalorder %s6471, 7
        %s6475 = scalar_select %p6474, %s6471, 7
        %s6476 = smul.addr %s6475, 8
        %s6477 = smul.addr %s6473, 64
        %s6478 = sadd.s32 %s6476, %s6477
        %s6479 = smul.addr %s6478, 4
        %s6480 = scalar_lea.vmem %s3, %s6479
      $region44: #{tpu_custom_call.1} parent=39 // pred_fallthru
        _
    $region40: #{tpu_custom_call.1} parent=5 // pred_fallthru
      _
  $region6: #{tpu_custom_call.1} parent=0 // loop_footer
    %s13 = sadd.s32 1, %s9
  $region7: #{tpu_custom_call.1} parent=0 // loop_footer_branch
    %8 = sbr.rel target = $region3
  $region8: #{tpu_custom_call.1} parent=0 // loop_exit
    _

</llo_original>
